<compile_context>
chip_gen: v6e
topology: v6e:2x2x1
jax: 0.10.0
libtpu: 0.0.40
codegen_flags: <defaults>
</compile_context>

<pallas_src>
import functools

import jax
import jax.numpy as jnp
from jax import lax
from jax.experimental import pallas as pl
from jax.experimental.pallas import tpu as pltpu


_VMEM_LIMIT = 32 * 1024 * 1024  # scoped-VMEM budget, safe on v5e/v6e/v7x


def _round_up(x, m):
    return (x + m - 1) // m * m


def _pick_time_block(t):
    # Larger blocks amortize the ~0.35us per-grid-step pipeline overhead.
    # Non-divisible T is handled by zero-padding the time axis (the recurrence
    # is causal and padded timesteps have zero FC weights), never by Tb=1.
    return min(t, 32)


# ----------------------------------------------------------------------------
# Shared GRU gate math (PyTorch gate order r, z, n; every slice 128-aligned).
# Inputs/outputs are f32; only MXU operands are bf16 elsewhere.
# ----------------------------------------------------------------------------
def _gru_gates(gi_t, gh, h_prev, bhn, hp):
    rz = jax.nn.sigmoid(gi_t[:, : 2 * hp] + gh[:, : 2 * hp])
    r = rz[:, :hp]
    z = rz[:, hp:]
    n = jnp.tanh(gi_t[:, 2 * hp:] + r * (gh[:, 2 * hp:] + bhn))
    return n + z * (h_prev - n)          # == (1 - z) * n + z * h_prev


# ----------------------------------------------------------------------------
# Kernel A: fused GRU layer (input projection + recurrence), bf16 output.
# Grid iterates sequentially over blocks of Tb timesteps ("arbitrary").
# ----------------------------------------------------------------------------
def make_gru_layer_kernel(time_block, hidden_pad):
    Tb, Hp = time_block, hidden_pad

    def kernel(inp_ref, wih_ref, whh_ref, b_ref, bhn_ref, out_ref,
               h_ref, gi_ref, ob_ref):
        # inp_ref: (Tb, Bp, Din) bf16   layer input block (time-major)
        # wih_ref: (Din, 3Hp)   bf16    pre-transposed, gate-padded W_ih
        # whh_ref: (Hp, 3Hp)    bf16    pre-transposed, gate-padded W_hh
        # b_ref:   (1, 3Hp)     f32     b_ih (+ b_hh folded in for r/z gates)
        # bhn_ref: (1, Hp)      f32     n-gate hidden bias (stays inside r*(..))
        # out_ref: (Tb, Bp, Hp) bf16    layer output block (next layer's input)
        # h_ref:   (Bp, Hp)     f32     hidden state carried across grid steps
        # gi_ref:  (Tb, Bp, 3Hp) f32    hoisted input projection for this block
        # ob_ref:  (Tb, Bp, Hp) f32     per-step outputs, flushed once as bf16
        @pl.when(pl.program_id(0) == 0)
        def _():
            h_ref[...] = jnp.zeros_like(h_ref)          # h0 = zeros

        tb, bp, din = inp_ref.shape
        # Hoisted input projection for the whole time block: ONE MXU matmul.
        # (reshape done in f32 — proven lowering path — then cast back to bf16)
        a = inp_ref[...].astype(jnp.float32).reshape(tb * bp, din)
        gi = jnp.dot(a.astype(jnp.bfloat16), wih_ref[...],
                     preferred_element_type=jnp.float32) + b_ref[...]
        gi_ref[...] = gi.reshape(tb, bp, -1)

        whh = whh_ref[...]
        bhn = jnp.broadcast_to(bhn_ref[...], (bp, Hp))  # hoisted out of the loop

        def step(t, h_prev):
            gh = jnp.dot(h_prev.astype(jnp.bfloat16), whh,
                         preferred_element_type=jnp.float32)
            h_new = _gru_gates(gi_ref[t], gh, h_prev, bhn, Hp)
            ob_ref[t] = h_new
            return h_new

        h_ref[...] = lax.fori_loop(0, Tb, step, h_ref[...], unroll=True)
        # Single lane-dense bf16 store for the whole block.
        out_ref[...] = ob_ref[...].astype(out_ref.dtype)

    return kernel


def gru_layer(inp, wih, whh, b_comb, bhn, *, hidden_pad, time_block):
    Tp, Bp, Din = inp.shape
    G = wih.shape[1]
    Hp = hidden_pad
    return pl.pallas_call(
        make_gru_layer_kernel(time_block, Hp),
        out_shape=jax.ShapeDtypeStruct((Tp, Bp, Hp), jnp.bfloat16),
        grid_spec=pltpu.PrefetchScalarGridSpec(
            num_scalar_prefetch=0,
            grid=(Tp // time_block,),
            in_specs=[
                pl.BlockSpec((time_block, Bp, Din), lambda i: (i, 0, 0)),
                pl.BlockSpec((Din, G), lambda i: (0, 0)),
                pl.BlockSpec((Hp, G), lambda i: (0, 0)),
                pl.BlockSpec((1, G), lambda i: (0, 0)),
                pl.BlockSpec((1, Hp), lambda i: (0, 0)),
            ],
            out_specs=pl.BlockSpec((time_block, Bp, Hp), lambda i: (i, 0, 0)),
            scratch_shapes=[
                pltpu.VMEM((Bp, Hp), jnp.float32),
                pltpu.VMEM((time_block, Bp, G), jnp.float32),
                pltpu.VMEM((time_block, Bp, Hp), jnp.float32),
            ],
        ),
        compiler_params=pltpu.CompilerParams(
            dimension_semantics=("arbitrary",),   # recurrence is sequential
            vmem_limit_bytes=_VMEM_LIMIT,
        ),
    )(inp, wih, whh, b_comb, bhn)


# ----------------------------------------------------------------------------
# Kernel B: last GRU layer with the flatten+Linear fused in.  The only output
# is the (Bp, Cp) logits accumulator; the layer's hidden sequence never hits
# HBM.  logits[b, c] = sum_t h[t, b, :] @ Wfc[t, :, c] + bias[c].
# ----------------------------------------------------------------------------
def make_gru_fc_kernel(time_block, hidden_pad):
    Tb, Hp = time_block, hidden_pad

    def kernel(inp_ref, wih_ref, whh_ref, b_ref, bhn_ref, wfc_ref, bfc_ref,
               logits_ref, h_ref, gi_ref, acc_ref):
        # wfc_ref: (Tb, Hp, Cp) bf16   FC weight reshaped to (T, H, C), padded
        # bfc_ref: (1, Cp) f32         FC bias
        # logits_ref: (Bp, Cp) f32     same block across the whole grid
        # acc_ref: (Bp, Cp) f32        logits accumulator scratch
        @pl.when(pl.program_id(0) == 0)
        def _():
            h_ref[...] = jnp.zeros_like(h_ref)
            acc_ref[...] = jnp.zeros_like(acc_ref)

        tb, bp, din = inp_ref.shape
        a = inp_ref[...].astype(jnp.float32).reshape(tb * bp, din)
        gi = jnp.dot(a.astype(jnp.bfloat16), wih_ref[...],
                     preferred_element_type=jnp.float32) + b_ref[...]
        gi_ref[...] = gi.reshape(tb, bp, -1)

        whh = whh_ref[...]
        bhn = jnp.broadcast_to(bhn_ref[...], (bp, Hp))

        def step(t, h_prev):
            gh = jnp.dot(h_prev.astype(jnp.bfloat16), whh,
                         preferred_element_type=jnp.float32)
            h_new = _gru_gates(gi_ref[t], gh, h_prev, bhn, Hp)
            acc_ref[...] += jnp.dot(h_new.astype(jnp.bfloat16), wfc_ref[t],
                                    preferred_element_type=jnp.float32)
            return h_new

        h_ref[...] = lax.fori_loop(0, Tb, step, h_ref[...], unroll=True)

        @pl.when(pl.program_id(0) == pl.num_programs(0) - 1)
        def _():
            logits_ref[...] = acc_ref[...] + bfc_ref[...]

    return kernel


def gru_fc_layer(inp, wih, whh, b_comb, bhn, wfc, bfc, *, hidden_pad, time_block):
    Tp, Bp, Din = inp.shape
    G = wih.shape[1]
    Hp = hidden_pad
    Cp = wfc.shape[2]
    return pl.pallas_call(
        make_gru_fc_kernel(time_block, Hp),
        out_shape=jax.ShapeDtypeStruct((Bp, Cp), jnp.float32),
        grid_spec=pltpu.PrefetchScalarGridSpec(
            num_scalar_prefetch=0,
            grid=(Tp // time_block,),
            in_specs=[
                pl.BlockSpec((time_block, Bp, Din), lambda i: (i, 0, 0)),
                pl.BlockSpec((Din, G), lambda i: (0, 0)),
                pl.BlockSpec((Hp, G), lambda i: (0, 0)),
                pl.BlockSpec((1, G), lambda i: (0, 0)),
                pl.BlockSpec((1, Hp), lambda i: (0, 0)),
                pl.BlockSpec((time_block, Hp, Cp), lambda i: (i, 0, 0)),
                pl.BlockSpec((1, Cp), lambda i: (0, 0)),
            ],
            out_specs=pl.BlockSpec((Bp, Cp), lambda i: (0, 0)),
            scratch_shapes=[
                pltpu.VMEM((Bp, Hp), jnp.float32),
                pltpu.VMEM((time_block, Bp, G), jnp.float32),
                pltpu.VMEM((Bp, Cp), jnp.float32),
            ],
        ),
        compiler_params=pltpu.CompilerParams(
            dimension_semantics=("arbitrary",),   # sequential time reduction
            vmem_limit_bytes=_VMEM_LIMIT,
        ),
    )(inp, wih, whh, b_comb, bhn, wfc, bfc)


# ----------------------------------------------------------------------------
# Parameter init (PyTorch-shaped) and packing into the padded kernel layout.
# ----------------------------------------------------------------------------
def init_raw_params(key, input_size, hidden_size, num_layers, num_classes, seq_len):
    H = hidden_size
    k = 1.0 / float(H) ** 0.5
    layers = []
    for l in range(num_layers):
        d_in = input_size if l == 0 else H
        key, k1, k2, k3, k4 = jax.random.split(key, 5)
        layers.append(dict(
            w_ih=jax.random.uniform(k1, (3 * H, d_in), jnp.float32, -k, k),
            w_hh=jax.random.uniform(k2, (3 * H, H), jnp.float32, -k, k),
            b_ih=jax.random.uniform(k3, (3 * H,), jnp.float32, -k, k),
            b_hh=jax.random.uniform(k4, (3 * H,), jnp.float32, -k, k),
        ))
    kf = 1.0 / float(H * seq_len) ** 0.5
    key, k5, k6 = jax.random.split(key, 3)
    fc_w = jax.random.uniform(k5, (num_classes, H * seq_len), jnp.float32, -kf, kf)
    fc_b = jax.random.uniform(k6, (num_classes,), jnp.float32, -kf, kf)
    return layers, fc_w, fc_b


def pack_gru_layer(w_ih, w_hh, b_ih, b_hh, d_in_pad, hidden_pad):
    """Pre-transpose, pad each gate to a 128-aligned column panel, fold biases."""
    H3 = w_ih.shape[0]
    H = H3 // 3
    d_in = w_ih.shape[1]
    Hp = hidden_pad
    wih_t = jnp.zeros((d_in_pad, 3 * Hp), jnp.float32)
    whh_t = jnp.zeros((Hp, 3 * Hp), jnp.float32)
    b_comb = jnp.zeros((1, 3 * Hp), jnp.float32)
    for g in range(3):                       # gate order r, z, n
        wih_t = wih_t.at[:d_in, g * Hp:g * Hp + H].set(w_ih[g * H:(g + 1) * H, :].T)
        whh_t = whh_t.at[:H, g * Hp:g * Hp + H].set(w_hh[g * H:(g + 1) * H, :].T)
        bi = b_ih[g * H:(g + 1) * H]
        bh = b_hh[g * H:(g + 1) * H]
        # r/z hidden biases fold into the hoisted projection; the n-gate hidden
        # bias must stay inside r * (...), so it is NOT folded here.
        b_comb = b_comb.at[0, g * Hp:g * Hp + H].set(bi + bh if g < 2 else bi)
    bhh_n = jnp.zeros((1, Hp), jnp.float32).at[0, :H].set(b_hh[2 * H:3 * H])
    return (wih_t.astype(jnp.bfloat16), whh_t.astype(jnp.bfloat16), b_comb, bhh_n)


def pack_fc(fc_w, fc_b, hidden_size, hidden_pad, seq_len, seq_len_pad, class_pad):
    C = fc_w.shape[0]
    w3 = fc_w.reshape(C, seq_len, hidden_size)           # (C, T, H)
    w3 = jnp.transpose(w3, (1, 2, 0))                    # (T, H, C)
    wfc = jnp.zeros((seq_len_pad, hidden_pad, class_pad), jnp.float32)
    wfc = wfc.at[:seq_len, :hidden_size, :C].set(w3)     # padded timesteps: zero
    bfc = jnp.zeros((1, class_pad), jnp.float32).at[0, :C].set(fc_b)
    return wfc.astype(jnp.bfloat16), bfc


def pack_params(raw_layers, fc_w, fc_b, input_size, hidden_size,
                seq_len, seq_len_pad):
    Hp = _round_up(hidden_size, 128)
    Dp = _round_up(input_size, 128)
    Cp = _round_up(fc_w.shape[0], 128)
    gru_layers = []
    for l, p in enumerate(raw_layers):
        d_in_pad = Dp if l == 0 else Hp
        gru_layers.append(
            pack_gru_layer(p["w_ih"], p["w_hh"], p["b_ih"], p["b_hh"], d_in_pad, Hp))
    wfc, bfc = pack_fc(fc_w, fc_b, hidden_size, Hp, seq_len, seq_len_pad, Cp)
    return gru_layers, wfc, bfc


# ----------------------------------------------------------------------------
# Full forward pass (matches RNN_GRU.forward with h0 = zeros).
# ----------------------------------------------------------------------------
def rnn_gru_forward(x, gru_layers, wfc, bfc, *, hidden_pad, time_block):
    B, T, D = x.shape
    Bp = _round_up(max(B, 8), 8)
    Dp = gru_layers[0][0].shape[0]
    Tp = wfc.shape[0]                        # T padded to a multiple of Tb
    # Zero-pad batch/features/time, go time-major ONCE, store input in bf16
    # (every consumer casts to bf16 before the MXU anyway).  Padded trailing
    # timesteps are harmless: the recurrence is causal and their FC weights
    # are zero; padded hidden lanes stay zero because h0 == 0 and padded
    # weight/bias entries are zero.
    xp = jnp.zeros((Bp, Tp, Dp), jnp.float32).at[:B, :T, :D].set(x)
    inp = jnp.transpose(xp, (1, 0, 2)).astype(jnp.bfloat16)     # (Tp, Bp, Dp)

    n_layers = len(gru_layers)
    logits = None
    for li, (wih_t, whh_t, b_comb, bhh_n) in enumerate(gru_layers):
        if li < n_layers - 1:
            inp = gru_layer(inp, wih_t, whh_t, b_comb, bhh_n,
                            hidden_pad=hidden_pad, time_block=time_block)
        else:
            logits = gru_fc_layer(inp, wih_t, whh_t, b_comb, bhh_n, wfc, bfc,
                                  hidden_pad=hidden_pad, time_block=time_block)
    return logits                                                 # (Bp, Cp)


# ----------------------------------------------------------------------------
# References.
#  - mirror: same bf16 MXU operands / bf16 inter-layer storage / f32 gate math
#    and padded layout as the kernels (tight tolerance).
#  - f32: pure float32 math straight from the PyTorch-shaped parameters
#    (loose tolerance; bounds deviation from the actual nn.GRU module).
# ----------------------------------------------------------------------------
def reference_forward_mirror(x, gru_layers, wfc, bfc, *, hidden_pad):
    B, T, D = x.shape
    Hp = hidden_pad
    Dp = gru_layers[0][0].shape[0]
    xp = jnp.zeros((B, T, Dp), jnp.float32).at[:, :, :D].set(x)
    inp = jnp.transpose(xp, (1, 0, 2)).astype(jnp.bfloat16)      # (T, B, Dp)
    for (wih_t, whh_t, b_comb, bhh_n) in gru_layers:
        din = wih_t.shape[0]
        gi = jnp.dot(inp.reshape(T * B, din), wih_t,
                     preferred_element_type=jnp.float32).reshape(T, B, -1) + b_comb
        h = jnp.zeros((B, Hp), jnp.float32)
        outs = []
        for t in range(T):
            gh = jnp.dot(h.astype(jnp.bfloat16), whh_t,
                         preferred_element_type=jnp.float32)
            rz = jax.nn.sigmoid(gi[t, :, :2 * Hp] + gh[:, :2 * Hp])
            r, z = rz[:, :Hp], rz[:, Hp:]
            n = jnp.tanh(gi[t, :, 2 * Hp:] + r * (gh[:, 2 * Hp:] + bhh_n))
            h = n + z * (h - n)
            outs.append(h.astype(jnp.bfloat16))
        inp = jnp.stack(outs, axis=0)                            # (T, B, Hp)
    acc = jnp.zeros((B, wfc.shape[2]), jnp.float32)
    for t in range(T):
        acc = acc + jnp.dot(inp[t], wfc[t], preferred_element_type=jnp.float32)
    return acc + bfc


def reference_forward_f32(x, raw_layers, fc_w, fc_b):
    B, T, D = x.shape
    hi = lax.Precision.HIGHEST
    inp = x
    for p in raw_layers:
        w_ih, w_hh, b_ih, b_hh = p["w_ih"], p["w_hh"], p["b_ih"], p["b_hh"]
        H = w_hh.shape[1]
        h = jnp.zeros((B, H), jnp.float32)
        outs = []
        for t in range(T):
            gi = jnp.dot(inp[:, t, :], w_ih.T, precision=hi) + b_ih
            gh = jnp.dot(h, w_hh.T, precision=hi) + b_hh
            r = jax.nn.sigmoid(gi[:, :H] + gh[:, :H])
            z = jax.nn.sigmoid(gi[:, H:2 * H] + gh[:, H:2 * H])
            n = jnp.tanh(gi[:, 2 * H:] + r * gh[:, 2 * H:])
            h = (1.0 - z) * n + z * h
            outs.append(h)
        inp = jnp.stack(outs, axis=1)                            # (B, T, H)
    return jnp.dot(inp.reshape(B, -1), fc_w.T, precision=hi) + fc_b


if __name__ == "__main__":
    # Small shapes consistent with the module's forward.
    batch = 2
    sequence_length = 8
    input_size = 16
    hidden_size = 32
    num_layers = 2
    num_classes = 4

    key = jax.random.PRNGKey(0)
    key, xkey = jax.random.split(key)
    x = jax.random.normal(xkey, (batch, sequence_length, input_size), jnp.float32)

    raw_layers, fc_w, fc_b = init_raw_params(
        key, input_size, hidden_size, num_layers, num_classes, sequence_length)

    time_block = _pick_time_block(sequence_length)
    seq_len_pad = _round_up(sequence_length, time_block)
    hidden_pad = _round_up(hidden_size, 128)

    gru_layers, wfc, bfc = pack_params(
        raw_layers, fc_w, fc_b, input_size, hidden_size,
        sequence_length, seq_len_pad)

    fwd = jax.jit(functools.partial(
        rnn_gru_forward, hidden_pad=hidden_pad, time_block=time_block))
    logits_pad = jax.block_until_ready(fwd(x, gru_layers, wfc, bfc))
    logits = logits_pad[:batch, :num_classes]
    assert logits.shape == (batch, num_classes), logits.shape

    # Tight check vs. a reference mirroring the kernel's exact arithmetic.
    ref_m = reference_forward_mirror(
        x, gru_layers, wfc, bfc, hidden_pad=hidden_pad)[:batch, :num_classes]
    err_m = float(jnp.max(jnp.abs(logits - ref_m)))
    assert jnp.allclose(logits, ref_m, atol=2e-3, rtol=2e-3), \
        f"mirror-ref max abs err {err_m}"

    # Looser check vs. a pure-f32 reference of the original PyTorch semantics
    # (bounds the compounded bf16 rounding of the h @ W_hh operand over T).
    ref_f = reference_forward_f32(x, raw_layers, fc_w, fc_b)
    err_f = float(jnp.max(jnp.abs(logits - ref_f)))
    assert jnp.allclose(logits, ref_f, atol=5e-2, rtol=5e-2), \
        f"f32-ref max abs err {err_f}"

    print("KERNEL_OK")
</pallas_src>

<mosaic_0001>
module attributes {stable_mosaic.version = 11 : i64} {
  func.func @kernel(%arg0: i32, %arg1: memref<8x8x128xbf16, #tpu.memory_space<vmem>>, %arg2: memref<128x384xbf16, #tpu.memory_space<vmem>>, %arg3: memref<128x384xbf16, #tpu.memory_space<vmem>>, %arg4: memref<1x384xf32, #tpu.memory_space<vmem>>, %arg5: memref<1x128xf32, #tpu.memory_space<vmem>>, %arg6: memref<8x8x128xbf16, #tpu.memory_space<vmem>>, %arg7: memref<8x128xf32, #tpu.memory_space<vmem>>, %arg8: memref<8x8x384xf32, #tpu.memory_space<vmem>>, %arg9: memref<8x8x128xf32, #tpu.memory_space<vmem>>) attributes {dimension_semantics = [#tpu.dimension_semantics<arbitrary>], iteration_bounds = array<i64: 1>, scalar_prefetch = 0 : i64, scratch_operands = 3 : i64, tpu.core_type = #tpu.core_type<tc>, window_params = [{transform_indices = @transform_0, window_bounds = array<i64: 8, 8, 128>}, {pipeline_mode = #tpu.pipeline_mode<synchronous>, transform_indices = @transform_1, window_bounds = array<i64: 128, 384>}, {pipeline_mode = #tpu.pipeline_mode<synchronous>, transform_indices = @transform_2, window_bounds = array<i64: 128, 384>}, {pipeline_mode = #tpu.pipeline_mode<synchronous>, transform_indices = @transform_3, window_bounds = array<i64: 1, 384>}, {pipeline_mode = #tpu.pipeline_mode<synchronous>, transform_indices = @transform_4, window_bounds = array<i64: 1, 128>}, {transform_indices = @transform_5, window_bounds = array<i64: 8, 8, 128>}]} {
    %c0_i32 = arith.constant 0 : i32
    %0 = arith.cmpi eq, %arg0, %c0_i32 : i32
    %1 = arith.extui %0 : i1 to i32
    %c0_i32_0 = arith.constant 0 : i32
    %2 = arith.cmpi ne, %1, %c0_i32_0 : i32
    scf.if %2 {
      %cst_73 = arith.constant 0.000000e+00 : f32
      %247 = vector.broadcast %cst_73 : f32 to vector<8x128xf32>
      %c0_74 = arith.constant 0 : index
      %c0_75 = arith.constant 0 : index
      %248 = vector.load %arg7[%c0_74, %c0_75] : memref<8x128xf32, #tpu.memory_space<vmem>>, vector<8x128xf32>
      tpu.vector_store %arg7[%c0_74, %c0_75], %247 {strides = array<i32>} : memref<8x128xf32, #tpu.memory_space<vmem>>, vector<8x128xf32>,
    } else {
    }
    %c0 = arith.constant 0 : index
    %c0_1 = arith.constant 0 : index
    %c0_2 = arith.constant 0 : index
    %3 = vector.load %arg1[%c0, %c0_1, %c0_2] : memref<8x8x128xbf16, #tpu.memory_space<vmem>>, vector<8x8x128xbf16>
    %4 = arith.extf %3 : vector<8x8x128xbf16> to vector<8x8x128xf32>
    %5 = vector.shape_cast %4 : vector<8x8x128xf32> to vector<64x128xf32>
    %6 = arith.truncf %5 : vector<64x128xf32> to vector<64x128xbf16>
    %c0_3 = arith.constant 0 : index
    %c0_4 = arith.constant 0 : index
    %7 = vector.load %arg2[%c0_3, %c0_4] : memref<128x384xbf16, #tpu.memory_space<vmem>>, vector<128x384xbf16>
    %cst = arith.constant dense<0.000000e+00> : vector<64x384xf32>
    %8 = tpu.matmul %6, %7, %cst {dimension_numbers = #tpu.dot_dimension_numbers<[1], [0], [0], [1], [0, 0, 1, 1], [], []>} : vector<64x128xbf16>, vector<128x384xbf16>, vector<64x384xf32> -> vector<64x384xf32>
    %c0_5 = arith.constant 0 : index
    %c0_6 = arith.constant 0 : index
    %9 = vector.load %arg4[%c0_5, %c0_6] : memref<1x384xf32, #tpu.memory_space<vmem>>, vector<1x384xf32>
    %10 = vector.broadcast %9 : vector<1x384xf32> to vector<64x384xf32>
    %11 = arith.addf %8, %10 : vector<64x384xf32>
    %12 = vector.shape_cast %11 : vector<64x384xf32> to vector<8x8x384xf32>
    %c0_7 = arith.constant 0 : index
    %c0_8 = arith.constant 0 : index
    %c0_9 = arith.constant 0 : index
    %13 = vector.load %arg8[%c0_7, %c0_8, %c0_9] : memref<8x8x384xf32, #tpu.memory_space<vmem>>, vector<8x8x384xf32>
    tpu.vector_store %arg8[%c0_7, %c0_8, %c0_9], %12 {strides = array<i32>} : memref<8x8x384xf32, #tpu.memory_space<vmem>>, vector<8x8x384xf32>,
    %c0_10 = arith.constant 0 : index
    %c0_11 = arith.constant 0 : index
    %14 = vector.load %arg3[%c0_10, %c0_11] : memref<128x384xbf16, #tpu.memory_space<vmem>>, vector<128x384xbf16>
    %c0_12 = arith.constant 0 : index
    %c0_13 = arith.constant 0 : index
    %15 = vector.load %arg5[%c0_12, %c0_13] : memref<1x128xf32, #tpu.memory_space<vmem>>, vector<1x128xf32>
    %16 = vector.shape_cast %15 : vector<1x128xf32> to vector<1x128xf32>
    %17 = vector.broadcast %16 : vector<1x128xf32> to vector<8x128xf32>
    %c0_14 = arith.constant 0 : index
    %c0_15 = arith.constant 0 : index
    %18 = vector.load %arg7[%c0_14, %c0_15] : memref<8x128xf32, #tpu.memory_space<vmem>>, vector<8x128xf32>
    %c0_i32_16 = arith.constant 0 : i32
    %19 = arith.truncf %18 : vector<8x128xf32> to vector<8x128xbf16>
    %cst_17 = arith.constant dense<0.000000e+00> : vector<8x384xf32>
    %20 = tpu.matmul %19, %14, %cst_17 {dimension_numbers = #tpu.dot_dimension_numbers<[1], [0], [0], [1], [0, 0, 1, 1], [], []>} : vector<8x128xbf16>, vector<128x384xbf16>, vector<8x384xf32> -> vector<8x384xf32>
    %21 = arith.index_cast %c0_i32_16 : i32 to index
    %c0_18 = arith.constant 0 : index
    %c0_19 = arith.constant 0 : index
    %22 = vector.load %arg8[%21, %c0_18, %c0_19] : memref<8x8x384xf32, #tpu.memory_space<vmem>>, vector<1x8x384xf32>
    %23 = vector.shape_cast %22 : vector<1x8x384xf32> to vector<8x384xf32>
    %24 = vector.extract_strided_slice %23 {offsets = [0, 0], sizes = [8, 256], strides = [1, 1]} : vector<8x384xf32> to vector<8x256xf32>
    %25 = vector.extract_strided_slice %20 {offsets = [0, 0], sizes = [8, 256], strides = [1, 1]} : vector<8x384xf32> to vector<8x256xf32>
    %26 = arith.addf %24, %25 : vector<8x256xf32>
    %27 = arith.negf %26 : vector<8x256xf32>
    %28 = math.exp %27 : vector<8x256xf32>
    %cst_20 = arith.constant 1.000000e+00 : f32
    %29 = vector.broadcast %cst_20 : f32 to vector<8x256xf32>
    %30 = arith.addf %29, %28 : vector<8x256xf32>
    %31 = arith.divf %29, %30 : vector<8x256xf32>
    %32 = vector.extract_strided_slice %31 {offsets = [0, 0], sizes = [8, 128], strides = [1, 1]} : vector<8x256xf32> to vector<8x128xf32>
    %33 = vector.extract_strided_slice %31 {offsets = [0, 128], sizes = [8, 128], strides = [1, 1]} : vector<8x256xf32> to vector<8x128xf32>
    %34 = vector.extract_strided_slice %23 {offsets = [0, 256], sizes = [8, 128], strides = [1, 1]} : vector<8x384xf32> to vector<8x128xf32>
    %35 = vector.extract_strided_slice %20 {offsets = [0, 256], sizes = [8, 128], strides = [1, 1]} : vector<8x384xf32> to vector<8x128xf32>
    %36 = arith.addf %35, %17 : vector<8x128xf32>
    %37 = arith.mulf %32, %36 : vector<8x128xf32>
    %38 = arith.addf %34, %37 : vector<8x128xf32>
    %39 = math.tanh %38 : vector<8x128xf32>
    %40 = arith.subf %18, %39 : vector<8x128xf32>
    %41 = arith.mulf %33, %40 : vector<8x128xf32>
    %42 = arith.addf %39, %41 : vector<8x128xf32>
    %43 = arith.index_cast %c0_i32_16 : i32 to index
    %c0_21 = arith.constant 0 : index
    %c0_22 = arith.constant 0 : index
    %44 = vector.load %arg9[%43, %c0_21, %c0_22] : memref<8x8x128xf32, #tpu.memory_space<vmem>>, vector<1x8x128xf32>
    %45 = vector.shape_cast %44 : vector<1x8x128xf32> to vector<8x128xf32>
    %46 = vector.shape_cast %42 : vector<8x128xf32> to vector<1x8x128xf32>
    tpu.vector_store %arg9[%43, %c0_21, %c0_22], %46 {strides = array<i32>} : memref<8x8x128xf32, #tpu.memory_space<vmem>>, vector<1x8x128xf32>,
    %c1_i32 = arith.constant 1 : i32
    %47 = arith.truncf %42 : vector<8x128xf32> to vector<8x128xbf16>
    %cst_23 = arith.constant dense<0.000000e+00> : vector<8x384xf32>
    %48 = tpu.matmul %47, %14, %cst_23 {dimension_numbers = #tpu.dot_dimension_numbers<[1], [0], [0], [1], [0, 0, 1, 1], [], []>} : vector<8x128xbf16>, vector<128x384xbf16>, vector<8x384xf32> -> vector<8x384xf32>
    %49 = arith.index_cast %c1_i32 : i32 to index
    %c0_24 = arith.constant 0 : index
    %c0_25 = arith.constant 0 : index
    %50 = vector.load %arg8[%49, %c0_24, %c0_25] : memref<8x8x384xf32, #tpu.memory_space<vmem>>, vector<1x8x384xf32>
    %51 = vector.shape_cast %50 : vector<1x8x384xf32> to vector<8x384xf32>
    %52 = vector.extract_strided_slice %51 {offsets = [0, 0], sizes = [8, 256], strides = [1, 1]} : vector<8x384xf32> to vector<8x256xf32>
    %53 = vector.extract_strided_slice %48 {offsets = [0, 0], sizes = [8, 256], strides = [1, 1]} : vector<8x384xf32> to vector<8x256xf32>
    %54 = arith.addf %52, %53 : vector<8x256xf32>
    %55 = arith.negf %54 : vector<8x256xf32>
    %56 = math.exp %55 : vector<8x256xf32>
    %cst_26 = arith.constant 1.000000e+00 : f32
    %57 = vector.broadcast %cst_26 : f32 to vector<8x256xf32>
    %58 = arith.addf %57, %56 : vector<8x256xf32>
    %59 = arith.divf %57, %58 : vector<8x256xf32>
    %60 = vector.extract_strided_slice %59 {offsets = [0, 0], sizes = [8, 128], strides = [1, 1]} : vector<8x256xf32> to vector<8x128xf32>
    %61 = vector.extract_strided_slice %59 {offsets = [0, 128], sizes = [8, 128], strides = [1, 1]} : vector<8x256xf32> to vector<8x128xf32>
    %62 = vector.extract_strided_slice %51 {offsets = [0, 256], sizes = [8, 128], strides = [1, 1]} : vector<8x384xf32> to vector<8x128xf32>
    %63 = vector.extract_strided_slice %48 {offsets = [0, 256], sizes = [8, 128], strides = [1, 1]} : vector<8x384xf32> to vector<8x128xf32>
    %64 = arith.addf %63, %17 : vector<8x128xf32>
    %65 = arith.mulf %60, %64 : vector<8x128xf32>
    %66 = arith.addf %62, %65 : vector<8x128xf32>
    %67 = math.tanh %66 : vector<8x128xf32>
    %68 = arith.subf %42, %67 : vector<8x128xf32>
    %69 = arith.mulf %61, %68 : vector<8x128xf32>
    %70 = arith.addf %67, %69 : vector<8x128xf32>
    %71 = arith.index_cast %c1_i32 : i32 to index
    %c0_27 = arith.constant 0 : index
    %c0_28 = arith.constant 0 : index
    %72 = vector.load %arg9[%71, %c0_27, %c0_28] : memref<8x8x128xf32, #tpu.memory_space<vmem>>, vector<1x8x128xf32>
    %73 = vector.shape_cast %72 : vector<1x8x128xf32> to vector<8x128xf32>
    %74 = vector.shape_cast %70 : vector<8x128xf32> to vector<1x8x128xf32>
    tpu.vector_store %arg9[%71, %c0_27, %c0_28], %74 {strides = array<i32>} : memref<8x8x128xf32, #tpu.memory_space<vmem>>, vector<1x8x128xf32>,
    %c2_i32 = arith.constant 2 : i32
    %75 = arith.truncf %70 : vector<8x128xf32> to vector<8x128xbf16>
    %cst_29 = arith.constant dense<0.000000e+00> : vector<8x384xf32>
    %76 = tpu.matmul %75, %14, %cst_29 {dimension_numbers = #tpu.dot_dimension_numbers<[1], [0], [0], [1], [0, 0, 1, 1], [], []>} : vector<8x128xbf16>, vector<128x384xbf16>, vector<8x384xf32> -> vector<8x384xf32>
    %77 = arith.index_cast %c2_i32 : i32 to index
    %c0_30 = arith.constant 0 : index
    %c0_31 = arith.constant 0 : index
    %78 = vector.load %arg8[%77, %c0_30, %c0_31] : memref<8x8x384xf32, #tpu.memory_space<vmem>>, vector<1x8x384xf32>
    %79 = vector.shape_cast %78 : vector<1x8x384xf32> to vector<8x384xf32>
    %80 = vector.extract_strided_slice %79 {offsets = [0, 0], sizes = [8, 256], strides = [1, 1]} : vector<8x384xf32> to vector<8x256xf32>
    %81 = vector.extract_strided_slice %76 {offsets = [0, 0], sizes = [8, 256], strides = [1, 1]} : vector<8x384xf32> to vector<8x256xf32>
    %82 = arith.addf %80, %81 : vector<8x256xf32>
    %83 = arith.negf %82 : vector<8x256xf32>
    %84 = math.exp %83 : vector<8x256xf32>
    %cst_32 = arith.constant 1.000000e+00 : f32
    %85 = vector.broadcast %cst_32 : f32 to vector<8x256xf32>
    %86 = arith.addf %85, %84 : vector<8x256xf32>
    %87 = arith.divf %85, %86 : vector<8x256xf32>
    %88 = vector.extract_strided_slice %87 {offsets = [0, 0], sizes = [8, 128], strides = [1, 1]} : vector<8x256xf32> to vector<8x128xf32>
    %89 = vector.extract_strided_slice %87 {offsets = [0, 128], sizes = [8, 128], strides = [1, 1]} : vector<8x256xf32> to vector<8x128xf32>
    %90 = vector.extract_strided_slice %79 {offsets = [0, 256], sizes = [8, 128], strides = [1, 1]} : vector<8x384xf32> to vector<8x128xf32>
    %91 = vector.extract_strided_slice %76 {offsets = [0, 256], sizes = [8, 128], strides = [1, 1]} : vector<8x384xf32> to vector<8x128xf32>
    %92 = arith.addf %91, %17 : vector<8x128xf32>
    %93 = arith.mulf %88, %92 : vector<8x128xf32>
    %94 = arith.addf %90, %93 : vector<8x128xf32>
    %95 = math.tanh %94 : vector<8x128xf32>
    %96 = arith.subf %70, %95 : vector<8x128xf32>
    %97 = arith.mulf %89, %96 : vector<8x128xf32>
    %98 = arith.addf %95, %97 : vector<8x128xf32>
    %99 = arith.index_cast %c2_i32 : i32 to index
    %c0_33 = arith.constant 0 : index
    %c0_34 = arith.constant 0 : index
    %100 = vector.load %arg9[%99, %c0_33, %c0_34] : memref<8x8x128xf32, #tpu.memory_space<vmem>>, vector<1x8x128xf32>
    %101 = vector.shape_cast %100 : vector<1x8x128xf32> to vector<8x128xf32>
    %102 = vector.shape_cast %98 : vector<8x128xf32> to vector<1x8x128xf32>
    tpu.vector_store %arg9[%99, %c0_33, %c0_34], %102 {strides = array<i32>} : memref<8x8x128xf32, #tpu.memory_space<vmem>>, vector<1x8x128xf32>,
    %c3_i32 = arith.constant 3 : i32
    %103 = arith.truncf %98 : vector<8x128xf32> to vector<8x128xbf16>
    %cst_35 = arith.constant dense<0.000000e+00> : vector<8x384xf32>
    %104 = tpu.matmul %103, %14, %cst_35 {dimension_numbers = #tpu.dot_dimension_numbers<[1], [0], [0], [1], [0, 0, 1, 1], [], []>} : vector<8x128xbf16>, vector<128x384xbf16>, vector<8x384xf32> -> vector<8x384xf32>
    %105 = arith.index_cast %c3_i32 : i32 to index
    %c0_36 = arith.constant 0 : index
    %c0_37 = arith.constant 0 : index
    %106 = vector.load %arg8[%105, %c0_36, %c0_37] : memref<8x8x384xf32, #tpu.memory_space<vmem>>, vector<1x8x384xf32>
    %107 = vector.shape_cast %106 : vector<1x8x384xf32> to vector<8x384xf32>
    %108 = vector.extract_strided_slice %107 {offsets = [0, 0], sizes = [8, 256], strides = [1, 1]} : vector<8x384xf32> to vector<8x256xf32>
    %109 = vector.extract_strided_slice %104 {offsets = [0, 0], sizes = [8, 256], strides = [1, 1]} : vector<8x384xf32> to vector<8x256xf32>
    %110 = arith.addf %108, %109 : vector<8x256xf32>
    %111 = arith.negf %110 : vector<8x256xf32>
    %112 = math.exp %111 : vector<8x256xf32>
    %cst_38 = arith.constant 1.000000e+00 : f32
    %113 = vector.broadcast %cst_38 : f32 to vector<8x256xf32>
    %114 = arith.addf %113, %112 : vector<8x256xf32>
    %115 = arith.divf %113, %114 : vector<8x256xf32>
    %116 = vector.extract_strided_slice %115 {offsets = [0, 0], sizes = [8, 128], strides = [1, 1]} : vector<8x256xf32> to vector<8x128xf32>
    %117 = vector.extract_strided_slice %115 {offsets = [0, 128], sizes = [8, 128], strides = [1, 1]} : vector<8x256xf32> to vector<8x128xf32>
    %118 = vector.extract_strided_slice %107 {offsets = [0, 256], sizes = [8, 128], strides = [1, 1]} : vector<8x384xf32> to vector<8x128xf32>
    %119 = vector.extract_strided_slice %104 {offsets = [0, 256], sizes = [8, 128], strides = [1, 1]} : vector<8x384xf32> to vector<8x128xf32>
    %120 = arith.addf %119, %17 : vector<8x128xf32>
    %121 = arith.mulf %116, %120 : vector<8x128xf32>
    %122 = arith.addf %118, %121 : vector<8x128xf32>
    %123 = math.tanh %122 : vector<8x128xf32>
    %124 = arith.subf %98, %123 : vector<8x128xf32>
    %125 = arith.mulf %117, %124 : vector<8x128xf32>
    %126 = arith.addf %123, %125 : vector<8x128xf32>
    %127 = arith.index_cast %c3_i32 : i32 to index
    %c0_39 = arith.constant 0 : index
    %c0_40 = arith.constant 0 : index
    %128 = vector.load %arg9[%127, %c0_39, %c0_40] : memref<8x8x128xf32, #tpu.memory_space<vmem>>, vector<1x8x128xf32>
    %129 = vector.shape_cast %128 : vector<1x8x128xf32> to vector<8x128xf32>
    %130 = vector.shape_cast %126 : vector<8x128xf32> to vector<1x8x128xf32>
    tpu.vector_store %arg9[%127, %c0_39, %c0_40], %130 {strides = array<i32>} : memref<8x8x128xf32, #tpu.memory_space<vmem>>, vector<1x8x128xf32>,
    %c4_i32 = arith.constant 4 : i32
    %131 = arith.truncf %126 : vector<8x128xf32> to vector<8x128xbf16>
    %cst_41 = arith.constant dense<0.000000e+00> : vector<8x384xf32>
    %132 = tpu.matmul %131, %14, %cst_41 {dimension_numbers = #tpu.dot_dimension_numbers<[1], [0], [0], [1], [0, 0, 1, 1], [], []>} : vector<8x128xbf16>, vector<128x384xbf16>, vector<8x384xf32> -> vector<8x384xf32>
    %133 = arith.index_cast %c4_i32 : i32 to index
    %c0_42 = arith.constant 0 : index
    %c0_43 = arith.constant 0 : index
    %134 = vector.load %arg8[%133, %c0_42, %c0_43] : memref<8x8x384xf32, #tpu.memory_space<vmem>>, vector<1x8x384xf32>
    %135 = vector.shape_cast %134 : vector<1x8x384xf32> to vector<8x384xf32>
    %136 = vector.extract_strided_slice %135 {offsets = [0, 0], sizes = [8, 256], strides = [1, 1]} : vector<8x384xf32> to vector<8x256xf32>
    %137 = vector.extract_strided_slice %132 {offsets = [0, 0], sizes = [8, 256], strides = [1, 1]} : vector<8x384xf32> to vector<8x256xf32>
    %138 = arith.addf %136, %137 : vector<8x256xf32>
    %139 = arith.negf %138 : vector<8x256xf32>
    %140 = math.exp %139 : vector<8x256xf32>
    %cst_44 = arith.constant 1.000000e+00 : f32
    %141 = vector.broadcast %cst_44 : f32 to vector<8x256xf32>
    %142 = arith.addf %141, %140 : vector<8x256xf32>
    %143 = arith.divf %141, %142 : vector<8x256xf32>
    %144 = vector.extract_strided_slice %143 {offsets = [0, 0], sizes = [8, 128], strides = [1, 1]} : vector<8x256xf32> to vector<8x128xf32>
    %145 = vector.extract_strided_slice %143 {offsets = [0, 128], sizes = [8, 128], strides = [1, 1]} : vector<8x256xf32> to vector<8x128xf32>
    %146 = vector.extract_strided_slice %135 {offsets = [0, 256], sizes = [8, 128], strides = [1, 1]} : vector<8x384xf32> to vector<8x128xf32>
    %147 = vector.extract_strided_slice %132 {offsets = [0, 256], sizes = [8, 128], strides = [1, 1]} : vector<8x384xf32> to vector<8x128xf32>
    %148 = arith.addf %147, %17 : vector<8x128xf32>
    %149 = arith.mulf %144, %148 : vector<8x128xf32>
    %150 = arith.addf %146, %149 : vector<8x128xf32>
    %151 = math.tanh %150 : vector<8x128xf32>
    %152 = arith.subf %126, %151 : vector<8x128xf32>
    %153 = arith.mulf %145, %152 : vector<8x128xf32>
    %154 = arith.addf %151, %153 : vector<8x128xf32>
    %155 = arith.index_cast %c4_i32 : i32 to index
    %c0_45 = arith.constant 0 : index
    %c0_46 = arith.constant 0 : index
    %156 = vector.load %arg9[%155, %c0_45, %c0_46] : memref<8x8x128xf32, #tpu.memory_space<vmem>>, vector<1x8x128xf32>
    %157 = vector.shape_cast %156 : vector<1x8x128xf32> to vector<8x128xf32>
    %158 = vector.shape_cast %154 : vector<8x128xf32> to vector<1x8x128xf32>
    tpu.vector_store %arg9[%155, %c0_45, %c0_46], %158 {strides = array<i32>} : memref<8x8x128xf32, #tpu.memory_space<vmem>>, vector<1x8x128xf32>,
    %c5_i32 = arith.constant 5 : i32
    %159 = arith.truncf %154 : vector<8x128xf32> to vector<8x128xbf16>
    %cst_47 = arith.constant dense<0.000000e+00> : vector<8x384xf32>
    %160 = tpu.matmul %159, %14, %cst_47 {dimension_numbers = #tpu.dot_dimension_numbers<[1], [0], [0], [1], [0, 0, 1, 1], [], []>} : vector<8x128xbf16>, vector<128x384xbf16>, vector<8x384xf32> -> vector<8x384xf32>
    %161 = arith.index_cast %c5_i32 : i32 to index
    %c0_48 = arith.constant 0 : index
    %c0_49 = arith.constant 0 : index
    %162 = vector.load %arg8[%161, %c0_48, %c0_49] : memref<8x8x384xf32, #tpu.memory_space<vmem>>, vector<1x8x384xf32>
    %163 = vector.shape_cast %162 : vector<1x8x384xf32> to vector<8x384xf32>
    %164 = vector.extract_strided_slice %163 {offsets = [0, 0], sizes = [8, 256], strides = [1, 1]} : vector<8x384xf32> to vector<8x256xf32>
    %165 = vector.extract_strided_slice %160 {offsets = [0, 0], sizes = [8, 256], strides = [1, 1]} : vector<8x384xf32> to vector<8x256xf32>
    %166 = arith.addf %164, %165 : vector<8x256xf32>
    %167 = arith.negf %166 : vector<8x256xf32>
    %168 = math.exp %167 : vector<8x256xf32>
    %cst_50 = arith.constant 1.000000e+00 : f32
    %169 = vector.broadcast %cst_50 : f32 to vector<8x256xf32>
    %170 = arith.addf %169, %168 : vector<8x256xf32>
    %171 = arith.divf %169, %170 : vector<8x256xf32>
    %172 = vector.extract_strided_slice %171 {offsets = [0, 0], sizes = [8, 128], strides = [1, 1]} : vector<8x256xf32> to vector<8x128xf32>
    %173 = vector.extract_strided_slice %171 {offsets = [0, 128], sizes = [8, 128], strides = [1, 1]} : vector<8x256xf32> to vector<8x128xf32>
    %174 = vector.extract_strided_slice %163 {offsets = [0, 256], sizes = [8, 128], strides = [1, 1]} : vector<8x384xf32> to vector<8x128xf32>
    %175 = vector.extract_strided_slice %160 {offsets = [0, 256], sizes = [8, 128], strides = [1, 1]} : vector<8x384xf32> to vector<8x128xf32>
    %176 = arith.addf %175, %17 : vector<8x128xf32>
    %177 = arith.mulf %172, %176 : vector<8x128xf32>
    %178 = arith.addf %174, %177 : vector<8x128xf32>
    %179 = math.tanh %178 : vector<8x128xf32>
    %180 = arith.subf %154, %179 : vector<8x128xf32>
    %181 = arith.mulf %173, %180 : vector<8x128xf32>
    %182 = arith.addf %179, %181 : vector<8x128xf32>
    %183 = arith.index_cast %c5_i32 : i32 to index
    %c0_51 = arith.constant 0 : index
    %c0_52 = arith.constant 0 : index
    %184 = vector.load %arg9[%183, %c0_51, %c0_52] : memref<8x8x128xf32, #tpu.memory_space<vmem>>, vector<1x8x128xf32>
    %185 = vector.shape_cast %184 : vector<1x8x128xf32> to vector<8x128xf32>
    %186 = vector.shape_cast %182 : vector<8x128xf32> to vector<1x8x128xf32>
    tpu.vector_store %arg9[%183, %c0_51, %c0_52], %186 {strides = array<i32>} : memref<8x8x128xf32, #tpu.memory_space<vmem>>, vector<1x8x128xf32>,
    %c6_i32 = arith.constant 6 : i32
    %187 = arith.truncf %182 : vector<8x128xf32> to vector<8x128xbf16>
    %cst_53 = arith.constant dense<0.000000e+00> : vector<8x384xf32>
    %188 = tpu.matmul %187, %14, %cst_53 {dimension_numbers = #tpu.dot_dimension_numbers<[1], [0], [0], [1], [0, 0, 1, 1], [], []>} : vector<8x128xbf16>, vector<128x384xbf16>, vector<8x384xf32> -> vector<8x384xf32>
    %189 = arith.index_cast %c6_i32 : i32 to index
    %c0_54 = arith.constant 0 : index
    %c0_55 = arith.constant 0 : index
    %190 = vector.load %arg8[%189, %c0_54, %c0_55] : memref<8x8x384xf32, #tpu.memory_space<vmem>>, vector<1x8x384xf32>
    %191 = vector.shape_cast %190 : vector<1x8x384xf32> to vector<8x384xf32>
    %192 = vector.extract_strided_slice %191 {offsets = [0, 0], sizes = [8, 256], strides = [1, 1]} : vector<8x384xf32> to vector<8x256xf32>
    %193 = vector.extract_strided_slice %188 {offsets = [0, 0], sizes = [8, 256], strides = [1, 1]} : vector<8x384xf32> to vector<8x256xf32>
    %194 = arith.addf %192, %193 : vector<8x256xf32>
    %195 = arith.negf %194 : vector<8x256xf32>
    %196 = math.exp %195 : vector<8x256xf32>
    %cst_56 = arith.constant 1.000000e+00 : f32
    %197 = vector.broadcast %cst_56 : f32 to vector<8x256xf32>
    %198 = arith.addf %197, %196 : vector<8x256xf32>
    %199 = arith.divf %197, %198 : vector<8x256xf32>
    %200 = vector.extract_strided_slice %199 {offsets = [0, 0], sizes = [8, 128], strides = [1, 1]} : vector<8x256xf32> to vector<8x128xf32>
    %201 = vector.extract_strided_slice %199 {offsets = [0, 128], sizes = [8, 128], strides = [1, 1]} : vector<8x256xf32> to vector<8x128xf32>
    %202 = vector.extract_strided_slice %191 {offsets = [0, 256], sizes = [8, 128], strides = [1, 1]} : vector<8x384xf32> to vector<8x128xf32>
    %203 = vector.extract_strided_slice %188 {offsets = [0, 256], sizes = [8, 128], strides = [1, 1]} : vector<8x384xf32> to vector<8x128xf32>
    %204 = arith.addf %203, %17 : vector<8x128xf32>
    %205 = arith.mulf %200, %204 : vector<8x128xf32>
    %206 = arith.addf %202, %205 : vector<8x128xf32>
    %207 = math.tanh %206 : vector<8x128xf32>
    %208 = arith.subf %182, %207 : vector<8x128xf32>
    %209 = arith.mulf %201, %208 : vector<8x128xf32>
    %210 = arith.addf %207, %209 : vector<8x128xf32>
    %211 = arith.index_cast %c6_i32 : i32 to index
    %c0_57 = arith.constant 0 : index
    %c0_58 = arith.constant 0 : index
    %212 = vector.load %arg9[%211, %c0_57, %c0_58] : memref<8x8x128xf32, #tpu.memory_space<vmem>>, vector<1x8x128xf32>
    %213 = vector.shape_cast %212 : vector<1x8x128xf32> to vector<8x128xf32>
    %214 = vector.shape_cast %210 : vector<8x128xf32> to vector<1x8x128xf32>
    tpu.vector_store %arg9[%211, %c0_57, %c0_58], %214 {strides = array<i32>} : memref<8x8x128xf32, #tpu.memory_space<vmem>>, vector<1x8x128xf32>,
    %c7_i32 = arith.constant 7 : i32
    %215 = arith.truncf %210 : vector<8x128xf32> to vector<8x128xbf16>
    %cst_59 = arith.constant dense<0.000000e+00> : vector<8x384xf32>
    %216 = tpu.matmul %215, %14, %cst_59 {dimension_numbers = #tpu.dot_dimension_numbers<[1], [0], [0], [1], [0, 0, 1, 1], [], []>} : vector<8x128xbf16>, vector<128x384xbf16>, vector<8x384xf32> -> vector<8x384xf32>
    %217 = arith.index_cast %c7_i32 : i32 to index
    %c0_60 = arith.constant 0 : index
    %c0_61 = arith.constant 0 : index
    %218 = vector.load %arg8[%217, %c0_60, %c0_61] : memref<8x8x384xf32, #tpu.memory_space<vmem>>, vector<1x8x384xf32>
    %219 = vector.shape_cast %218 : vector<1x8x384xf32> to vector<8x384xf32>
    %220 = vector.extract_strided_slice %219 {offsets = [0, 0], sizes = [8, 256], strides = [1, 1]} : vector<8x384xf32> to vector<8x256xf32>
    %221 = vector.extract_strided_slice %216 {offsets = [0, 0], sizes = [8, 256], strides = [1, 1]} : vector<8x384xf32> to vector<8x256xf32>
    %222 = arith.addf %220, %221 : vector<8x256xf32>
    %223 = arith.negf %222 : vector<8x256xf32>
    %224 = math.exp %223 : vector<8x256xf32>
    %cst_62 = arith.constant 1.000000e+00 : f32
    %225 = vector.broadcast %cst_62 : f32 to vector<8x256xf32>
    %226 = arith.addf %225, %224 : vector<8x256xf32>
    %227 = arith.divf %225, %226 : vector<8x256xf32>
    %228 = vector.extract_strided_slice %227 {offsets = [0, 0], sizes = [8, 128], strides = [1, 1]} : vector<8x256xf32> to vector<8x128xf32>
    %229 = vector.extract_strided_slice %227 {offsets = [0, 128], sizes = [8, 128], strides = [1, 1]} : vector<8x256xf32> to vector<8x128xf32>
    %230 = vector.extract_strided_slice %219 {offsets = [0, 256], sizes = [8, 128], strides = [1, 1]} : vector<8x384xf32> to vector<8x128xf32>
    %231 = vector.extract_strided_slice %216 {offsets = [0, 256], sizes = [8, 128], strides = [1, 1]} : vector<8x384xf32> to vector<8x128xf32>
    %232 = arith.addf %231, %17 : vector<8x128xf32>
    %233 = arith.mulf %228, %232 : vector<8x128xf32>
    %234 = arith.addf %230, %233 : vector<8x128xf32>
    %235 = math.tanh %234 : vector<8x128xf32>
    %236 = arith.subf %210, %235 : vector<8x128xf32>
    %237 = arith.mulf %229, %236 : vector<8x128xf32>
    %238 = arith.addf %235, %237 : vector<8x128xf32>
    %239 = arith.index_cast %c7_i32 : i32 to index
    %c0_63 = arith.constant 0 : index
    %c0_64 = arith.constant 0 : index
    %240 = vector.load %arg9[%239, %c0_63, %c0_64] : memref<8x8x128xf32, #tpu.memory_space<vmem>>, vector<1x8x128xf32>
    %241 = vector.shape_cast %240 : vector<1x8x128xf32> to vector<8x128xf32>
    %242 = vector.shape_cast %238 : vector<8x128xf32> to vector<1x8x128xf32>
    tpu.vector_store %arg9[%239, %c0_63, %c0_64], %242 {strides = array<i32>} : memref<8x8x128xf32, #tpu.memory_space<vmem>>, vector<1x8x128xf32>,
    %c8_i32 = arith.constant 8 : i32
    %c0_65 = arith.constant 0 : index
    %c0_66 = arith.constant 0 : index
    %243 = vector.load %arg7[%c0_65, %c0_66] : memref<8x128xf32, #tpu.memory_space<vmem>>, vector<8x128xf32>
    tpu.vector_store %arg7[%c0_65, %c0_66], %238 {strides = array<i32>} : memref<8x128xf32, #tpu.memory_space<vmem>>, vector<8x128xf32>,
    %c0_67 = arith.constant 0 : index
    %c0_68 = arith.constant 0 : index
    %c0_69 = arith.constant 0 : index
    %244 = vector.load %arg9[%c0_67, %c0_68, %c0_69] : memref<8x8x128xf32, #tpu.memory_space<vmem>>, vector<8x8x128xf32>
    %245 = arith.truncf %244 : vector<8x8x128xf32> to vector<8x8x128xbf16>
    %c0_70 = arith.constant 0 : index
    %c0_71 = arith.constant 0 : index
    %c0_72 = arith.constant 0 : index
    %246 = vector.load %arg6[%c0_70, %c0_71, %c0_72] : memref<8x8x128xbf16, #tpu.memory_space<vmem>>, vector<8x8x128xbf16>
    tpu.vector_store %arg6[%c0_70, %c0_71, %c0_72], %245 {strides = array<i32>} : memref<8x8x128xbf16, #tpu.memory_space<vmem>>, vector<8x8x128xbf16>,
    return
  }
  func.func @transform_0(%arg0: i32) -> (i32, i32, i32) {
    %c0_i32 = arith.constant 0 : i32
    %c0_i32_0 = arith.constant 0 : i32
    %c0_i32_1 = arith.constant 0 : i32
    return %arg0, %c0_i32, %c0_i32_0 : i32, i32, i32
  }
  func.func @transform_1(%arg0: i32) -> (i32, i32) {
    %c0_i32 = arith.constant 0 : i32
    %c0_i32_0 = arith.constant 0 : i32
    %c0_i32_1 = arith.constant 0 : i32
    return %c0_i32, %c0_i32_0 : i32, i32
  }
  func.func @transform_2(%arg0: i32) -> (i32, i32) {
    %c0_i32 = arith.constant 0 : i32
    %c0_i32_0 = arith.constant 0 : i32
    %c0_i32_1 = arith.constant 0 : i32
    return %c0_i32, %c0_i32_0 : i32, i32
  }
  func.func @transform_3(%arg0: i32) -> (i32, i32) {
    %c0_i32 = arith.constant 0 : i32
    %c0_i32_0 = arith.constant 0 : i32
    %c0_i32_1 = arith.constant 0 : i32
    return %c0_i32, %c0_i32_0 : i32, i32
  }
  func.func @transform_4(%arg0: i32) -> (i32, i32) {
    %c0_i32 = arith.constant 0 : i32
    %c0_i32_0 = arith.constant 0 : i32
    %c0_i32_1 = arith.constant 0 : i32
    return %c0_i32, %c0_i32_0 : i32, i32
  }
  func.func @transform_5(%arg0: i32) -> (i32, i32, i32) {
    %c0_i32 = arith.constant 0 : i32
    %c0_i32_0 = arith.constant 0 : i32
    %c0_i32_1 = arith.constant 0 : i32
    return %arg0, %c0_i32, %c0_i32_0 : i32, i32, i32
  }
}

module attributes {stable_mosaic.version = 11 : i64} {
  func.func @kernel(%arg0: i32, %arg1: memref<8x8x128xbf16, #tpu.memory_space<vmem>>, %arg2: memref<128x384xbf16, #tpu.memory_space<vmem>>, %arg3: memref<128x384xbf16, #tpu.memory_space<vmem>>, %arg4: memref<1x384xf32, #tpu.memory_space<vmem>>, %arg5: memref<1x128xf32, #tpu.memory_space<vmem>>, %arg6: memref<8x128x128xbf16, #tpu.memory_space<vmem>>, %arg7: memref<1x128xf32, #tpu.memory_space<vmem>>, %arg8: memref<8x128xf32, #tpu.memory_space<vmem>>, %arg9: memref<8x128xf32, #tpu.memory_space<vmem>>, %arg10: memref<8x8x384xf32, #tpu.memory_space<vmem>>, %arg11: memref<8x128xf32, #tpu.memory_space<vmem>>) attributes {dimension_semantics = [#tpu.dimension_semantics<arbitrary>], iteration_bounds = array<i64: 1>, scalar_prefetch = 0 : i64, scratch_operands = 3 : i64, tpu.core_type = #tpu.core_type<tc>, window_params = [{transform_indices = @transform_0, window_bounds = array<i64: 8, 8, 128>}, {pipeline_mode = #tpu.pipeline_mode<synchronous>, transform_indices = @transform_1, window_bounds = array<i64: 128, 384>}, {pipeline_mode = #tpu.pipeline_mode<synchronous>, transform_indices = @transform_2, window_bounds = array<i64: 128, 384>}, {pipeline_mode = #tpu.pipeline_mode<synchronous>, transform_indices = @transform_3, window_bounds = array<i64: 1, 384>}, {pipeline_mode = #tpu.pipeline_mode<synchronous>, transform_indices = @transform_4, window_bounds = array<i64: 1, 128>}, {transform_indices = @transform_5, window_bounds = array<i64: 8, 128, 128>}, {pipeline_mode = #tpu.pipeline_mode<synchronous>, transform_indices = @transform_6, window_bounds = array<i64: 1, 128>}, {pipeline_mode = #tpu.pipeline_mode<synchronous>, transform_indices = @transform_7, window_bounds = array<i64: 8, 128>}]} {
    %c0_i32 = arith.constant 0 : i32
    %0 = arith.cmpi eq, %arg0, %c0_i32 : i32
    %1 = arith.extui %0 : i1 to i32
    %c0_i32_0 = arith.constant 0 : i32
    %2 = arith.cmpi ne, %1, %c0_i32_0 : i32
    scf.if %2 {
      %cst_109 = arith.constant 0.000000e+00 : f32
      %279 = vector.broadcast %cst_109 : f32 to vector<8x128xf32>
      %c0_110 = arith.constant 0 : index
      %c0_111 = arith.constant 0 : index
      %280 = vector.load %arg9[%c0_110, %c0_111] : memref<8x128xf32, #tpu.memory_space<vmem>>, vector<8x128xf32>
      tpu.vector_store %arg9[%c0_110, %c0_111], %279 {strides = array<i32>} : memref<8x128xf32, #tpu.memory_space<vmem>>, vector<8x128xf32>,
      %cst_112 = arith.constant 0.000000e+00 : f32
      %281 = vector.broadcast %cst_112 : f32 to vector<8x128xf32>
      %c0_113 = arith.constant 0 : index
      %c0_114 = arith.constant 0 : index
      %282 = vector.load %arg11[%c0_113, %c0_114] : memref<8x128xf32, #tpu.memory_space<vmem>>, vector<8x128xf32>
      tpu.vector_store %arg11[%c0_113, %c0_114], %281 {strides = array<i32>} : memref<8x128xf32, #tpu.memory_space<vmem>>, vector<8x128xf32>,
    } else {
    }
    %c0 = arith.constant 0 : index
    %c0_1 = arith.constant 0 : index
    %c0_2 = arith.constant 0 : index
    %3 = vector.load %arg1[%c0, %c0_1, %c0_2] : memref<8x8x128xbf16, #tpu.memory_space<vmem>>, vector<8x8x128xbf16>
    %4 = arith.extf %3 : vector<8x8x128xbf16> to vector<8x8x128xf32>
    %5 = vector.shape_cast %4 : vector<8x8x128xf32> to vector<64x128xf32>
    %6 = arith.truncf %5 : vector<64x128xf32> to vector<64x128xbf16>
    %c0_3 = arith.constant 0 : index
    %c0_4 = arith.constant 0 : index
    %7 = vector.load %arg2[%c0_3, %c0_4] : memref<128x384xbf16, #tpu.memory_space<vmem>>, vector<128x384xbf16>
    %cst = arith.constant dense<0.000000e+00> : vector<64x384xf32>
    %8 = tpu.matmul %6, %7, %cst {dimension_numbers = #tpu.dot_dimension_numbers<[1], [0], [0], [1], [0, 0, 1, 1], [], []>} : vector<64x128xbf16>, vector<128x384xbf16>, vector<64x384xf32> -> vector<64x384xf32>
    %c0_5 = arith.constant 0 : index
    %c0_6 = arith.constant 0 : index
    %9 = vector.load %arg4[%c0_5, %c0_6] : memref<1x384xf32, #tpu.memory_space<vmem>>, vector<1x384xf32>
    %10 = vector.broadcast %9 : vector<1x384xf32> to vector<64x384xf32>
    %11 = arith.addf %8, %10 : vector<64x384xf32>
    %12 = vector.shape_cast %11 : vector<64x384xf32> to vector<8x8x384xf32>
    %c0_7 = arith.constant 0 : index
    %c0_8 = arith.constant 0 : index
    %c0_9 = arith.constant 0 : index
    %13 = vector.load %arg10[%c0_7, %c0_8, %c0_9] : memref<8x8x384xf32, #tpu.memory_space<vmem>>, vector<8x8x384xf32>
    tpu.vector_store %arg10[%c0_7, %c0_8, %c0_9], %12 {strides = array<i32>} : memref<8x8x384xf32, #tpu.memory_space<vmem>>, vector<8x8x384xf32>,
    %c0_10 = arith.constant 0 : index
    %c0_11 = arith.constant 0 : index
    %14 = vector.load %arg3[%c0_10, %c0_11] : memref<128x384xbf16, #tpu.memory_space<vmem>>, vector<128x384xbf16>
    %c0_12 = arith.constant 0 : index
    %c0_13 = arith.constant 0 : index
    %15 = vector.load %arg5[%c0_12, %c0_13] : memref<1x128xf32, #tpu.memory_space<vmem>>, vector<1x128xf32>
    %16 = vector.shape_cast %15 : vector<1x128xf32> to vector<1x128xf32>
    %17 = vector.broadcast %16 : vector<1x128xf32> to vector<8x128xf32>
    %c0_14 = arith.constant 0 : index
    %c0_15 = arith.constant 0 : index
    %18 = vector.load %arg9[%c0_14, %c0_15] : memref<8x128xf32, #tpu.memory_space<vmem>>, vector<8x128xf32>
    %c0_i32_16 = arith.constant 0 : i32
    %19 = arith.truncf %18 : vector<8x128xf32> to vector<8x128xbf16>
    %cst_17 = arith.constant dense<0.000000e+00> : vector<8x384xf32>
    %20 = tpu.matmul %19, %14, %cst_17 {dimension_numbers = #tpu.dot_dimension_numbers<[1], [0], [0], [1], [0, 0, 1, 1], [], []>} : vector<8x128xbf16>, vector<128x384xbf16>, vector<8x384xf32> -> vector<8x384xf32>
    %21 = arith.index_cast %c0_i32_16 : i32 to index
    %c0_18 = arith.constant 0 : index
    %c0_19 = arith.constant 0 : index
    %22 = vector.load %arg10[%21, %c0_18, %c0_19] : memref<8x8x384xf32, #tpu.memory_space<vmem>>, vector<1x8x384xf32>
    %23 = vector.shape_cast %22 : vector<1x8x384xf32> to vector<8x384xf32>
    %24 = vector.extract_strided_slice %23 {offsets = [0, 0], sizes = [8, 256], strides = [1, 1]} : vector<8x384xf32> to vector<8x256xf32>
    %25 = vector.extract_strided_slice %20 {offsets = [0, 0], sizes = [8, 256], strides = [1, 1]} : vector<8x384xf32> to vector<8x256xf32>
    %26 = arith.addf %24, %25 : vector<8x256xf32>
    %27 = arith.negf %26 : vector<8x256xf32>
    %28 = math.exp %27 : vector<8x256xf32>
    %cst_20 = arith.constant 1.000000e+00 : f32
    %29 = vector.broadcast %cst_20 : f32 to vector<8x256xf32>
    %30 = arith.addf %29, %28 : vector<8x256xf32>
    %31 = arith.divf %29, %30 : vector<8x256xf32>
    %32 = vector.extract_strided_slice %31 {offsets = [0, 0], sizes = [8, 128], strides = [1, 1]} : vector<8x256xf32> to vector<8x128xf32>
    %33 = vector.extract_strided_slice %31 {offsets = [0, 128], sizes = [8, 128], strides = [1, 1]} : vector<8x256xf32> to vector<8x128xf32>
    %34 = vector.extract_strided_slice %23 {offsets = [0, 256], sizes = [8, 128], strides = [1, 1]} : vector<8x384xf32> to vector<8x128xf32>
    %35 = vector.extract_strided_slice %20 {offsets = [0, 256], sizes = [8, 128], strides = [1, 1]} : vector<8x384xf32> to vector<8x128xf32>
    %36 = arith.addf %35, %17 : vector<8x128xf32>
    %37 = arith.mulf %32, %36 : vector<8x128xf32>
    %38 = arith.addf %34, %37 : vector<8x128xf32>
    %39 = math.tanh %38 : vector<8x128xf32>
    %40 = arith.subf %18, %39 : vector<8x128xf32>
    %41 = arith.mulf %33, %40 : vector<8x128xf32>
    %42 = arith.addf %39, %41 : vector<8x128xf32>
    %c0_21 = arith.constant 0 : index
    %c0_22 = arith.constant 0 : index
    %43 = vector.load %arg11[%c0_21, %c0_22] : memref<8x128xf32, #tpu.memory_space<vmem>>, vector<8x128xf32>
    %44 = arith.truncf %42 : vector<8x128xf32> to vector<8x128xbf16>
    %45 = arith.index_cast %c0_i32_16 : i32 to index
    %c0_23 = arith.constant 0 : index
    %c0_24 = arith.constant 0 : index
    %46 = vector.load %arg6[%45, %c0_23, %c0_24] : memref<8x128x128xbf16, #tpu.memory_space<vmem>>, vector<1x128x128xbf16>
    %47 = vector.shape_cast %46 : vector<1x128x128xbf16> to vector<128x128xbf16>
    %cst_25 = arith.constant dense<0.000000e+00> : vector<8x128xf32>
    %48 = tpu.matmul %44, %47, %cst_25 {dimension_numbers = #tpu.dot_dimension_numbers<[1], [0], [0], [1], [0, 0, 1, 1], [], []>} : vector<8x128xbf16>, vector<128x128xbf16>, vector<8x128xf32> -> vector<8x128xf32>
    %49 = arith.addf %43, %48 : vector<8x128xf32>
    %c0_26 = arith.constant 0 : index
    %c0_27 = arith.constant 0 : index
    %50 = vector.load %arg11[%c0_26, %c0_27] : memref<8x128xf32, #tpu.memory_space<vmem>>, vector<8x128xf32>
    tpu.vector_store %arg11[%c0_26, %c0_27], %49 {strides = array<i32>} : memref<8x128xf32, #tpu.memory_space<vmem>>, vector<8x128xf32>,
    %c1_i32 = arith.constant 1 : i32
    %51 = arith.truncf %42 : vector<8x128xf32> to vector<8x128xbf16>
    %cst_28 = arith.constant dense<0.000000e+00> : vector<8x384xf32>
    %52 = tpu.matmul %51, %14, %cst_28 {dimension_numbers = #tpu.dot_dimension_numbers<[1], [0], [0], [1], [0, 0, 1, 1], [], []>} : vector<8x128xbf16>, vector<128x384xbf16>, vector<8x384xf32> -> vector<8x384xf32>
    %53 = arith.index_cast %c1_i32 : i32 to index
    %c0_29 = arith.constant 0 : index
    %c0_30 = arith.constant 0 : index
    %54 = vector.load %arg10[%53, %c0_29, %c0_30] : memref<8x8x384xf32, #tpu.memory_space<vmem>>, vector<1x8x384xf32>
    %55 = vector.shape_cast %54 : vector<1x8x384xf32> to vector<8x384xf32>
    %56 = vector.extract_strided_slice %55 {offsets = [0, 0], sizes = [8, 256], strides = [1, 1]} : vector<8x384xf32> to vector<8x256xf32>
    %57 = vector.extract_strided_slice %52 {offsets = [0, 0], sizes = [8, 256], strides = [1, 1]} : vector<8x384xf32> to vector<8x256xf32>
    %58 = arith.addf %56, %57 : vector<8x256xf32>
    %59 = arith.negf %58 : vector<8x256xf32>
    %60 = math.exp %59 : vector<8x256xf32>
    %cst_31 = arith.constant 1.000000e+00 : f32
    %61 = vector.broadcast %cst_31 : f32 to vector<8x256xf32>
    %62 = arith.addf %61, %60 : vector<8x256xf32>
    %63 = arith.divf %61, %62 : vector<8x256xf32>
    %64 = vector.extract_strided_slice %63 {offsets = [0, 0], sizes = [8, 128], strides = [1, 1]} : vector<8x256xf32> to vector<8x128xf32>
    %65 = vector.extract_strided_slice %63 {offsets = [0, 128], sizes = [8, 128], strides = [1, 1]} : vector<8x256xf32> to vector<8x128xf32>
    %66 = vector.extract_strided_slice %55 {offsets = [0, 256], sizes = [8, 128], strides = [1, 1]} : vector<8x384xf32> to vector<8x128xf32>
    %67 = vector.extract_strided_slice %52 {offsets = [0, 256], sizes = [8, 128], strides = [1, 1]} : vector<8x384xf32> to vector<8x128xf32>
    %68 = arith.addf %67, %17 : vector<8x128xf32>
    %69 = arith.mulf %64, %68 : vector<8x128xf32>
    %70 = arith.addf %66, %69 : vector<8x128xf32>
    %71 = math.tanh %70 : vector<8x128xf32>
    %72 = arith.subf %42, %71 : vector<8x128xf32>
    %73 = arith.mulf %65, %72 : vector<8x128xf32>
    %74 = arith.addf %71, %73 : vector<8x128xf32>
    %c0_32 = arith.constant 0 : index
    %c0_33 = arith.constant 0 : index
    %75 = vector.load %arg11[%c0_32, %c0_33] : memref<8x128xf32, #tpu.memory_space<vmem>>, vector<8x128xf32>
    %76 = arith.truncf %74 : vector<8x128xf32> to vector<8x128xbf16>
    %77 = arith.index_cast %c1_i32 : i32 to index
    %c0_34 = arith.constant 0 : index
    %c0_35 = arith.constant 0 : index
    %78 = vector.load %arg6[%77, %c0_34, %c0_35] : memref<8x128x128xbf16, #tpu.memory_space<vmem>>, vector<1x128x128xbf16>
    %79 = vector.shape_cast %78 : vector<1x128x128xbf16> to vector<128x128xbf16>
    %cst_36 = arith.constant dense<0.000000e+00> : vector<8x128xf32>
    %80 = tpu.matmul %76, %79, %cst_36 {dimension_numbers = #tpu.dot_dimension_numbers<[1], [0], [0], [1], [0, 0, 1, 1], [], []>} : vector<8x128xbf16>, vector<128x128xbf16>, vector<8x128xf32> -> vector<8x128xf32>
    %81 = arith.addf %75, %80 : vector<8x128xf32>
    %c0_37 = arith.constant 0 : index
    %c0_38 = arith.constant 0 : index
    %82 = vector.load %arg11[%c0_37, %c0_38] : memref<8x128xf32, #tpu.memory_space<vmem>>, vector<8x128xf32>
    tpu.vector_store %arg11[%c0_37, %c0_38], %81 {strides = array<i32>} : memref<8x128xf32, #tpu.memory_space<vmem>>, vector<8x128xf32>,
    %c2_i32 = arith.constant 2 : i32
    %83 = arith.truncf %74 : vector<8x128xf32> to vector<8x128xbf16>
    %cst_39 = arith.constant dense<0.000000e+00> : vector<8x384xf32>
    %84 = tpu.matmul %83, %14, %cst_39 {dimension_numbers = #tpu.dot_dimension_numbers<[1], [0], [0], [1], [0, 0, 1, 1], [], []>} : vector<8x128xbf16>, vector<128x384xbf16>, vector<8x384xf32> -> vector<8x384xf32>
    %85 = arith.index_cast %c2_i32 : i32 to index
    %c0_40 = arith.constant 0 : index
    %c0_41 = arith.constant 0 : index
    %86 = vector.load %arg10[%85, %c0_40, %c0_41] : memref<8x8x384xf32, #tpu.memory_space<vmem>>, vector<1x8x384xf32>
    %87 = vector.shape_cast %86 : vector<1x8x384xf32> to vector<8x384xf32>
    %88 = vector.extract_strided_slice %87 {offsets = [0, 0], sizes = [8, 256], strides = [1, 1]} : vector<8x384xf32> to vector<8x256xf32>
    %89 = vector.extract_strided_slice %84 {offsets = [0, 0], sizes = [8, 256], strides = [1, 1]} : vector<8x384xf32> to vector<8x256xf32>
    %90 = arith.addf %88, %89 : vector<8x256xf32>
    %91 = arith.negf %90 : vector<8x256xf32>
    %92 = math.exp %91 : vector<8x256xf32>
    %cst_42 = arith.constant 1.000000e+00 : f32
    %93 = vector.broadcast %cst_42 : f32 to vector<8x256xf32>
    %94 = arith.addf %93, %92 : vector<8x256xf32>
    %95 = arith.divf %93, %94 : vector<8x256xf32>
    %96 = vector.extract_strided_slice %95 {offsets = [0, 0], sizes = [8, 128], strides = [1, 1]} : vector<8x256xf32> to vector<8x128xf32>
    %97 = vector.extract_strided_slice %95 {offsets = [0, 128], sizes = [8, 128], strides = [1, 1]} : vector<8x256xf32> to vector<8x128xf32>
    %98 = vector.extract_strided_slice %87 {offsets = [0, 256], sizes = [8, 128], strides = [1, 1]} : vector<8x384xf32> to vector<8x128xf32>
    %99 = vector.extract_strided_slice %84 {offsets = [0, 256], sizes = [8, 128], strides = [1, 1]} : vector<8x384xf32> to vector<8x128xf32>
    %100 = arith.addf %99, %17 : vector<8x128xf32>
    %101 = arith.mulf %96, %100 : vector<8x128xf32>
    %102 = arith.addf %98, %101 : vector<8x128xf32>
    %103 = math.tanh %102 : vector<8x128xf32>
    %104 = arith.subf %74, %103 : vector<8x128xf32>
    %105 = arith.mulf %97, %104 : vector<8x128xf32>
    %106 = arith.addf %103, %105 : vector<8x128xf32>
    %c0_43 = arith.constant 0 : index
    %c0_44 = arith.constant 0 : index
    %107 = vector.load %arg11[%c0_43, %c0_44] : memref<8x128xf32, #tpu.memory_space<vmem>>, vector<8x128xf32>
    %108 = arith.truncf %106 : vector<8x128xf32> to vector<8x128xbf16>
    %109 = arith.index_cast %c2_i32 : i32 to index
    %c0_45 = arith.constant 0 : index
    %c0_46 = arith.constant 0 : index
    %110 = vector.load %arg6[%109, %c0_45, %c0_46] : memref<8x128x128xbf16, #tpu.memory_space<vmem>>, vector<1x128x128xbf16>
    %111 = vector.shape_cast %110 : vector<1x128x128xbf16> to vector<128x128xbf16>
    %cst_47 = arith.constant dense<0.000000e+00> : vector<8x128xf32>
    %112 = tpu.matmul %108, %111, %cst_47 {dimension_numbers = #tpu.dot_dimension_numbers<[1], [0], [0], [1], [0, 0, 1, 1], [], []>} : vector<8x128xbf16>, vector<128x128xbf16>, vector<8x128xf32> -> vector<8x128xf32>
    %113 = arith.addf %107, %112 : vector<8x128xf32>
    %c0_48 = arith.constant 0 : index
    %c0_49 = arith.constant 0 : index
    %114 = vector.load %arg11[%c0_48, %c0_49] : memref<8x128xf32, #tpu.memory_space<vmem>>, vector<8x128xf32>
    tpu.vector_store %arg11[%c0_48, %c0_49], %113 {strides = array<i32>} : memref<8x128xf32, #tpu.memory_space<vmem>>, vector<8x128xf32>,
    %c3_i32 = arith.constant 3 : i32
    %115 = arith.truncf %106 : vector<8x128xf32> to vector<8x128xbf16>
    %cst_50 = arith.constant dense<0.000000e+00> : vector<8x384xf32>
    %116 = tpu.matmul %115, %14, %cst_50 {dimension_numbers = #tpu.dot_dimension_numbers<[1], [0], [0], [1], [0, 0, 1, 1], [], []>} : vector<8x128xbf16>, vector<128x384xbf16>, vector<8x384xf32> -> vector<8x384xf32>
    %117 = arith.index_cast %c3_i32 : i32 to index
    %c0_51 = arith.constant 0 : index
    %c0_52 = arith.constant 0 : index
    %118 = vector.load %arg10[%117, %c0_51, %c0_52] : memref<8x8x384xf32, #tpu.memory_space<vmem>>, vector<1x8x384xf32>
    %119 = vector.shape_cast %118 : vector<1x8x384xf32> to vector<8x384xf32>
    %120 = vector.extract_strided_slice %119 {offsets = [0, 0], sizes = [8, 256], strides = [1, 1]} : vector<8x384xf32> to vector<8x256xf32>
    %121 = vector.extract_strided_slice %116 {offsets = [0, 0], sizes = [8, 256], strides = [1, 1]} : vector<8x384xf32> to vector<8x256xf32>
    %122 = arith.addf %120, %121 : vector<8x256xf32>
    %123 = arith.negf %122 : vector<8x256xf32>
    %124 = math.exp %123 : vector<8x256xf32>
    %cst_53 = arith.constant 1.000000e+00 : f32
    %125 = vector.broadcast %cst_53 : f32 to vector<8x256xf32>
    %126 = arith.addf %125, %124 : vector<8x256xf32>
    %127 = arith.divf %125, %126 : vector<8x256xf32>
    %128 = vector.extract_strided_slice %127 {offsets = [0, 0], sizes = [8, 128], strides = [1, 1]} : vector<8x256xf32> to vector<8x128xf32>
    %129 = vector.extract_strided_slice %127 {offsets = [0, 128], sizes = [8, 128], strides = [1, 1]} : vector<8x256xf32> to vector<8x128xf32>
    %130 = vector.extract_strided_slice %119 {offsets = [0, 256], sizes = [8, 128], strides = [1, 1]} : vector<8x384xf32> to vector<8x128xf32>
    %131 = vector.extract_strided_slice %116 {offsets = [0, 256], sizes = [8, 128], strides = [1, 1]} : vector<8x384xf32> to vector<8x128xf32>
    %132 = arith.addf %131, %17 : vector<8x128xf32>
    %133 = arith.mulf %128, %132 : vector<8x128xf32>
    %134 = arith.addf %130, %133 : vector<8x128xf32>
    %135 = math.tanh %134 : vector<8x128xf32>
    %136 = arith.subf %106, %135 : vector<8x128xf32>
    %137 = arith.mulf %129, %136 : vector<8x128xf32>
    %138 = arith.addf %135, %137 : vector<8x128xf32>
    %c0_54 = arith.constant 0 : index
    %c0_55 = arith.constant 0 : index
    %139 = vector.load %arg11[%c0_54, %c0_55] : memref<8x128xf32, #tpu.memory_space<vmem>>, vector<8x128xf32>
    %140 = arith.truncf %138 : vector<8x128xf32> to vector<8x128xbf16>
    %141 = arith.index_cast %c3_i32 : i32 to index
    %c0_56 = arith.constant 0 : index
    %c0_57 = arith.constant 0 : index
    %142 = vector.load %arg6[%141, %c0_56, %c0_57] : memref<8x128x128xbf16, #tpu.memory_space<vmem>>, vector<1x128x128xbf16>
    %143 = vector.shape_cast %142 : vector<1x128x128xbf16> to vector<128x128xbf16>
    %cst_58 = arith.constant dense<0.000000e+00> : vector<8x128xf32>
    %144 = tpu.matmul %140, %143, %cst_58 {dimension_numbers = #tpu.dot_dimension_numbers<[1], [0], [0], [1], [0, 0, 1, 1], [], []>} : vector<8x128xbf16>, vector<128x128xbf16>, vector<8x128xf32> -> vector<8x128xf32>
    %145 = arith.addf %139, %144 : vector<8x128xf32>
    %c0_59 = arith.constant 0 : index
    %c0_60 = arith.constant 0 : index
    %146 = vector.load %arg11[%c0_59, %c0_60] : memref<8x128xf32, #tpu.memory_space<vmem>>, vector<8x128xf32>
    tpu.vector_store %arg11[%c0_59, %c0_60], %145 {strides = array<i32>} : memref<8x128xf32, #tpu.memory_space<vmem>>, vector<8x128xf32>,
    %c4_i32 = arith.constant 4 : i32
    %147 = arith.truncf %138 : vector<8x128xf32> to vector<8x128xbf16>
    %cst_61 = arith.constant dense<0.000000e+00> : vector<8x384xf32>
    %148 = tpu.matmul %147, %14, %cst_61 {dimension_numbers = #tpu.dot_dimension_numbers<[1], [0], [0], [1], [0, 0, 1, 1], [], []>} : vector<8x128xbf16>, vector<128x384xbf16>, vector<8x384xf32> -> vector<8x384xf32>
    %149 = arith.index_cast %c4_i32 : i32 to index
    %c0_62 = arith.constant 0 : index
    %c0_63 = arith.constant 0 : index
    %150 = vector.load %arg10[%149, %c0_62, %c0_63] : memref<8x8x384xf32, #tpu.memory_space<vmem>>, vector<1x8x384xf32>
    %151 = vector.shape_cast %150 : vector<1x8x384xf32> to vector<8x384xf32>
    %152 = vector.extract_strided_slice %151 {offsets = [0, 0], sizes = [8, 256], strides = [1, 1]} : vector<8x384xf32> to vector<8x256xf32>
    %153 = vector.extract_strided_slice %148 {offsets = [0, 0], sizes = [8, 256], strides = [1, 1]} : vector<8x384xf32> to vector<8x256xf32>
    %154 = arith.addf %152, %153 : vector<8x256xf32>
    %155 = arith.negf %154 : vector<8x256xf32>
    %156 = math.exp %155 : vector<8x256xf32>
    %cst_64 = arith.constant 1.000000e+00 : f32
    %157 = vector.broadcast %cst_64 : f32 to vector<8x256xf32>
    %158 = arith.addf %157, %156 : vector<8x256xf32>
    %159 = arith.divf %157, %158 : vector<8x256xf32>
    %160 = vector.extract_strided_slice %159 {offsets = [0, 0], sizes = [8, 128], strides = [1, 1]} : vector<8x256xf32> to vector<8x128xf32>
    %161 = vector.extract_strided_slice %159 {offsets = [0, 128], sizes = [8, 128], strides = [1, 1]} : vector<8x256xf32> to vector<8x128xf32>
    %162 = vector.extract_strided_slice %151 {offsets = [0, 256], sizes = [8, 128], strides = [1, 1]} : vector<8x384xf32> to vector<8x128xf32>
    %163 = vector.extract_strided_slice %148 {offsets = [0, 256], sizes = [8, 128], strides = [1, 1]} : vector<8x384xf32> to vector<8x128xf32>
    %164 = arith.addf %163, %17 : vector<8x128xf32>
    %165 = arith.mulf %160, %164 : vector<8x128xf32>
    %166 = arith.addf %162, %165 : vector<8x128xf32>
    %167 = math.tanh %166 : vector<8x128xf32>
    %168 = arith.subf %138, %167 : vector<8x128xf32>
    %169 = arith.mulf %161, %168 : vector<8x128xf32>
    %170 = arith.addf %167, %169 : vector<8x128xf32>
    %c0_65 = arith.constant 0 : index
    %c0_66 = arith.constant 0 : index
    %171 = vector.load %arg11[%c0_65, %c0_66] : memref<8x128xf32, #tpu.memory_space<vmem>>, vector<8x128xf32>
    %172 = arith.truncf %170 : vector<8x128xf32> to vector<8x128xbf16>
    %173 = arith.index_cast %c4_i32 : i32 to index
    %c0_67 = arith.constant 0 : index
    %c0_68 = arith.constant 0 : index
    %174 = vector.load %arg6[%173, %c0_67, %c0_68] : memref<8x128x128xbf16, #tpu.memory_space<vmem>>, vector<1x128x128xbf16>
    %175 = vector.shape_cast %174 : vector<1x128x128xbf16> to vector<128x128xbf16>
    %cst_69 = arith.constant dense<0.000000e+00> : vector<8x128xf32>
    %176 = tpu.matmul %172, %175, %cst_69 {dimension_numbers = #tpu.dot_dimension_numbers<[1], [0], [0], [1], [0, 0, 1, 1], [], []>} : vector<8x128xbf16>, vector<128x128xbf16>, vector<8x128xf32> -> vector<8x128xf32>
    %177 = arith.addf %171, %176 : vector<8x128xf32>
    %c0_70 = arith.constant 0 : index
    %c0_71 = arith.constant 0 : index
    %178 = vector.load %arg11[%c0_70, %c0_71] : memref<8x128xf32, #tpu.memory_space<vmem>>, vector<8x128xf32>
    tpu.vector_store %arg11[%c0_70, %c0_71], %177 {strides = array<i32>} : memref<8x128xf32, #tpu.memory_space<vmem>>, vector<8x128xf32>,
    %c5_i32 = arith.constant 5 : i32
    %179 = arith.truncf %170 : vector<8x128xf32> to vector<8x128xbf16>
    %cst_72 = arith.constant dense<0.000000e+00> : vector<8x384xf32>
    %180 = tpu.matmul %179, %14, %cst_72 {dimension_numbers = #tpu.dot_dimension_numbers<[1], [0], [0], [1], [0, 0, 1, 1], [], []>} : vector<8x128xbf16>, vector<128x384xbf16>, vector<8x384xf32> -> vector<8x384xf32>
    %181 = arith.index_cast %c5_i32 : i32 to index
    %c0_73 = arith.constant 0 : index
    %c0_74 = arith.constant 0 : index
    %182 = vector.load %arg10[%181, %c0_73, %c0_74] : memref<8x8x384xf32, #tpu.memory_space<vmem>>, vector<1x8x384xf32>
    %183 = vector.shape_cast %182 : vector<1x8x384xf32> to vector<8x384xf32>
    %184 = vector.extract_strided_slice %183 {offsets = [0, 0], sizes = [8, 256], strides = [1, 1]} : vector<8x384xf32> to vector<8x256xf32>
    %185 = vector.extract_strided_slice %180 {offsets = [0, 0], sizes = [8, 256], strides = [1, 1]} : vector<8x384xf32> to vector<8x256xf32>
    %186 = arith.addf %184, %185 : vector<8x256xf32>
    %187 = arith.negf %186 : vector<8x256xf32>
    %188 = math.exp %187 : vector<8x256xf32>
    %cst_75 = arith.constant 1.000000e+00 : f32
    %189 = vector.broadcast %cst_75 : f32 to vector<8x256xf32>
    %190 = arith.addf %189, %188 : vector<8x256xf32>
    %191 = arith.divf %189, %190 : vector<8x256xf32>
    %192 = vector.extract_strided_slice %191 {offsets = [0, 0], sizes = [8, 128], strides = [1, 1]} : vector<8x256xf32> to vector<8x128xf32>
    %193 = vector.extract_strided_slice %191 {offsets = [0, 128], sizes = [8, 128], strides = [1, 1]} : vector<8x256xf32> to vector<8x128xf32>
    %194 = vector.extract_strided_slice %183 {offsets = [0, 256], sizes = [8, 128], strides = [1, 1]} : vector<8x384xf32> to vector<8x128xf32>
    %195 = vector.extract_strided_slice %180 {offsets = [0, 256], sizes = [8, 128], strides = [1, 1]} : vector<8x384xf32> to vector<8x128xf32>
    %196 = arith.addf %195, %17 : vector<8x128xf32>
    %197 = arith.mulf %192, %196 : vector<8x128xf32>
    %198 = arith.addf %194, %197 : vector<8x128xf32>
    %199 = math.tanh %198 : vector<8x128xf32>
    %200 = arith.subf %170, %199 : vector<8x128xf32>
    %201 = arith.mulf %193, %200 : vector<8x128xf32>
    %202 = arith.addf %199, %201 : vector<8x128xf32>
    %c0_76 = arith.constant 0 : index
    %c0_77 = arith.constant 0 : index
    %203 = vector.load %arg11[%c0_76, %c0_77] : memref<8x128xf32, #tpu.memory_space<vmem>>, vector<8x128xf32>
    %204 = arith.truncf %202 : vector<8x128xf32> to vector<8x128xbf16>
    %205 = arith.index_cast %c5_i32 : i32 to index
    %c0_78 = arith.constant 0 : index
    %c0_79 = arith.constant 0 : index
    %206 = vector.load %arg6[%205, %c0_78, %c0_79] : memref<8x128x128xbf16, #tpu.memory_space<vmem>>, vector<1x128x128xbf16>
    %207 = vector.shape_cast %206 : vector<1x128x128xbf16> to vector<128x128xbf16>
    %cst_80 = arith.constant dense<0.000000e+00> : vector<8x128xf32>
    %208 = tpu.matmul %204, %207, %cst_80 {dimension_numbers = #tpu.dot_dimension_numbers<[1], [0], [0], [1], [0, 0, 1, 1], [], []>} : vector<8x128xbf16>, vector<128x128xbf16>, vector<8x128xf32> -> vector<8x128xf32>
    %209 = arith.addf %203, %208 : vector<8x128xf32>
    %c0_81 = arith.constant 0 : index
    %c0_82 = arith.constant 0 : index
    %210 = vector.load %arg11[%c0_81, %c0_82] : memref<8x128xf32, #tpu.memory_space<vmem>>, vector<8x128xf32>
    tpu.vector_store %arg11[%c0_81, %c0_82], %209 {strides = array<i32>} : memref<8x128xf32, #tpu.memory_space<vmem>>, vector<8x128xf32>,
    %c6_i32 = arith.constant 6 : i32
    %211 = arith.truncf %202 : vector<8x128xf32> to vector<8x128xbf16>
    %cst_83 = arith.constant dense<0.000000e+00> : vector<8x384xf32>
    %212 = tpu.matmul %211, %14, %cst_83 {dimension_numbers = #tpu.dot_dimension_numbers<[1], [0], [0], [1], [0, 0, 1, 1], [], []>} : vector<8x128xbf16>, vector<128x384xbf16>, vector<8x384xf32> -> vector<8x384xf32>
    %213 = arith.index_cast %c6_i32 : i32 to index
    %c0_84 = arith.constant 0 : index
    %c0_85 = arith.constant 0 : index
    %214 = vector.load %arg10[%213, %c0_84, %c0_85] : memref<8x8x384xf32, #tpu.memory_space<vmem>>, vector<1x8x384xf32>
    %215 = vector.shape_cast %214 : vector<1x8x384xf32> to vector<8x384xf32>
    %216 = vector.extract_strided_slice %215 {offsets = [0, 0], sizes = [8, 256], strides = [1, 1]} : vector<8x384xf32> to vector<8x256xf32>
    %217 = vector.extract_strided_slice %212 {offsets = [0, 0], sizes = [8, 256], strides = [1, 1]} : vector<8x384xf32> to vector<8x256xf32>
    %218 = arith.addf %216, %217 : vector<8x256xf32>
    %219 = arith.negf %218 : vector<8x256xf32>
    %220 = math.exp %219 : vector<8x256xf32>
    %cst_86 = arith.constant 1.000000e+00 : f32
    %221 = vector.broadcast %cst_86 : f32 to vector<8x256xf32>
    %222 = arith.addf %221, %220 : vector<8x256xf32>
    %223 = arith.divf %221, %222 : vector<8x256xf32>
    %224 = vector.extract_strided_slice %223 {offsets = [0, 0], sizes = [8, 128], strides = [1, 1]} : vector<8x256xf32> to vector<8x128xf32>
    %225 = vector.extract_strided_slice %223 {offsets = [0, 128], sizes = [8, 128], strides = [1, 1]} : vector<8x256xf32> to vector<8x128xf32>
    %226 = vector.extract_strided_slice %215 {offsets = [0, 256], sizes = [8, 128], strides = [1, 1]} : vector<8x384xf32> to vector<8x128xf32>
    %227 = vector.extract_strided_slice %212 {offsets = [0, 256], sizes = [8, 128], strides = [1, 1]} : vector<8x384xf32> to vector<8x128xf32>
    %228 = arith.addf %227, %17 : vector<8x128xf32>
    %229 = arith.mulf %224, %228 : vector<8x128xf32>
    %230 = arith.addf %226, %229 : vector<8x128xf32>
    %231 = math.tanh %230 : vector<8x128xf32>
    %232 = arith.subf %202, %231 : vector<8x128xf32>
    %233 = arith.mulf %225, %232 : vector<8x128xf32>
    %234 = arith.addf %231, %233 : vector<8x128xf32>
    %c0_87 = arith.constant 0 : index
    %c0_88 = arith.constant 0 : index
    %235 = vector.load %arg11[%c0_87, %c0_88] : memref<8x128xf32, #tpu.memory_space<vmem>>, vector<8x128xf32>
    %236 = arith.truncf %234 : vector<8x128xf32> to vector<8x128xbf16>
    %237 = arith.index_cast %c6_i32 : i32 to index
    %c0_89 = arith.constant 0 : index
    %c0_90 = arith.constant 0 : index
    %238 = vector.load %arg6[%237, %c0_89, %c0_90] : memref<8x128x128xbf16, #tpu.memory_space<vmem>>, vector<1x128x128xbf16>
    %239 = vector.shape_cast %238 : vector<1x128x128xbf16> to vector<128x128xbf16>
    %cst_91 = arith.constant dense<0.000000e+00> : vector<8x128xf32>
    %240 = tpu.matmul %236, %239, %cst_91 {dimension_numbers = #tpu.dot_dimension_numbers<[1], [0], [0], [1], [0, 0, 1, 1], [], []>} : vector<8x128xbf16>, vector<128x128xbf16>, vector<8x128xf32> -> vector<8x128xf32>
    %241 = arith.addf %235, %240 : vector<8x128xf32>
    %c0_92 = arith.constant 0 : index
    %c0_93 = arith.constant 0 : index
    %242 = vector.load %arg11[%c0_92, %c0_93] : memref<8x128xf32, #tpu.memory_space<vmem>>, vector<8x128xf32>
    tpu.vector_store %arg11[%c0_92, %c0_93], %241 {strides = array<i32>} : memref<8x128xf32, #tpu.memory_space<vmem>>, vector<8x128xf32>,
    %c7_i32 = arith.constant 7 : i32
    %243 = arith.truncf %234 : vector<8x128xf32> to vector<8x128xbf16>
    %cst_94 = arith.constant dense<0.000000e+00> : vector<8x384xf32>
    %244 = tpu.matmul %243, %14, %cst_94 {dimension_numbers = #tpu.dot_dimension_numbers<[1], [0], [0], [1], [0, 0, 1, 1], [], []>} : vector<8x128xbf16>, vector<128x384xbf16>, vector<8x384xf32> -> vector<8x384xf32>
    %245 = arith.index_cast %c7_i32 : i32 to index
    %c0_95 = arith.constant 0 : index
    %c0_96 = arith.constant 0 : index
    %246 = vector.load %arg10[%245, %c0_95, %c0_96] : memref<8x8x384xf32, #tpu.memory_space<vmem>>, vector<1x8x384xf32>
    %247 = vector.shape_cast %246 : vector<1x8x384xf32> to vector<8x384xf32>
    %248 = vector.extract_strided_slice %247 {offsets = [0, 0], sizes = [8, 256], strides = [1, 1]} : vector<8x384xf32> to vector<8x256xf32>
    %249 = vector.extract_strided_slice %244 {offsets = [0, 0], sizes = [8, 256], strides = [1, 1]} : vector<8x384xf32> to vector<8x256xf32>
    %250 = arith.addf %248, %249 : vector<8x256xf32>
    %251 = arith.negf %250 : vector<8x256xf32>
    %252 = math.exp %251 : vector<8x256xf32>
    %cst_97 = arith.constant 1.000000e+00 : f32
    %253 = vector.broadcast %cst_97 : f32 to vector<8x256xf32>
    %254 = arith.addf %253, %252 : vector<8x256xf32>
    %255 = arith.divf %253, %254 : vector<8x256xf32>
    %256 = vector.extract_strided_slice %255 {offsets = [0, 0], sizes = [8, 128], strides = [1, 1]} : vector<8x256xf32> to vector<8x128xf32>
    %257 = vector.extract_strided_slice %255 {offsets = [0, 128], sizes = [8, 128], strides = [1, 1]} : vector<8x256xf32> to vector<8x128xf32>
    %258 = vector.extract_strided_slice %247 {offsets = [0, 256], sizes = [8, 128], strides = [1, 1]} : vector<8x384xf32> to vector<8x128xf32>
    %259 = vector.extract_strided_slice %244 {offsets = [0, 256], sizes = [8, 128], strides = [1, 1]} : vector<8x384xf32> to vector<8x128xf32>
    %260 = arith.addf %259, %17 : vector<8x128xf32>
    %261 = arith.mulf %256, %260 : vector<8x128xf32>
    %262 = arith.addf %258, %261 : vector<8x128xf32>
    %263 = math.tanh %262 : vector<8x128xf32>
    %264 = arith.subf %234, %263 : vector<8x128xf32>
    %265 = arith.mulf %257, %264 : vector<8x128xf32>
    %266 = arith.addf %263, %265 : vector<8x128xf32>
    %c0_98 = arith.constant 0 : index
    %c0_99 = arith.constant 0 : index
    %267 = vector.load %arg11[%c0_98, %c0_99] : memref<8x128xf32, #tpu.memory_space<vmem>>, vector<8x128xf32>
    %268 = arith.truncf %266 : vector<8x128xf32> to vector<8x128xbf16>
    %269 = arith.index_cast %c7_i32 : i32 to index
    %c0_100 = arith.constant 0 : index
    %c0_101 = arith.constant 0 : index
    %270 = vector.load %arg6[%269, %c0_100, %c0_101] : memref<8x128x128xbf16, #tpu.memory_space<vmem>>, vector<1x128x128xbf16>
    %271 = vector.shape_cast %270 : vector<1x128x128xbf16> to vector<128x128xbf16>
    %cst_102 = arith.constant dense<0.000000e+00> : vector<8x128xf32>
    %272 = tpu.matmul %268, %271, %cst_102 {dimension_numbers = #tpu.dot_dimension_numbers<[1], [0], [0], [1], [0, 0, 1, 1], [], []>} : vector<8x128xbf16>, vector<128x128xbf16>, vector<8x128xf32> -> vector<8x128xf32>
    %273 = arith.addf %267, %272 : vector<8x128xf32>
    %c0_103 = arith.constant 0 : index
    %c0_104 = arith.constant 0 : index
    %274 = vector.load %arg11[%c0_103, %c0_104] : memref<8x128xf32, #tpu.memory_space<vmem>>, vector<8x128xf32>
    tpu.vector_store %arg11[%c0_103, %c0_104], %273 {strides = array<i32>} : memref<8x128xf32, #tpu.memory_space<vmem>>, vector<8x128xf32>,
    %c8_i32 = arith.constant 8 : i32
    %c0_105 = arith.constant 0 : index
    %c0_106 = arith.constant 0 : index
    %275 = vector.load %arg9[%c0_105, %c0_106] : memref<8x128xf32, #tpu.memory_space<vmem>>, vector<8x128xf32>
    tpu.vector_store %arg9[%c0_105, %c0_106], %266 {strides = array<i32>} : memref<8x128xf32, #tpu.memory_space<vmem>>, vector<8x128xf32>,
    %c0_i32_107 = arith.constant 0 : i32
    %276 = arith.cmpi eq, %arg0, %c0_i32_107 : i32
    %277 = arith.extui %276 : i1 to i32
    %c0_i32_108 = arith.constant 0 : i32
    %278 = arith.cmpi ne, %277, %c0_i32_108 : i32
    scf.if %278 {
      %c0_109 = arith.constant 0 : index
      %c0_110 = arith.constant 0 : index
      %279 = vector.load %arg11[%c0_109, %c0_110] : memref<8x128xf32, #tpu.memory_space<vmem>>, vector<8x128xf32>
      %c0_111 = arith.constant 0 : index
      %c0_112 = arith.constant 0 : index
      %280 = vector.load %arg7[%c0_111, %c0_112] : memref<1x128xf32, #tpu.memory_space<vmem>>, vector<1x128xf32>
      %281 = vector.broadcast %280 : vector<1x128xf32> to vector<8x128xf32>
      %282 = arith.addf %279, %281 : vector<8x128xf32>
      %c0_113 = arith.constant 0 : index
      %c0_114 = arith.constant 0 : index
      %283 = vector.load %arg8[%c0_113, %c0_114] : memref<8x128xf32, #tpu.memory_space<vmem>>, vector<8x128xf32>
      tpu.vector_store %arg8[%c0_113, %c0_114], %282 {strides = array<i32>} : memref<8x128xf32, #tpu.memory_space<vmem>>, vector<8x128xf32>,
    } else {
    }
    return
  }
  func.func @transform_0(%arg0: i32) -> (i32, i32, i32) {
    %c0_i32 = arith.constant 0 : i32
    %c0_i32_0 = arith.constant 0 : i32
    %c0_i32_1 = arith.constant 0 : i32
    return %arg0, %c0_i32, %c0_i32_0 : i32, i32, i32
  }
  func.func @transform_1(%arg0: i32) -> (i32, i32) {
    %c0_i32 = arith.constant 0 : i32
    %c0_i32_0 = arith.constant 0 : i32
    %c0_i32_1 = arith.constant 0 : i32
    return %c0_i32, %c0_i32_0 : i32, i32
  }
  func.func @transform_2(%arg0: i32) -> (i32, i32) {
    %c0_i32 = arith.constant 0 : i32
    %c0_i32_0 = arith.constant 0 : i32
    %c0_i32_1 = arith.constant 0 : i32
    return %c0_i32, %c0_i32_0 : i32, i32
  }
  func.func @transform_3(%arg0: i32) -> (i32, i32) {
    %c0_i32 = arith.constant 0 : i32
    %c0_i32_0 = arith.constant 0 : i32
    %c0_i32_1 = arith.constant 0 : i32
    return %c0_i32, %c0_i32_0 : i32, i32
  }
  func.func @transform_4(%arg0: i32) -> (i32, i32) {
    %c0_i32 = arith.constant 0 : i32
    %c0_i32_0 = arith.constant 0 : i32
    %c0_i32_1 = arith.constant 0 : i32
    return %c0_i32, %c0_i32_0 : i32, i32
  }
  func.func @transform_5(%arg0: i32) -> (i32, i32, i32) {
    %c0_i32 = arith.constant 0 : i32
    %c0_i32_0 = arith.constant 0 : i32
    %c0_i32_1 = arith.constant 0 : i32
    return %arg0, %c0_i32, %c0_i32_0 : i32, i32, i32
  }
  func.func @transform_6(%arg0: i32) -> (i32, i32) {
    %c0_i32 = arith.constant 0 : i32
    %c0_i32_0 = arith.constant 0 : i32
    %c0_i32_1 = arith.constant 0 : i32
    return %c0_i32, %c0_i32_0 : i32, i32
  }
  func.func @transform_7(%arg0: i32) -> (i32, i32) {
    %c0_i32 = arith.constant 0 : i32
    %c0_i32_0 = arith.constant 0 : i32
    %c0_i32_1 = arith.constant 0 : i32
    return %c0_i32, %c0_i32_0 : i32, i32
  }
}

</mosaic_0001>

<llo_original>
// kernel: rnn_gru_forward.2
$region0: #{rnn_gru_forward.2}
  #allocation0 [shape = 'u32[]', space=smem, size = 0x4, offset = 0x4, fixed_abs, tag = 'smem constant byte address 0x4 - core index']
  #allocation1 [shape = 'u32[144,128]{1,0:T(1,128)}', space=vmem, size = 0x12000, scoped, tag = 'internal scratch']
  #allocation2 [shape = 'f32[8,128]{1,0:T(8,128)}', space=vmem, size = 0x1000, scoped, tag = 'scratch operand']
  #allocation3 [shape = 'f32[8,8,384]{2,1,0:T(8,128)}', space=vmem, size = 0x18000, scoped, tag = 'scratch operand']
  #allocation4 [shape = 'f32[8,8,128]{2,1,0:T(8,128)}', space=vmem, size = 0x8000, scoped, tag = 'scratch operand']
  %s0 = inlined_call_operand.vmem [shape: bf16[8,8,128], index: 0, kind: input, shape index: {}]
  %s1 = inlined_call_operand.hbm [shape: bf16[128,384], index: 1, kind: input, shape index: {}]
  %s2 = inlined_call_operand.hbm [shape: bf16[128,384], index: 2, kind: input, shape index: {}]
  %s3 = inlined_call_operand.hbm [shape: f32[1,384], index: 3, kind: input, shape index: {}]
  %s4 = inlined_call_operand.hbm [shape: f32[1,128], index: 4, kind: input, shape index: {}]
  %s5 = inlined_call_operand.vmem [shape: bf16[8,8,128], index: 5, kind: output, shape index: {}]
  %s6 = sld [smem:[#allocation0]]
  $region50: #{rnn_gru_forward.2} parent=0
    _
  %s8 = ssub.s32 1, %s6
  %s9 = scalar_select 0, %s8, %s6
  $region1: #{rnn_gru_forward.2} parent=0
    #allocation5 [shape = 'u8[98304]{0}', space=vmem, size = 0x18000, scoped, tag = 'input window, operand 1, single buffered']
    #allocation6 [shape = 's32[1]{0}', space=sflag, size = 0x4, scoped, tag = 'scoped memory for rnn_gru_forward.2']
    #allocation7 [shape = 'u8[98304]{0}', space=vmem, size = 0x18000, scoped, tag = 'input window, operand 2, single buffered']
    #allocation8 [shape = 's32[1]{0}', space=sflag, size = 0x4, scoped, tag = 'scoped memory for rnn_gru_forward.2']
    #allocation9 [shape = 'u8[1536]{0}', space=vmem, size = 0x800, scoped, tag = 'input window, operand 3, single buffered']
    #allocation10 [shape = 'u8[512]{0}', space=vmem, size = 0x400, scoped, tag = 'input window, operand 4, single buffered']
    #allocation11 [shape = 's32[1]{0}', space=sflag, size = 0x4, scoped, tag = 'scoped memory for rnn_gru_forward.2']
    %10 = vsyncpa [#allocation6], 0
    %11 = vsyncpa [#allocation8], 0
    %12 = vsyncpa [#allocation11], 0
    // Predicated region
    $region2: #{rnn_gru_forward.2} parent=1 // pred_check
      _
    $region3: #{rnn_gru_forward.2} parent=1 // pred_check_branch
      %14 = sbr.rel (0) target = $region5
    $region4: #{rnn_gru_forward.2} parent=1 // pred_region
      _
    $region5: #{rnn_gru_forward.2} parent=1 // pred_fallthru
      _
    // Predicated region
    $region6: #{rnn_gru_forward.2} parent=1 // pred_check
      _
    $region7: #{rnn_gru_forward.2} parent=1 // pred_check_branch
      %16 = sbr.rel (0) target = $region9
    $region8: #{rnn_gru_forward.2} parent=1 // pred_region
      %s18 = ssub.s32 3072, 3072
      %19 = vsyncadd [#allocation6], %s18
      %s20 = sshll.u32 [#allocation5], 4
      %s21 = int_to_ptr.vmem [resolvable:$true] %s20
      %26 = dma.hbm_to_vmem [thread:$0]  %s1, 3072, %s21, [#allocation6], 192, 192, 12
    $region9: #{rnn_gru_forward.2} parent=1 // pred_fallthru
      _
    // Predicated region
    $region10: #{rnn_gru_forward.2} parent=1 // pred_check
      _
    $region11: #{rnn_gru_forward.2} parent=1 // pred_check_branch
      %28 = sbr.rel (0) target = $region13
    $region12: #{rnn_gru_forward.2} parent=1 // pred_region
      %s30 = ssub.s32 3072, 3072
      %31 = vsyncadd [#allocation8], %s30
      %s32 = sshll.u32 [#allocation7], 4
      %s33 = int_to_ptr.vmem [resolvable:$true] %s32
      %38 = dma.hbm_to_vmem [thread:$0]  %s2, 3072, %s33, [#allocation8], 192, 192, 12
    $region13: #{rnn_gru_forward.2} parent=1 // pred_fallthru
      _
    // Predicated region
    $region14: #{rnn_gru_forward.2} parent=1 // pred_check
      _
    $region15: #{rnn_gru_forward.2} parent=1 // pred_check_branch
      %40 = sbr.rel (0) target = $region17
    $region16: #{rnn_gru_forward.2} parent=1 // pred_region
      %s42 = ssub.s32 48, 48
      %43 = vsyncadd [#allocation8], %s42
      %s45 = sshll.u32 [#allocation9], 4
      %s46 = int_to_ptr.vmem [resolvable:$true] %s45
      %48 = dma.hbm_to_vmem [thread:$0]  %s3, 48, %s46, [#allocation8]
    $region17: #{rnn_gru_forward.2} parent=1 // pred_fallthru
      _
    // Predicated region
    $region18: #{rnn_gru_forward.2} parent=1 // pred_check
      _
    $region19: #{rnn_gru_forward.2} parent=1 // pred_check_branch
      %50 = sbr.rel (0) target = $region21
    $region20: #{rnn_gru_forward.2} parent=1 // pred_region
      %s52 = ssub.s32 16, 16
      %53 = vsyncadd [#allocation11], %s52
      %s55 = sshll.u32 [#allocation10], 4
      %s56 = int_to_ptr.vmem [resolvable:$true] %s55
      %58 = dma.hbm_to_vmem [thread:$0]  %s4, 16, %s56, [#allocation11]
    $region21: #{rnn_gru_forward.2} parent=1 // pred_fallthru
      _
    // Predicated region
    $region22: #{rnn_gru_forward.2} parent=1 // pred_check
      _
    $region23: #{rnn_gru_forward.2} parent=1 // pred_check_branch
      %60 = sbr.rel (0) target = $region25
    $region24: #{rnn_gru_forward.2} parent=1 // pred_region
      %61 = dma.done [#allocation6], 3072
    $region25: #{rnn_gru_forward.2} parent=1 // pred_fallthru
      _
    // Predicated region
    $region26: #{rnn_gru_forward.2} parent=1 // pred_check
      _
    $region27: #{rnn_gru_forward.2} parent=1 // pred_check_branch
      %63 = sbr.rel (0) target = $region29
    $region28: #{rnn_gru_forward.2} parent=1 // pred_region
      %64 = dma.done [#allocation8], 3072
    $region29: #{rnn_gru_forward.2} parent=1 // pred_fallthru
      _
    // Predicated region
    $region30: #{rnn_gru_forward.2} parent=1 // pred_check
      _
    $region31: #{rnn_gru_forward.2} parent=1 // pred_check_branch
      %66 = sbr.rel (0) target = $region33
    $region32: #{rnn_gru_forward.2} parent=1 // pred_region
      %67 = dma.done [#allocation8], 48
    $region33: #{rnn_gru_forward.2} parent=1 // pred_fallthru
      _
    // Predicated region
    $region34: #{rnn_gru_forward.2} parent=1 // pred_check
      _
    $region35: #{rnn_gru_forward.2} parent=1 // pred_check_branch
      %69 = sbr.rel (0) target = $region37
    $region36: #{rnn_gru_forward.2} parent=1 // pred_region
      %70 = dma.done [#allocation11], 16
    $region37: #{rnn_gru_forward.2} parent=1 // pred_fallthru
      _
    %p72 = scmp.eq.s32.totalorder 0, 0
    // Predicated region
    $region38: #{rnn_gru_forward.2} parent=1 // pred_check
      %p73 = pneg %p72
    $region39: #{rnn_gru_forward.2} parent=1 // pred_check_branch
      %75 = sbr.rel (%p73) target = $region41
    $region40: #{rnn_gru_forward.2} parent=1 // pred_region
      %76 = vst [vmem:[#allocation2] sm:$0xff] 0.0
    $region41: #{rnn_gru_forward.2} parent=1 // pred_fallthru
      _
    %v77 = vld [vmem:[%s0] sm:$0xf]
    %v78 = vld [vmem:[%s0 + $0x4] sm:$0xf]
    %v79 = vld [vmem:[%s0 + $0x8] sm:$0xf]
    %v80 = vld [vmem:[%s0 + $0xc] sm:$0xf]
    %v81 = vld [vmem:[%s0 + $0x10] sm:$0xf]
    %v82 = vld [vmem:[%s0 + $0x14] sm:$0xf]
    %v83 = vld [vmem:[%s0 + $0x18] sm:$0xf]
    %v84 = vld [vmem:[%s0 + $0x1c] sm:$0xf]
    %v85 = vunpack.c.l.bf16 %v77
    %v86 = vunpack.c.l.bf16 %v78
    %v87 = vunpack.c.l.bf16 %v79
    %v88 = vunpack.c.l.bf16 %v80
    %v89 = vunpack.c.l.bf16 %v81
    %v90 = vunpack.c.l.bf16 %v82
    %v91 = vunpack.c.l.bf16 %v83
    %v92 = vunpack.c.l.bf16 %v84
    %v93 = vpack.c.bf16 %v86, %v85
    %v94 = vpack.c.bf16 %v88, %v87
    %v95 = vpack.c.bf16 %v90, %v89
    %v96 = vpack.c.bf16 %v92, %v91
    %v97 = vld [vmem:[#allocation5] sm:$0xff]
    %v98 = vld [vmem:[#allocation5 + $0x8] sm:$0xf]
    %v99 = vld [vmem:[#allocation5 + $0xc] sm:$0xff]
    %v100 = vld [vmem:[#allocation5 + $0x14] sm:$0xf]
    %v101 = vld [vmem:[#allocation5 + $0x18] sm:$0xff]
    %v102 = vld [vmem:[#allocation5 + $0x20] sm:$0xf]
    %v103 = vld [vmem:[#allocation5 + $0x24] sm:$0xff]
    %v104 = vld [vmem:[#allocation5 + $0x2c] sm:$0xf]
    %v105 = vld [vmem:[#allocation5 + $0x30] sm:$0xff]
    %v106 = vld [vmem:[#allocation5 + $0x38] sm:$0xf]
    %v107 = vld [vmem:[#allocation5 + $0x3c] sm:$0xff]
    %v108 = vld [vmem:[#allocation5 + $0x44] sm:$0xf]
    %v109 = vld [vmem:[#allocation5 + $0x48] sm:$0xff]
    %v110 = vld [vmem:[#allocation5 + $0x50] sm:$0xf]
    %v111 = vld [vmem:[#allocation5 + $0x54] sm:$0xff]
    %v112 = vld [vmem:[#allocation5 + $0x5c] sm:$0xf]
    %v113 = vld [vmem:[#allocation5 + $0x60] sm:$0xff]
    %v114 = vld [vmem:[#allocation5 + $0x68] sm:$0xf]
    %v115 = vld [vmem:[#allocation5 + $0x6c] sm:$0xff]
    %v116 = vld [vmem:[#allocation5 + $0x74] sm:$0xf]
    %v117 = vld [vmem:[#allocation5 + $0x78] sm:$0xff]
    %v118 = vld [vmem:[#allocation5 + $0x80] sm:$0xf]
    %v119 = vld [vmem:[#allocation5 + $0x84] sm:$0xff]
    %v120 = vld [vmem:[#allocation5 + $0x8c] sm:$0xf]
    %v121 = vld [vmem:[#allocation5 + $0x90] sm:$0xff]
    %v122 = vld [vmem:[#allocation5 + $0x98] sm:$0xf]
    %v123 = vld [vmem:[#allocation5 + $0x9c] sm:$0xff]
    %v124 = vld [vmem:[#allocation5 + $0xa4] sm:$0xf]
    %v125 = vld [vmem:[#allocation5 + $0xa8] sm:$0xff]
    %v126 = vld [vmem:[#allocation5 + $0xb0] sm:$0xf]
    %v127 = vld [vmem:[#allocation5 + $0xb4] sm:$0xff]
    %v128 = vld [vmem:[#allocation5 + $0xbc] sm:$0xf]
    %v129 = vld [vmem:[#allocation9] sm:$0x7]
    %v131 = vlaneseq
    %v132 = vshrl.u32 %v131, 7
    %v133 = vsub.s32 0, %v132
    %v134 = vrot.slane %v129, %v133
    %v135 = vlaneseq
    %v136 = vshrl.u32 %v135, 7
    %v137 = vsub.s32 1, %v136
    %v138 = vrot.slane %v129, %v137
    %v139 = vlaneseq
    %v140 = vshrl.u32 %v139, 7
    %v141 = vsub.s32 2, %v140
    %v142 = vrot.slane %v129, %v141
    %v178 = vunpack.c.l.b16 %v97
    %v179 = vunpack.c.h.b16 %v97
    %v180 = vunpack.c.l.b16 %v98
    %v181 = vunpack.c.l.b16 %v99
    %v182 = vunpack.c.h.b16 %v99
    %v183 = vunpack.c.l.b16 %v100
    %v184 = vunpack.c.l.b16 %v101
    %v185 = vunpack.c.h.b16 %v101
    %v186 = vunpack.c.l.b16 %v102
    %v187 = vunpack.c.l.b16 %v103
    %v188 = vunpack.c.h.b16 %v103
    %v189 = vunpack.c.l.b16 %v104
    %v190 = vunpack.c.l.b16 %v105
    %v191 = vunpack.c.h.b16 %v105
    %v192 = vunpack.c.l.b16 %v106
    %v193 = vunpack.c.l.b16 %v107
    %v194 = vunpack.c.h.b16 %v107
    %v195 = vunpack.c.l.b16 %v108
    %v196 = vunpack.c.l.b16 %v109
    %v197 = vunpack.c.h.b16 %v109
    %v198 = vunpack.c.l.b16 %v110
    %v199 = vunpack.c.l.b16 %v111
    %v200 = vunpack.c.h.b16 %v111
    %v201 = vunpack.c.l.b16 %v112
    %v202 = vunpack.c.l.b16 %v113
    %v203 = vunpack.c.h.b16 %v113
    %v204 = vunpack.c.l.b16 %v114
    %v205 = vunpack.c.l.b16 %v115
    %v206 = vunpack.c.h.b16 %v115
    %v207 = vunpack.c.l.b16 %v116
    %v208 = vunpack.c.l.b16 %v117
    %v209 = vunpack.c.h.b16 %v117
    %v210 = vunpack.c.l.b16 %v118
    %v211 = vunpack.c.l.b16 %v119
    %v212 = vunpack.c.h.b16 %v119
    %v213 = vunpack.c.l.b16 %v120
    %v214 = vunpack.c.l.b16 %v121
    %v215 = vunpack.c.h.b16 %v121
    %v216 = vunpack.c.l.b16 %v122
    %v217 = vunpack.c.l.b16 %v123
    %v218 = vunpack.c.h.b16 %v123
    %v219 = vunpack.c.l.b16 %v124
    %v220 = vunpack.c.l.b16 %v125
    %v221 = vunpack.c.h.b16 %v125
    %v222 = vunpack.c.l.b16 %v126
    %v223 = vunpack.c.l.b16 %v127
    %v224 = vunpack.c.h.b16 %v127
    %v225 = vunpack.c.l.b16 %v128
    %v226 = vpack.c.b16 %v181, %v178
    %v227 = vpack.c.b16 %v182, %v179
    %v228 = vpack.c.b16 %v183, %v180
    %v229 = vpack.c.b16 %v187, %v184
    %v230 = vpack.c.b16 %v188, %v185
    %v231 = vpack.c.b16 %v189, %v186
    %v232 = vpack.c.b16 %v193, %v190
    %v233 = vpack.c.b16 %v194, %v191
    %v234 = vpack.c.b16 %v195, %v192
    %v235 = vpack.c.b16 %v199, %v196
    %v236 = vpack.c.b16 %v200, %v197
    %v237 = vpack.c.b16 %v201, %v198
    %v238 = vpack.c.b16 %v205, %v202
    %v239 = vpack.c.b16 %v206, %v203
    %v240 = vpack.c.b16 %v207, %v204
    %v241 = vpack.c.b16 %v211, %v208
    %v242 = vpack.c.b16 %v212, %v209
    %v243 = vpack.c.b16 %v213, %v210
    %v244 = vpack.c.b16 %v217, %v214
    %v245 = vpack.c.b16 %v218, %v215
    %v246 = vpack.c.b16 %v219, %v216
    %v247 = vpack.c.b16 %v223, %v220
    %v248 = vpack.c.b16 %v224, %v221
    %v249 = vpack.c.b16 %v225, %v222
    %274 = vmatprep.subr.bf16.mxu0 %v248
    %275 = vmatpush1.bf16.msra.mxu0 %v247
    %276 = vmatprep.subr.bf16.mxu0 %v245
    %277 = vmatpush1.bf16.msra.mxu0 %v244
    %278 = vmatprep.subr.bf16.mxu0 %v242
    %279 = vmatpush1.bf16.msra.mxu0 %v241
    %280 = vmatprep.subr.bf16.mxu0 %v239
    %281 = vmatpush1.bf16.msra.mxu0 %v238
    %282 = vmatprep.subr.bf16.mxu0 %v236
    %283 = vmatpush1.bf16.msra.mxu0 %v235
    %284 = vmatprep.subr.bf16.mxu0 %v233
    %285 = vmatpush1.bf16.msra.mxu0 %v232
    %286 = vmatprep.subr.bf16.mxu0 %v230
    %287 = vmatpush1.bf16.msra.mxu0 %v229
    %288 = vmatprep.subr.bf16.mxu0 %v227
    %289 = vmatpush1.bf16.msra.mxu0 %v226
    %290 = vmatprep.subr.bf16.mxu0 0
    %291 = vmatpush2.bf16.msra.mxu0 0
    %292 = vmatprep.subr.bf16.mxu0 0
    %293 = vmatpush2.bf16.msra.mxu0 0
    %294 = vmatprep.subr.bf16.mxu0 0
    %295 = vmatpush2.bf16.msra.mxu0 0
    %296 = vmatprep.subr.bf16.mxu0 0
    %297 = vmatpush2.bf16.msra.mxu0 0
    %298 = vmatprep.subr.bf16.mxu0 0
    %299 = vmatpush2.bf16.msra.mxu0 0
    %300 = vmatprep.subr.bf16.mxu0 0
    %301 = vmatpush2.bf16.msra.mxu0 0
    %302 = vmatprep.subr.bf16.mxu0 0
    %303 = vmatpush2.bf16.msra.mxu0 0
    %304 = vmatprep.subr.bf16.mxu0 0
    %305 = vmatpush2.bf16.msra.mxu0 0
    %306 = vmatprep.mubr.bf16.mxu0 0
    %307 = vmatmul.mubr.bf16.gmra.mxu0 %v93
    %v308 = vpop.f32.mrf.mxu0
    %v309 = vadd.f32 %v134, %v308
    %v310 = vpop.f32.mrf.mxu0
    %v311 = vadd.f32 %v138, %v310
    %v312 = vpop.f32.mrf.mxu0
    %v313 = vadd.f32 %v134, %v312
    %v314 = vpop.f32.mrf.mxu0
    %v315 = vadd.f32 %v138, %v314
    %316 = vmatprep.mubr.bf16.mxu0 0
    %317 = vmatmul.mubr.bf16.gmra.mxu0 %v94
    %v318 = vpop.f32.mrf.mxu0
    %v319 = vadd.f32 %v134, %v318
    %v320 = vpop.f32.mrf.mxu0
    %v321 = vadd.f32 %v138, %v320
    %v322 = vpop.f32.mrf.mxu0
    %v323 = vadd.f32 %v134, %v322
    %v324 = vpop.f32.mrf.mxu0
    %v325 = vadd.f32 %v138, %v324
    %326 = vmatprep.mubr.bf16.mxu0 0
    %327 = vmatmul.mubr.bf16.gmra.mxu0 %v95
    %v328 = vpop.f32.mrf.mxu0
    %v329 = vadd.f32 %v134, %v328
    %v330 = vpop.f32.mrf.mxu0
    %v331 = vadd.f32 %v138, %v330
    %v332 = vpop.f32.mrf.mxu0
    %v333 = vadd.f32 %v134, %v332
    %v334 = vpop.f32.mrf.mxu0
    %v335 = vadd.f32 %v138, %v334
    %336 = vmatprep.mubr.bf16.mxu0 0
    %337 = vmatmul.mubr.bf16.gmra.mxu0 %v96
    %v338 = vpop.f32.mrf.mxu0
    %v339 = vadd.f32 %v134, %v338
    %v340 = vpop.f32.mrf.mxu0
    %v341 = vadd.f32 %v138, %v340
    %v342 = vpop.f32.mrf.mxu0
    %v343 = vadd.f32 %v134, %v342
    %v344 = vpop.f32.mrf.mxu0
    %v345 = vadd.f32 %v138, %v344
    %346 = vdwg.mxu0
    %347 = vmatprep.subr.bf16.mxu0 0
    %348 = vmatpush1.bf16.msra.mxu0 %v249
    %349 = vmatprep.subr.bf16.mxu0 0
    %350 = vmatpush1.bf16.msra.mxu0 %v246
    %351 = vmatprep.subr.bf16.mxu0 0
    %352 = vmatpush1.bf16.msra.mxu0 %v243
    %353 = vmatprep.subr.bf16.mxu0 0
    %354 = vmatpush1.bf16.msra.mxu0 %v240
    %355 = vmatprep.subr.bf16.mxu0 0
    %356 = vmatpush1.bf16.msra.mxu0 %v237
    %357 = vmatprep.subr.bf16.mxu0 0
    %358 = vmatpush1.bf16.msra.mxu0 %v234
    %359 = vmatprep.subr.bf16.mxu0 0
    %360 = vmatpush1.bf16.msra.mxu0 %v231
    %361 = vmatprep.subr.bf16.mxu0 0
    %362 = vmatpush1.bf16.msra.mxu0 %v228
    %363 = vmatprep.subr.bf16.mxu0 0
    %364 = vmatpush2.bf16.msra.mxu0 0
    %365 = vmatprep.subr.bf16.mxu0 0
    %366 = vmatpush2.bf16.msra.mxu0 0
    %367 = vmatprep.subr.bf16.mxu0 0
    %368 = vmatpush2.bf16.msra.mxu0 0
    %369 = vmatprep.subr.bf16.mxu0 0
    %370 = vmatpush2.bf16.msra.mxu0 0
    %371 = vmatprep.subr.bf16.mxu0 0
    %372 = vmatpush2.bf16.msra.mxu0 0
    %373 = vmatprep.subr.bf16.mxu0 0
    %374 = vmatpush2.bf16.msra.mxu0 0
    %375 = vmatprep.subr.bf16.mxu0 0
    %376 = vmatpush2.bf16.msra.mxu0 0
    %377 = vmatprep.subr.bf16.mxu0 0
    %378 = vmatpush2.bf16.msra.mxu0 0
    %379 = vmatprep.mubr.bf16.mxu0 0
    %380 = vmatmul.mubr.bf16.gmra.mxu0 %v93
    %v381 = vpop.f32.mrf.mxu0
    %v382 = vadd.f32 %v142, %v381
    %v383 = vpop.f32.mrf.mxu0
    %v384 = vpop.f32.mrf.mxu0
    %v385 = vadd.f32 %v142, %v384
    %v386 = vpop.f32.mrf.mxu0
    %387 = vmatprep.mubr.bf16.mxu0 0
    %388 = vmatmul.mubr.bf16.gmra.mxu0 %v94
    %v389 = vpop.f32.mrf.mxu0
    %v390 = vadd.f32 %v142, %v389
    %v391 = vpop.f32.mrf.mxu0
    %v392 = vpop.f32.mrf.mxu0
    %v393 = vadd.f32 %v142, %v392
    %v394 = vpop.f32.mrf.mxu0
    %395 = vmatprep.mubr.bf16.mxu0 0
    %396 = vmatmul.mubr.bf16.gmra.mxu0 %v95
    %v397 = vpop.f32.mrf.mxu0
    %v398 = vadd.f32 %v142, %v397
    %v399 = vpop.f32.mrf.mxu0
    %v400 = vpop.f32.mrf.mxu0
    %v401 = vadd.f32 %v142, %v400
    %v402 = vpop.f32.mrf.mxu0
    %403 = vmatprep.mubr.bf16.mxu0 0
    %404 = vmatmul.mubr.bf16.gmra.mxu0 %v96
    %v405 = vpop.f32.mrf.mxu0
    %v406 = vadd.f32 %v142, %v405
    %v407 = vpop.f32.mrf.mxu0
    %v408 = vpop.f32.mrf.mxu0
    %v409 = vadd.f32 %v142, %v408
    %v410 = vpop.f32.mrf.mxu0
    %411 = vdwg.mxu0
    %412 = vst [vmem:[#allocation3] sm:$0xff] %v309
    %413 = vst [vmem:[#allocation3 + $0x8] sm:$0xff] %v311
    %414 = vst [vmem:[#allocation3 + $0x10] sm:$0xff] %v382
    %415 = vst [vmem:[#allocation3 + $0x18] sm:$0xff] %v313
    %416 = vst [vmem:[#allocation3 + $0x20] sm:$0xff] %v315
    %417 = vst [vmem:[#allocation3 + $0x28] sm:$0xff] %v385
    %418 = vst [vmem:[#allocation3 + $0x30] sm:$0xff] %v319
    %419 = vst [vmem:[#allocation3 + $0x38] sm:$0xff] %v321
    %420 = vst [vmem:[#allocation3 + $0x40] sm:$0xff] %v390
    %421 = vst [vmem:[#allocation3 + $0x48] sm:$0xff] %v323
    %422 = vst [vmem:[#allocation3 + $0x50] sm:$0xff] %v325
    %423 = vst [vmem:[#allocation3 + $0x58] sm:$0xff] %v393
    %424 = vst [vmem:[#allocation3 + $0x60] sm:$0xff] %v329
    %425 = vst [vmem:[#allocation3 + $0x68] sm:$0xff] %v331
    %426 = vst [vmem:[#allocation3 + $0x70] sm:$0xff] %v398
    %427 = vst [vmem:[#allocation3 + $0x78] sm:$0xff] %v333
    %428 = vst [vmem:[#allocation3 + $0x80] sm:$0xff] %v335
    %429 = vst [vmem:[#allocation3 + $0x88] sm:$0xff] %v401
    %430 = vst [vmem:[#allocation3 + $0x90] sm:$0xff] %v339
    %431 = vst [vmem:[#allocation3 + $0x98] sm:$0xff] %v341
    %432 = vst [vmem:[#allocation3 + $0xa0] sm:$0xff] %v406
    %433 = vst [vmem:[#allocation3 + $0xa8] sm:$0xff] %v343
    %434 = vst [vmem:[#allocation3 + $0xb0] sm:$0xff] %v345
    %435 = vst [vmem:[#allocation3 + $0xb8] sm:$0xff] %v409
    %v436 = vld [vmem:[#allocation7] sm:$0xff]
    %v437 = vld [vmem:[#allocation7 + $0x8] sm:$0xf]
    %v438 = vld [vmem:[#allocation7 + $0xc] sm:$0xff]
    %v439 = vld [vmem:[#allocation7 + $0x14] sm:$0xf]
    %v440 = vld [vmem:[#allocation7 + $0x18] sm:$0xff]
    %v441 = vld [vmem:[#allocation7 + $0x20] sm:$0xf]
    %v442 = vld [vmem:[#allocation7 + $0x24] sm:$0xff]
    %v443 = vld [vmem:[#allocation7 + $0x2c] sm:$0xf]
    %v444 = vld [vmem:[#allocation7 + $0x30] sm:$0xff]
    %v445 = vld [vmem:[#allocation7 + $0x38] sm:$0xf]
    %v446 = vld [vmem:[#allocation7 + $0x3c] sm:$0xff]
    %v447 = vld [vmem:[#allocation7 + $0x44] sm:$0xf]
    %v448 = vld [vmem:[#allocation7 + $0x48] sm:$0xff]
    %v449 = vld [vmem:[#allocation7 + $0x50] sm:$0xf]
    %v450 = vld [vmem:[#allocation7 + $0x54] sm:$0xff]
    %v451 = vld [vmem:[#allocation7 + $0x5c] sm:$0xf]
    %v452 = vld [vmem:[#allocation7 + $0x60] sm:$0xff]
    %v453 = vld [vmem:[#allocation7 + $0x68] sm:$0xf]
    %v454 = vld [vmem:[#allocation7 + $0x6c] sm:$0xff]
    %v455 = vld [vmem:[#allocation7 + $0x74] sm:$0xf]
    %v456 = vld [vmem:[#allocation7 + $0x78] sm:$0xff]
    %v457 = vld [vmem:[#allocation7 + $0x80] sm:$0xf]
    %v458 = vld [vmem:[#allocation7 + $0x84] sm:$0xff]
    %v459 = vld [vmem:[#allocation7 + $0x8c] sm:$0xf]
    %v460 = vld [vmem:[#allocation7 + $0x90] sm:$0xff]
    %v461 = vld [vmem:[#allocation7 + $0x98] sm:$0xf]
    %v462 = vld [vmem:[#allocation7 + $0x9c] sm:$0xff]
    %v463 = vld [vmem:[#allocation7 + $0xa4] sm:$0xf]
    %v464 = vld [vmem:[#allocation7 + $0xa8] sm:$0xff]
    %v465 = vld [vmem:[#allocation7 + $0xb0] sm:$0xf]
    %v466 = vld [vmem:[#allocation7 + $0xb4] sm:$0xff]
    %v467 = vld [vmem:[#allocation7 + $0xbc] sm:$0xf]
    %v468 = vld [vmem:[#allocation10] sm:$0x1]
    %v470 = vlaneseq
    %v471 = vshrl.u32 %v470, 7
    %v472 = vsub.s32 0, %v471
    %v473 = vrot.slane %v468, %v472
    %v475 = vld [vmem:[#allocation2] sm:$0xff]
    %v476 = vpack.c.bf16 %v475, %v475
    %v509 = vunpack.c.l.b16 %v436
    %v510 = vunpack.c.h.b16 %v436
    %v511 = vunpack.c.l.b16 %v437
    %v512 = vunpack.c.l.b16 %v438
    %v513 = vunpack.c.h.b16 %v438
    %v514 = vunpack.c.l.b16 %v439
    %v515 = vunpack.c.l.b16 %v440
    %v516 = vunpack.c.h.b16 %v440
    %v517 = vunpack.c.l.b16 %v441
    %v518 = vunpack.c.l.b16 %v442
    %v519 = vunpack.c.h.b16 %v442
    %v520 = vunpack.c.l.b16 %v443
    %v521 = vunpack.c.l.b16 %v444
    %v522 = vunpack.c.h.b16 %v444
    %v523 = vunpack.c.l.b16 %v445
    %v524 = vunpack.c.l.b16 %v446
    %v525 = vunpack.c.h.b16 %v446
    %v526 = vunpack.c.l.b16 %v447
    %v527 = vunpack.c.l.b16 %v448
    %v528 = vunpack.c.h.b16 %v448
    %v529 = vunpack.c.l.b16 %v449
    %v530 = vunpack.c.l.b16 %v450
    %v531 = vunpack.c.h.b16 %v450
    %v532 = vunpack.c.l.b16 %v451
    %v533 = vunpack.c.l.b16 %v452
    %v534 = vunpack.c.h.b16 %v452
    %v535 = vunpack.c.l.b16 %v453
    %v536 = vunpack.c.l.b16 %v454
    %v537 = vunpack.c.h.b16 %v454
    %v538 = vunpack.c.l.b16 %v455
    %v539 = vunpack.c.l.b16 %v456
    %v540 = vunpack.c.h.b16 %v456
    %v541 = vunpack.c.l.b16 %v457
    %v542 = vunpack.c.l.b16 %v458
    %v543 = vunpack.c.h.b16 %v458
    %v544 = vunpack.c.l.b16 %v459
    %v545 = vunpack.c.l.b16 %v460
    %v546 = vunpack.c.h.b16 %v460
    %v547 = vunpack.c.l.b16 %v461
    %v548 = vunpack.c.l.b16 %v462
    %v549 = vunpack.c.h.b16 %v462
    %v550 = vunpack.c.l.b16 %v463
    %v551 = vunpack.c.l.b16 %v464
    %v552 = vunpack.c.h.b16 %v464
    %v553 = vunpack.c.l.b16 %v465
    %v554 = vunpack.c.l.b16 %v466
    %v555 = vunpack.c.h.b16 %v466
    %v556 = vunpack.c.l.b16 %v467
    %v557 = vpack.c.b16 %v512, %v509
    %v558 = vpack.c.b16 %v513, %v510
    %v559 = vpack.c.b16 %v514, %v511
    %v560 = vpack.c.b16 %v518, %v515
    %v561 = vpack.c.b16 %v519, %v516
    %v562 = vpack.c.b16 %v520, %v517
    %v563 = vpack.c.b16 %v524, %v521
    %v564 = vpack.c.b16 %v525, %v522
    %v565 = vpack.c.b16 %v526, %v523
    %v566 = vpack.c.b16 %v530, %v527
    %v567 = vpack.c.b16 %v531, %v528
    %v568 = vpack.c.b16 %v532, %v529
    %v569 = vpack.c.b16 %v536, %v533
    %v570 = vpack.c.b16 %v537, %v534
    %v571 = vpack.c.b16 %v538, %v535
    %v572 = vpack.c.b16 %v542, %v539
    %v573 = vpack.c.b16 %v543, %v540
    %v574 = vpack.c.b16 %v544, %v541
    %v575 = vpack.c.b16 %v548, %v545
    %v576 = vpack.c.b16 %v549, %v546
    %v577 = vpack.c.b16 %v550, %v547
    %v578 = vpack.c.b16 %v554, %v551
    %v579 = vpack.c.b16 %v555, %v552
    %v580 = vpack.c.b16 %v556, %v553
    %605 = vmatprep.subr.bf16.mxu0 %v579
    %606 = vmatpush1.bf16.msra.mxu0 %v578
    %607 = vmatprep.subr.bf16.mxu0 %v576
    %608 = vmatpush1.bf16.msra.mxu0 %v575
    %609 = vmatprep.subr.bf16.mxu0 %v573
    %610 = vmatpush1.bf16.msra.mxu0 %v572
    %611 = vmatprep.subr.bf16.mxu0 %v570
    %612 = vmatpush1.bf16.msra.mxu0 %v569
    %613 = vmatprep.subr.bf16.mxu0 %v567
    %614 = vmatpush1.bf16.msra.mxu0 %v566
    %615 = vmatprep.subr.bf16.mxu0 %v564
    %616 = vmatpush1.bf16.msra.mxu0 %v563
    %617 = vmatprep.subr.bf16.mxu0 %v561
    %618 = vmatpush1.bf16.msra.mxu0 %v560
    %619 = vmatprep.subr.bf16.mxu0 %v558
    %620 = vmatpush1.bf16.msra.mxu0 %v557
    %621 = vmatprep.subr.bf16.mxu0 0
    %622 = vmatpush2.bf16.msra.mxu0 0
    %623 = vmatprep.subr.bf16.mxu0 0
    %624 = vmatpush2.bf16.msra.mxu0 0
    %625 = vmatprep.subr.bf16.mxu0 0
    %626 = vmatpush2.bf16.msra.mxu0 0
    %627 = vmatprep.subr.bf16.mxu0 0
    %628 = vmatpush2.bf16.msra.mxu0 0
    %629 = vmatprep.subr.bf16.mxu0 0
    %630 = vmatpush2.bf16.msra.mxu0 0
    %631 = vmatprep.subr.bf16.mxu0 0
    %632 = vmatpush2.bf16.msra.mxu0 0
    %633 = vmatprep.subr.bf16.mxu0 0
    %634 = vmatpush2.bf16.msra.mxu0 0
    %635 = vmatprep.subr.bf16.mxu0 0
    %636 = vmatpush2.bf16.msra.mxu0 0
    %637 = vmatprep.mubr.bf16.mxu0 0
    %638 = vmatmul.mubr.bf16.gmra.mxu0 %v476
    %v639 = vpop.f32.mrf.mxu0
    %v640 = vadd.f32 0.0, %v639
    %v641 = vpop.f32.mrf.mxu0
    %v642 = vadd.f32 0.0, %v641
    %v643 = vpop.f32.mrf.mxu0
    %v644 = vpop.f32.mrf.mxu0
    %645 = vdwg.mxu0
    %646 = vmatprep.subr.bf16.mxu0 0
    %647 = vmatpush1.bf16.msra.mxu0 %v580
    %648 = vmatprep.subr.bf16.mxu0 0
    %649 = vmatpush1.bf16.msra.mxu0 %v577
    %650 = vmatprep.subr.bf16.mxu0 0
    %651 = vmatpush1.bf16.msra.mxu0 %v574
    %652 = vmatprep.subr.bf16.mxu0 0
    %653 = vmatpush1.bf16.msra.mxu0 %v571
    %654 = vmatprep.subr.bf16.mxu0 0
    %655 = vmatpush1.bf16.msra.mxu0 %v568
    %656 = vmatprep.subr.bf16.mxu0 0
    %657 = vmatpush1.bf16.msra.mxu0 %v565
    %658 = vmatprep.subr.bf16.mxu0 0
    %659 = vmatpush1.bf16.msra.mxu0 %v562
    %660 = vmatprep.subr.bf16.mxu0 0
    %661 = vmatpush1.bf16.msra.mxu0 %v559
    %662 = vmatprep.subr.bf16.mxu0 0
    %663 = vmatpush2.bf16.msra.mxu0 0
    %664 = vmatprep.subr.bf16.mxu0 0
    %665 = vmatpush2.bf16.msra.mxu0 0
    %666 = vmatprep.subr.bf16.mxu0 0
    %667 = vmatpush2.bf16.msra.mxu0 0
    %668 = vmatprep.subr.bf16.mxu0 0
    %669 = vmatpush2.bf16.msra.mxu0 0
    %670 = vmatprep.subr.bf16.mxu0 0
    %671 = vmatpush2.bf16.msra.mxu0 0
    %672 = vmatprep.subr.bf16.mxu0 0
    %673 = vmatpush2.bf16.msra.mxu0 0
    %674 = vmatprep.subr.bf16.mxu0 0
    %675 = vmatpush2.bf16.msra.mxu0 0
    %676 = vmatprep.subr.bf16.mxu0 0
    %677 = vmatpush2.bf16.msra.mxu0 0
    %678 = vmatprep.mubr.bf16.mxu0 0
    %679 = vmatmul.mubr.bf16.gmra.mxu0 %v476
    %v680 = vpop.f32.mrf.mxu0
    %v681 = vadd.f32 0.0, %v680
    %v682 = vpop.f32.mrf.mxu0
    %v683 = vpop.f32.mrf.mxu0
    %v684 = vpop.f32.mrf.mxu0
    %685 = vdwg.mxu0
    %v686 = vld [vmem:[#allocation3] sm:$0xff]
    %v687 = vld [vmem:[#allocation3 + $0x8] sm:$0xff]
    %v688 = vld [vmem:[#allocation3 + $0x10] sm:$0xff]
    %v689 = vadd.f32 %v686, %v640
    %v690 = vadd.f32 %v687, %v642
    %v691 = vxor.u32 %v689, 2147483648
    %v692 = vxor.u32 %v690, 2147483648
    %v693 = vmul.f32 %v691, 1.442695
    %v694 = vpow.pop %v693
    %v695 = vmul.f32 %v692, 1.442695
    %v696 = vpow.pop %v695
    %v697 = vadd.f32 %v694, 1.0
    %v698 = vadd.f32 %v696, 1.0
    %v699 = vrcp.pop %v697
    %v700 = vmul.f32 1.0, %v699
    %v701 = vrcp.pop %v698
    %v702 = vmul.f32 1.0, %v701
    %v703 = vadd.f32 %v681, %v473
    %v704 = vmul.f32 %v700, %v703
    %v705 = vadd.f32 %v688, %v704
    %v706 = vtanh.pop %v705
    %v707 = vsub.f32 %v475, %v706
    %v708 = vmul.f32 %v702, %v707
    %v709 = vadd.f32 %v706, %v708
    %710 = vst [vmem:[#allocation4] sm:$0xff] %v709
    %v711 = vpack.c.bf16 %v709, %v709
    %712 = vmatprep.subr.bf16.mxu0 %v579
    %713 = vmatpush1.bf16.msra.mxu0 %v578
    %714 = vmatprep.subr.bf16.mxu0 %v576
    %715 = vmatpush1.bf16.msra.mxu0 %v575
    %716 = vmatprep.subr.bf16.mxu0 %v573
    %717 = vmatpush1.bf16.msra.mxu0 %v572
    %718 = vmatprep.subr.bf16.mxu0 %v570
    %719 = vmatpush1.bf16.msra.mxu0 %v569
    %720 = vmatprep.subr.bf16.mxu0 %v567
    %721 = vmatpush1.bf16.msra.mxu0 %v566
    %722 = vmatprep.subr.bf16.mxu0 %v564
    %723 = vmatpush1.bf16.msra.mxu0 %v563
    %724 = vmatprep.subr.bf16.mxu0 %v561
    %725 = vmatpush1.bf16.msra.mxu0 %v560
    %726 = vmatprep.subr.bf16.mxu0 %v558
    %727 = vmatpush1.bf16.msra.mxu0 %v557
    %728 = vmatprep.subr.bf16.mxu0 0
    %729 = vmatpush2.bf16.msra.mxu0 0
    %730 = vmatprep.subr.bf16.mxu0 0
    %731 = vmatpush2.bf16.msra.mxu0 0
    %732 = vmatprep.subr.bf16.mxu0 0
    %733 = vmatpush2.bf16.msra.mxu0 0
    %734 = vmatprep.subr.bf16.mxu0 0
    %735 = vmatpush2.bf16.msra.mxu0 0
    %736 = vmatprep.subr.bf16.mxu0 0
    %737 = vmatpush2.bf16.msra.mxu0 0
    %738 = vmatprep.subr.bf16.mxu0 0
    %739 = vmatpush2.bf16.msra.mxu0 0
    %740 = vmatprep.subr.bf16.mxu0 0
    %741 = vmatpush2.bf16.msra.mxu0 0
    %742 = vmatprep.subr.bf16.mxu0 0
    %743 = vmatpush2.bf16.msra.mxu0 0
    %744 = vmatprep.mubr.bf16.mxu0 0
    %745 = vmatmul.mubr.bf16.gmra.mxu0 %v711
    %v746 = vpop.f32.mrf.mxu0
    %v747 = vadd.f32 0.0, %v746
    %v748 = vpop.f32.mrf.mxu0
    %v749 = vadd.f32 0.0, %v748
    %v750 = vpop.f32.mrf.mxu0
    %v751 = vpop.f32.mrf.mxu0
    %752 = vdwg.mxu0
    %753 = vmatprep.subr.bf16.mxu0 0
    %754 = vmatpush1.bf16.msra.mxu0 %v580
    %755 = vmatprep.subr.bf16.mxu0 0
    %756 = vmatpush1.bf16.msra.mxu0 %v577
    %757 = vmatprep.subr.bf16.mxu0 0
    %758 = vmatpush1.bf16.msra.mxu0 %v574
    %759 = vmatprep.subr.bf16.mxu0 0
    %760 = vmatpush1.bf16.msra.mxu0 %v571
    %761 = vmatprep.subr.bf16.mxu0 0
    %762 = vmatpush1.bf16.msra.mxu0 %v568
    %763 = vmatprep.subr.bf16.mxu0 0
    %764 = vmatpush1.bf16.msra.mxu0 %v565
    %765 = vmatprep.subr.bf16.mxu0 0
    %766 = vmatpush1.bf16.msra.mxu0 %v562
    %767 = vmatprep.subr.bf16.mxu0 0
    %768 = vmatpush1.bf16.msra.mxu0 %v559
    %769 = vmatprep.subr.bf16.mxu0 0
    %770 = vmatpush2.bf16.msra.mxu0 0
    %771 = vmatprep.subr.bf16.mxu0 0
    %772 = vmatpush2.bf16.msra.mxu0 0
    %773 = vmatprep.subr.bf16.mxu0 0
    %774 = vmatpush2.bf16.msra.mxu0 0
    %775 = vmatprep.subr.bf16.mxu0 0
    %776 = vmatpush2.bf16.msra.mxu0 0
    %777 = vmatprep.subr.bf16.mxu0 0
    %778 = vmatpush2.bf16.msra.mxu0 0
    %779 = vmatprep.subr.bf16.mxu0 0
    %780 = vmatpush2.bf16.msra.mxu0 0
    %781 = vmatprep.subr.bf16.mxu0 0
    %782 = vmatpush2.bf16.msra.mxu0 0
    %783 = vmatprep.subr.bf16.mxu0 0
    %784 = vmatpush2.bf16.msra.mxu0 0
    %785 = vmatprep.mubr.bf16.mxu0 0
    %786 = vmatmul.mubr.bf16.gmra.mxu0 %v711
    %v787 = vpop.f32.mrf.mxu0
    %v788 = vadd.f32 0.0, %v787
    %v789 = vpop.f32.mrf.mxu0
    %v790 = vpop.f32.mrf.mxu0
    %v791 = vpop.f32.mrf.mxu0
    %792 = vdwg.mxu0
    %s793 = scalar_lea.vmem [#allocation3], 24
    %v794 = vld [vmem:[%s793] sm:$0xff]
    %v795 = vld [vmem:[%s793 + $0x8] sm:$0xff]
    %v796 = vld [vmem:[%s793 + $0x10] sm:$0xff]
    %v797 = vadd.f32 %v794, %v747
    %v798 = vadd.f32 %v795, %v749
    %v799 = vxor.u32 %v797, 2147483648
    %v800 = vxor.u32 %v798, 2147483648
    %v801 = vmul.f32 %v799, 1.442695
    %v802 = vpow.pop %v801
    %v803 = vmul.f32 %v800, 1.442695
    %v804 = vpow.pop %v803
    %v805 = vadd.f32 %v802, 1.0
    %v806 = vadd.f32 %v804, 1.0
    %v807 = vrcp.pop %v805
    %v808 = vmul.f32 1.0, %v807
    %v809 = vrcp.pop %v806
    %v810 = vmul.f32 1.0, %v809
    %v811 = vadd.f32 %v788, %v473
    %v812 = vmul.f32 %v808, %v811
    %v813 = vadd.f32 %v796, %v812
    %v814 = vtanh.pop %v813
    %v815 = vsub.f32 %v709, %v814
    %v816 = vmul.f32 %v810, %v815
    %v817 = vadd.f32 %v814, %v816
    %s818 = scalar_lea.vmem [#allocation4], 8
    %819 = vst [vmem:[%s818] sm:$0xff] %v817
    %v820 = vpack.c.bf16 %v817, %v817
    %821 = vmatprep.subr.bf16.mxu0 %v579
    %822 = vmatpush1.bf16.msra.mxu0 %v578
    %823 = vmatprep.subr.bf16.mxu0 %v576
    %824 = vmatpush1.bf16.msra.mxu0 %v575
    %825 = vmatprep.subr.bf16.mxu0 %v573
    %826 = vmatpush1.bf16.msra.mxu0 %v572
    %827 = vmatprep.subr.bf16.mxu0 %v570
    %828 = vmatpush1.bf16.msra.mxu0 %v569
    %829 = vmatprep.subr.bf16.mxu0 %v567
    %830 = vmatpush1.bf16.msra.mxu0 %v566
    %831 = vmatprep.subr.bf16.mxu0 %v564
    %832 = vmatpush1.bf16.msra.mxu0 %v563
    %833 = vmatprep.subr.bf16.mxu0 %v561
    %834 = vmatpush1.bf16.msra.mxu0 %v560
    %835 = vmatprep.subr.bf16.mxu0 %v558
    %836 = vmatpush1.bf16.msra.mxu0 %v557
    %837 = vmatprep.subr.bf16.mxu0 0
    %838 = vmatpush2.bf16.msra.mxu0 0
    %839 = vmatprep.subr.bf16.mxu0 0
    %840 = vmatpush2.bf16.msra.mxu0 0
    %841 = vmatprep.subr.bf16.mxu0 0
    %842 = vmatpush2.bf16.msra.mxu0 0
    %843 = vmatprep.subr.bf16.mxu0 0
    %844 = vmatpush2.bf16.msra.mxu0 0
    %845 = vmatprep.subr.bf16.mxu0 0
    %846 = vmatpush2.bf16.msra.mxu0 0
    %847 = vmatprep.subr.bf16.mxu0 0
    %848 = vmatpush2.bf16.msra.mxu0 0
    %849 = vmatprep.subr.bf16.mxu0 0
    %850 = vmatpush2.bf16.msra.mxu0 0
    %851 = vmatprep.subr.bf16.mxu0 0
    %852 = vmatpush2.bf16.msra.mxu0 0
    %853 = vmatprep.mubr.bf16.mxu0 0
    %854 = vmatmul.mubr.bf16.gmra.mxu0 %v820
    %v855 = vpop.f32.mrf.mxu0
    %v856 = vadd.f32 0.0, %v855
    %v857 = vpop.f32.mrf.mxu0
    %v858 = vadd.f32 0.0, %v857
    %v859 = vpop.f32.mrf.mxu0
    %v860 = vpop.f32.mrf.mxu0
    %861 = vdwg.mxu0
    %862 = vmatprep.subr.bf16.mxu0 0
    %863 = vmatpush1.bf16.msra.mxu0 %v580
    %864 = vmatprep.subr.bf16.mxu0 0
    %865 = vmatpush1.bf16.msra.mxu0 %v577
    %866 = vmatprep.subr.bf16.mxu0 0
    %867 = vmatpush1.bf16.msra.mxu0 %v574
    %868 = vmatprep.subr.bf16.mxu0 0
    %869 = vmatpush1.bf16.msra.mxu0 %v571
    %870 = vmatprep.subr.bf16.mxu0 0
    %871 = vmatpush1.bf16.msra.mxu0 %v568
    %872 = vmatprep.subr.bf16.mxu0 0
    %873 = vmatpush1.bf16.msra.mxu0 %v565
    %874 = vmatprep.subr.bf16.mxu0 0
    %875 = vmatpush1.bf16.msra.mxu0 %v562
    %876 = vmatprep.subr.bf16.mxu0 0
    %877 = vmatpush1.bf16.msra.mxu0 %v559
    %878 = vmatprep.subr.bf16.mxu0 0
    %879 = vmatpush2.bf16.msra.mxu0 0
    %880 = vmatprep.subr.bf16.mxu0 0
    %881 = vmatpush2.bf16.msra.mxu0 0
    %882 = vmatprep.subr.bf16.mxu0 0
    %883 = vmatpush2.bf16.msra.mxu0 0
    %884 = vmatprep.subr.bf16.mxu0 0
    %885 = vmatpush2.bf16.msra.mxu0 0
    %886 = vmatprep.subr.bf16.mxu0 0
    %887 = vmatpush2.bf16.msra.mxu0 0
    %888 = vmatprep.subr.bf16.mxu0 0
    %889 = vmatpush2.bf16.msra.mxu0 0
    %890 = vmatprep.subr.bf16.mxu0 0
    %891 = vmatpush2.bf16.msra.mxu0 0
    %892 = vmatprep.subr.bf16.mxu0 0
    %893 = vmatpush2.bf16.msra.mxu0 0
    %894 = vmatprep.mubr.bf16.mxu0 0
    %895 = vmatmul.mubr.bf16.gmra.mxu0 %v820
    %v896 = vpop.f32.mrf.mxu0
    %v897 = vadd.f32 0.0, %v896
    %v898 = vpop.f32.mrf.mxu0
    %v899 = vpop.f32.mrf.mxu0
    %v900 = vpop.f32.mrf.mxu0
    %901 = vdwg.mxu0
    %s902 = scalar_lea.vmem [#allocation3], 48
    %v903 = vld [vmem:[%s902] sm:$0xff]
    %v904 = vld [vmem:[%s902 + $0x8] sm:$0xff]
    %v905 = vld [vmem:[%s902 + $0x10] sm:$0xff]
    %v906 = vadd.f32 %v903, %v856
    %v907 = vadd.f32 %v904, %v858
    %v908 = vxor.u32 %v906, 2147483648
    %v909 = vxor.u32 %v907, 2147483648
    %v910 = vmul.f32 %v908, 1.442695
    %v911 = vpow.pop %v910
    %v912 = vmul.f32 %v909, 1.442695
    %v913 = vpow.pop %v912
    %v914 = vadd.f32 %v911, 1.0
    %v915 = vadd.f32 %v913, 1.0
    %v916 = vrcp.pop %v914
    %v917 = vmul.f32 1.0, %v916
    %v918 = vrcp.pop %v915
    %v919 = vmul.f32 1.0, %v918
    %v920 = vadd.f32 %v897, %v473
    %v921 = vmul.f32 %v917, %v920
    %v922 = vadd.f32 %v905, %v921
    %v923 = vtanh.pop %v922
    %v924 = vsub.f32 %v817, %v923
    %v925 = vmul.f32 %v919, %v924
    %v926 = vadd.f32 %v923, %v925
    %s927 = scalar_lea.vmem [#allocation4], 16
    %928 = vst [vmem:[%s927] sm:$0xff] %v926
    %v929 = vpack.c.bf16 %v926, %v926
    %930 = vmatprep.subr.bf16.mxu0 %v579
    %931 = vmatpush1.bf16.msra.mxu0 %v578
    %932 = vmatprep.subr.bf16.mxu0 %v576
    %933 = vmatpush1.bf16.msra.mxu0 %v575
    %934 = vmatprep.subr.bf16.mxu0 %v573
    %935 = vmatpush1.bf16.msra.mxu0 %v572
    %936 = vmatprep.subr.bf16.mxu0 %v570
    %937 = vmatpush1.bf16.msra.mxu0 %v569
    %938 = vmatprep.subr.bf16.mxu0 %v567
    %939 = vmatpush1.bf16.msra.mxu0 %v566
    %940 = vmatprep.subr.bf16.mxu0 %v564
    %941 = vmatpush1.bf16.msra.mxu0 %v563
    %942 = vmatprep.subr.bf16.mxu0 %v561
    %943 = vmatpush1.bf16.msra.mxu0 %v560
    %944 = vmatprep.subr.bf16.mxu0 %v558
    %945 = vmatpush1.bf16.msra.mxu0 %v557
    %946 = vmatprep.subr.bf16.mxu0 0
    %947 = vmatpush2.bf16.msra.mxu0 0
    %948 = vmatprep.subr.bf16.mxu0 0
    %949 = vmatpush2.bf16.msra.mxu0 0
    %950 = vmatprep.subr.bf16.mxu0 0
    %951 = vmatpush2.bf16.msra.mxu0 0
    %952 = vmatprep.subr.bf16.mxu0 0
    %953 = vmatpush2.bf16.msra.mxu0 0
    %954 = vmatprep.subr.bf16.mxu0 0
    %955 = vmatpush2.bf16.msra.mxu0 0
    %956 = vmatprep.subr.bf16.mxu0 0
    %957 = vmatpush2.bf16.msra.mxu0 0
    %958 = vmatprep.subr.bf16.mxu0 0
    %959 = vmatpush2.bf16.msra.mxu0 0
    %960 = vmatprep.subr.bf16.mxu0 0
    %961 = vmatpush2.bf16.msra.mxu0 0
    %962 = vmatprep.mubr.bf16.mxu0 0
    %963 = vmatmul.mubr.bf16.gmra.mxu0 %v929
    %v964 = vpop.f32.mrf.mxu0
    %v965 = vadd.f32 0.0, %v964
    %v966 = vpop.f32.mrf.mxu0
    %v967 = vadd.f32 0.0, %v966
    %v968 = vpop.f32.mrf.mxu0
    %v969 = vpop.f32.mrf.mxu0
    %970 = vdwg.mxu0
    %971 = vmatprep.subr.bf16.mxu0 0
    %972 = vmatpush1.bf16.msra.mxu0 %v580
    %973 = vmatprep.subr.bf16.mxu0 0
    %974 = vmatpush1.bf16.msra.mxu0 %v577
    %975 = vmatprep.subr.bf16.mxu0 0
    %976 = vmatpush1.bf16.msra.mxu0 %v574
    %977 = vmatprep.subr.bf16.mxu0 0
    %978 = vmatpush1.bf16.msra.mxu0 %v571
    %979 = vmatprep.subr.bf16.mxu0 0
    %980 = vmatpush1.bf16.msra.mxu0 %v568
    %981 = vmatprep.subr.bf16.mxu0 0
    %982 = vmatpush1.bf16.msra.mxu0 %v565
    %983 = vmatprep.subr.bf16.mxu0 0
    %984 = vmatpush1.bf16.msra.mxu0 %v562
    %985 = vmatprep.subr.bf16.mxu0 0
    %986 = vmatpush1.bf16.msra.mxu0 %v559
    %987 = vmatprep.subr.bf16.mxu0 0
    %988 = vmatpush2.bf16.msra.mxu0 0
    %989 = vmatprep.subr.bf16.mxu0 0
    %990 = vmatpush2.bf16.msra.mxu0 0
    %991 = vmatprep.subr.bf16.mxu0 0
    %992 = vmatpush2.bf16.msra.mxu0 0
    %993 = vmatprep.subr.bf16.mxu0 0
    %994 = vmatpush2.bf16.msra.mxu0 0
    %995 = vmatprep.subr.bf16.mxu0 0
    %996 = vmatpush2.bf16.msra.mxu0 0
    %997 = vmatprep.subr.bf16.mxu0 0
    %998 = vmatpush2.bf16.msra.mxu0 0
    %999 = vmatprep.subr.bf16.mxu0 0
    %1000 = vmatpush2.bf16.msra.mxu0 0
    %1001 = vmatprep.subr.bf16.mxu0 0
    %1002 = vmatpush2.bf16.msra.mxu0 0
    %1003 = vmatprep.mubr.bf16.mxu0 0
    %1004 = vmatmul.mubr.bf16.gmra.mxu0 %v929
    %v1005 = vpop.f32.mrf.mxu0
    %v1006 = vadd.f32 0.0, %v1005
    %v1007 = vpop.f32.mrf.mxu0
    %v1008 = vpop.f32.mrf.mxu0
    %v1009 = vpop.f32.mrf.mxu0
    %1010 = vdwg.mxu0
    %s1011 = scalar_lea.vmem [#allocation3], 72
    %v1012 = vld [vmem:[%s1011] sm:$0xff]
    %v1013 = vld [vmem:[%s1011 + $0x8] sm:$0xff]
    %v1014 = vld [vmem:[%s1011 + $0x10] sm:$0xff]
    %v1015 = vadd.f32 %v1012, %v965
    %v1016 = vadd.f32 %v1013, %v967
    %v1017 = vxor.u32 %v1015, 2147483648
    %v1018 = vxor.u32 %v1016, 2147483648
    %v1019 = vmul.f32 %v1017, 1.442695
    %v1020 = vpow.pop %v1019
    %v1021 = vmul.f32 %v1018, 1.442695
    %v1022 = vpow.pop %v1021
    %v1023 = vadd.f32 %v1020, 1.0
    %v1024 = vadd.f32 %v1022, 1.0
    %v1025 = vrcp.pop %v1023
    %v1026 = vmul.f32 1.0, %v1025
    %v1027 = vrcp.pop %v1024
    %v1028 = vmul.f32 1.0, %v1027
    %v1029 = vadd.f32 %v1006, %v473
    %v1030 = vmul.f32 %v1026, %v1029
    %v1031 = vadd.f32 %v1014, %v1030
    %v1032 = vtanh.pop %v1031
    %v1033 = vsub.f32 %v926, %v1032
    %v1034 = vmul.f32 %v1028, %v1033
    %v1035 = vadd.f32 %v1032, %v1034
    %s1036 = scalar_lea.vmem [#allocation4], 24
    %1037 = vst [vmem:[%s1036] sm:$0xff] %v1035
    %v1038 = vpack.c.bf16 %v1035, %v1035
    %1039 = vmatprep.subr.bf16.mxu0 %v579
    %1040 = vmatpush1.bf16.msra.mxu0 %v578
    %1041 = vmatprep.subr.bf16.mxu0 %v576
    %1042 = vmatpush1.bf16.msra.mxu0 %v575
    %1043 = vmatprep.subr.bf16.mxu0 %v573
    %1044 = vmatpush1.bf16.msra.mxu0 %v572
    %1045 = vmatprep.subr.bf16.mxu0 %v570
    %1046 = vmatpush1.bf16.msra.mxu0 %v569
    %1047 = vmatprep.subr.bf16.mxu0 %v567
    %1048 = vmatpush1.bf16.msra.mxu0 %v566
    %1049 = vmatprep.subr.bf16.mxu0 %v564
    %1050 = vmatpush1.bf16.msra.mxu0 %v563
    %1051 = vmatprep.subr.bf16.mxu0 %v561
    %1052 = vmatpush1.bf16.msra.mxu0 %v560
    %1053 = vmatprep.subr.bf16.mxu0 %v558
    %1054 = vmatpush1.bf16.msra.mxu0 %v557
    %1055 = vmatprep.subr.bf16.mxu0 0
    %1056 = vmatpush2.bf16.msra.mxu0 0
    %1057 = vmatprep.subr.bf16.mxu0 0
    %1058 = vmatpush2.bf16.msra.mxu0 0
    %1059 = vmatprep.subr.bf16.mxu0 0
    %1060 = vmatpush2.bf16.msra.mxu0 0
    %1061 = vmatprep.subr.bf16.mxu0 0
    %1062 = vmatpush2.bf16.msra.mxu0 0
    %1063 = vmatprep.subr.bf16.mxu0 0
    %1064 = vmatpush2.bf16.msra.mxu0 0
    %1065 = vmatprep.subr.bf16.mxu0 0
    %1066 = vmatpush2.bf16.msra.mxu0 0
    %1067 = vmatprep.subr.bf16.mxu0 0
    %1068 = vmatpush2.bf16.msra.mxu0 0
    %1069 = vmatprep.subr.bf16.mxu0 0
    %1070 = vmatpush2.bf16.msra.mxu0 0
    %1071 = vmatprep.mubr.bf16.mxu0 0
    %1072 = vmatmul.mubr.bf16.gmra.mxu0 %v1038
    %v1073 = vpop.f32.mrf.mxu0
    %v1074 = vadd.f32 0.0, %v1073
    %v1075 = vpop.f32.mrf.mxu0
    %v1076 = vadd.f32 0.0, %v1075
    %v1077 = vpop.f32.mrf.mxu0
    %v1078 = vpop.f32.mrf.mxu0
    %1079 = vdwg.mxu0
    %1080 = vmatprep.subr.bf16.mxu0 0
    %1081 = vmatpush1.bf16.msra.mxu0 %v580
    %1082 = vmatprep.subr.bf16.mxu0 0
    %1083 = vmatpush1.bf16.msra.mxu0 %v577
    %1084 = vmatprep.subr.bf16.mxu0 0
    %1085 = vmatpush1.bf16.msra.mxu0 %v574
    %1086 = vmatprep.subr.bf16.mxu0 0
    %1087 = vmatpush1.bf16.msra.mxu0 %v571
    %1088 = vmatprep.subr.bf16.mxu0 0
    %1089 = vmatpush1.bf16.msra.mxu0 %v568
    %1090 = vmatprep.subr.bf16.mxu0 0
    %1091 = vmatpush1.bf16.msra.mxu0 %v565
    %1092 = vmatprep.subr.bf16.mxu0 0
    %1093 = vmatpush1.bf16.msra.mxu0 %v562
    %1094 = vmatprep.subr.bf16.mxu0 0
    %1095 = vmatpush1.bf16.msra.mxu0 %v559
    %1096 = vmatprep.subr.bf16.mxu0 0
    %1097 = vmatpush2.bf16.msra.mxu0 0
    %1098 = vmatprep.subr.bf16.mxu0 0
    %1099 = vmatpush2.bf16.msra.mxu0 0
    %1100 = vmatprep.subr.bf16.mxu0 0
    %1101 = vmatpush2.bf16.msra.mxu0 0
    %1102 = vmatprep.subr.bf16.mxu0 0
    %1103 = vmatpush2.bf16.msra.mxu0 0
    %1104 = vmatprep.subr.bf16.mxu0 0
    %1105 = vmatpush2.bf16.msra.mxu0 0
    %1106 = vmatprep.subr.bf16.mxu0 0
    %1107 = vmatpush2.bf16.msra.mxu0 0
    %1108 = vmatprep.subr.bf16.mxu0 0
    %1109 = vmatpush2.bf16.msra.mxu0 0
    %1110 = vmatprep.subr.bf16.mxu0 0
    %1111 = vmatpush2.bf16.msra.mxu0 0
    %1112 = vmatprep.mubr.bf16.mxu0 0
    %1113 = vmatmul.mubr.bf16.gmra.mxu0 %v1038
    %v1114 = vpop.f32.mrf.mxu0
    %v1115 = vadd.f32 0.0, %v1114
    %v1116 = vpop.f32.mrf.mxu0
    %v1117 = vpop.f32.mrf.mxu0
    %v1118 = vpop.f32.mrf.mxu0
    %1119 = vdwg.mxu0
    %s1120 = scalar_lea.vmem [#allocation3], 96
    %v1121 = vld [vmem:[%s1120] sm:$0xff]
    %v1122 = vld [vmem:[%s1120 + $0x8] sm:$0xff]
    %v1123 = vld [vmem:[%s1120 + $0x10] sm:$0xff]
    %v1124 = vadd.f32 %v1121, %v1074
    %v1125 = vadd.f32 %v1122, %v1076
    %v1126 = vxor.u32 %v1124, 2147483648
    %v1127 = vxor.u32 %v1125, 2147483648
    %v1128 = vmul.f32 %v1126, 1.442695
    %v1129 = vpow.pop %v1128
    %v1130 = vmul.f32 %v1127, 1.442695
    %v1131 = vpow.pop %v1130
    %v1132 = vadd.f32 %v1129, 1.0
    %v1133 = vadd.f32 %v1131, 1.0
    %v1134 = vrcp.pop %v1132
    %v1135 = vmul.f32 1.0, %v1134
    %v1136 = vrcp.pop %v1133
    %v1137 = vmul.f32 1.0, %v1136
    %v1138 = vadd.f32 %v1115, %v473
    %v1139 = vmul.f32 %v1135, %v1138
    %v1140 = vadd.f32 %v1123, %v1139
    %v1141 = vtanh.pop %v1140
    %v1142 = vsub.f32 %v1035, %v1141
    %v1143 = vmul.f32 %v1137, %v1142
    %v1144 = vadd.f32 %v1141, %v1143
    %s1145 = scalar_lea.vmem [#allocation4], 32
    %1146 = vst [vmem:[%s1145] sm:$0xff] %v1144
    %v1147 = vpack.c.bf16 %v1144, %v1144
    %1148 = vmatprep.subr.bf16.mxu0 %v579
    %1149 = vmatpush1.bf16.msra.mxu0 %v578
    %1150 = vmatprep.subr.bf16.mxu0 %v576
    %1151 = vmatpush1.bf16.msra.mxu0 %v575
    %1152 = vmatprep.subr.bf16.mxu0 %v573
    %1153 = vmatpush1.bf16.msra.mxu0 %v572
    %1154 = vmatprep.subr.bf16.mxu0 %v570
    %1155 = vmatpush1.bf16.msra.mxu0 %v569
    %1156 = vmatprep.subr.bf16.mxu0 %v567
    %1157 = vmatpush1.bf16.msra.mxu0 %v566
    %1158 = vmatprep.subr.bf16.mxu0 %v564
    %1159 = vmatpush1.bf16.msra.mxu0 %v563
    %1160 = vmatprep.subr.bf16.mxu0 %v561
    %1161 = vmatpush1.bf16.msra.mxu0 %v560
    %1162 = vmatprep.subr.bf16.mxu0 %v558
    %1163 = vmatpush1.bf16.msra.mxu0 %v557
    %1164 = vmatprep.subr.bf16.mxu0 0
    %1165 = vmatpush2.bf16.msra.mxu0 0
    %1166 = vmatprep.subr.bf16.mxu0 0
    %1167 = vmatpush2.bf16.msra.mxu0 0
    %1168 = vmatprep.subr.bf16.mxu0 0
    %1169 = vmatpush2.bf16.msra.mxu0 0
    %1170 = vmatprep.subr.bf16.mxu0 0
    %1171 = vmatpush2.bf16.msra.mxu0 0
    %1172 = vmatprep.subr.bf16.mxu0 0
    %1173 = vmatpush2.bf16.msra.mxu0 0
    %1174 = vmatprep.subr.bf16.mxu0 0
    %1175 = vmatpush2.bf16.msra.mxu0 0
    %1176 = vmatprep.subr.bf16.mxu0 0
    %1177 = vmatpush2.bf16.msra.mxu0 0
    %1178 = vmatprep.subr.bf16.mxu0 0
    %1179 = vmatpush2.bf16.msra.mxu0 0
    %1180 = vmatprep.mubr.bf16.mxu0 0
    %1181 = vmatmul.mubr.bf16.gmra.mxu0 %v1147
    %v1182 = vpop.f32.mrf.mxu0
    %v1183 = vadd.f32 0.0, %v1182
    %v1184 = vpop.f32.mrf.mxu0
    %v1185 = vadd.f32 0.0, %v1184
    %v1186 = vpop.f32.mrf.mxu0
    %v1187 = vpop.f32.mrf.mxu0
    %1188 = vdwg.mxu0
    %1189 = vmatprep.subr.bf16.mxu0 0
    %1190 = vmatpush1.bf16.msra.mxu0 %v580
    %1191 = vmatprep.subr.bf16.mxu0 0
    %1192 = vmatpush1.bf16.msra.mxu0 %v577
    %1193 = vmatprep.subr.bf16.mxu0 0
    %1194 = vmatpush1.bf16.msra.mxu0 %v574
    %1195 = vmatprep.subr.bf16.mxu0 0
    %1196 = vmatpush1.bf16.msra.mxu0 %v571
    %1197 = vmatprep.subr.bf16.mxu0 0
    %1198 = vmatpush1.bf16.msra.mxu0 %v568
    %1199 = vmatprep.subr.bf16.mxu0 0
    %1200 = vmatpush1.bf16.msra.mxu0 %v565
    %1201 = vmatprep.subr.bf16.mxu0 0
    %1202 = vmatpush1.bf16.msra.mxu0 %v562
    %1203 = vmatprep.subr.bf16.mxu0 0
    %1204 = vmatpush1.bf16.msra.mxu0 %v559
    %1205 = vmatprep.subr.bf16.mxu0 0
    %1206 = vmatpush2.bf16.msra.mxu0 0
    %1207 = vmatprep.subr.bf16.mxu0 0
    %1208 = vmatpush2.bf16.msra.mxu0 0
    %1209 = vmatprep.subr.bf16.mxu0 0
    %1210 = vmatpush2.bf16.msra.mxu0 0
    %1211 = vmatprep.subr.bf16.mxu0 0
    %1212 = vmatpush2.bf16.msra.mxu0 0
    %1213 = vmatprep.subr.bf16.mxu0 0
    %1214 = vmatpush2.bf16.msra.mxu0 0
    %1215 = vmatprep.subr.bf16.mxu0 0
    %1216 = vmatpush2.bf16.msra.mxu0 0
    %1217 = vmatprep.subr.bf16.mxu0 0
    %1218 = vmatpush2.bf16.msra.mxu0 0
    %1219 = vmatprep.subr.bf16.mxu0 0
    %1220 = vmatpush2.bf16.msra.mxu0 0
    %1221 = vmatprep.mubr.bf16.mxu0 0
    %1222 = vmatmul.mubr.bf16.gmra.mxu0 %v1147
    %v1223 = vpop.f32.mrf.mxu0
    %v1224 = vadd.f32 0.0, %v1223
    %v1225 = vpop.f32.mrf.mxu0
    %v1226 = vpop.f32.mrf.mxu0
    %v1227 = vpop.f32.mrf.mxu0
    %1228 = vdwg.mxu0
    %s1229 = scalar_lea.vmem [#allocation3], 120
    %v1230 = vld [vmem:[%s1229] sm:$0xff]
    %v1231 = vld [vmem:[%s1229 + $0x8] sm:$0xff]
    %v1232 = vld [vmem:[%s1229 + $0x10] sm:$0xff]
    %v1233 = vadd.f32 %v1230, %v1183
    %v1234 = vadd.f32 %v1231, %v1185
    %v1235 = vxor.u32 %v1233, 2147483648
    %v1236 = vxor.u32 %v1234, 2147483648
    %v1237 = vmul.f32 %v1235, 1.442695
    %v1238 = vpow.pop %v1237
    %v1239 = vmul.f32 %v1236, 1.442695
    %v1240 = vpow.pop %v1239
    %v1241 = vadd.f32 %v1238, 1.0
    %v1242 = vadd.f32 %v1240, 1.0
    %v1243 = vrcp.pop %v1241
    %v1244 = vmul.f32 1.0, %v1243
    %v1245 = vrcp.pop %v1242
    %v1246 = vmul.f32 1.0, %v1245
    %v1247 = vadd.f32 %v1224, %v473
    %v1248 = vmul.f32 %v1244, %v1247
    %v1249 = vadd.f32 %v1232, %v1248
    %v1250 = vtanh.pop %v1249
    %v1251 = vsub.f32 %v1144, %v1250
    %v1252 = vmul.f32 %v1246, %v1251
    %v1253 = vadd.f32 %v1250, %v1252
    %s1254 = scalar_lea.vmem [#allocation4], 40
    %1255 = vst [vmem:[%s1254] sm:$0xff] %v1253
    %v1256 = vpack.c.bf16 %v1253, %v1253
    %1257 = vmatprep.subr.bf16.mxu0 %v579
    %1258 = vmatpush1.bf16.msra.mxu0 %v578
    %1259 = vmatprep.subr.bf16.mxu0 %v576
    %1260 = vmatpush1.bf16.msra.mxu0 %v575
    %1261 = vmatprep.subr.bf16.mxu0 %v573
    %1262 = vmatpush1.bf16.msra.mxu0 %v572
    %1263 = vmatprep.subr.bf16.mxu0 %v570
    %1264 = vmatpush1.bf16.msra.mxu0 %v569
    %1265 = vmatprep.subr.bf16.mxu0 %v567
    %1266 = vmatpush1.bf16.msra.mxu0 %v566
    %1267 = vmatprep.subr.bf16.mxu0 %v564
    %1268 = vmatpush1.bf16.msra.mxu0 %v563
    %1269 = vmatprep.subr.bf16.mxu0 %v561
    %1270 = vmatpush1.bf16.msra.mxu0 %v560
    %1271 = vmatprep.subr.bf16.mxu0 %v558
    %1272 = vmatpush1.bf16.msra.mxu0 %v557
    %1273 = vmatprep.subr.bf16.mxu0 0
    %1274 = vmatpush2.bf16.msra.mxu0 0
    %1275 = vmatprep.subr.bf16.mxu0 0
    %1276 = vmatpush2.bf16.msra.mxu0 0
    %1277 = vmatprep.subr.bf16.mxu0 0
    %1278 = vmatpush2.bf16.msra.mxu0 0
    %1279 = vmatprep.subr.bf16.mxu0 0
    %1280 = vmatpush2.bf16.msra.mxu0 0
    %1281 = vmatprep.subr.bf16.mxu0 0
    %1282 = vmatpush2.bf16.msra.mxu0 0
    %1283 = vmatprep.subr.bf16.mxu0 0
    %1284 = vmatpush2.bf16.msra.mxu0 0
    %1285 = vmatprep.subr.bf16.mxu0 0
    %1286 = vmatpush2.bf16.msra.mxu0 0
    %1287 = vmatprep.subr.bf16.mxu0 0
    %1288 = vmatpush2.bf16.msra.mxu0 0
    %1289 = vmatprep.mubr.bf16.mxu0 0
    %1290 = vmatmul.mubr.bf16.gmra.mxu0 %v1256
    %v1291 = vpop.f32.mrf.mxu0
    %v1292 = vadd.f32 0.0, %v1291
    %v1293 = vpop.f32.mrf.mxu0
    %v1294 = vadd.f32 0.0, %v1293
    %v1295 = vpop.f32.mrf.mxu0
    %v1296 = vpop.f32.mrf.mxu0
    %1297 = vdwg.mxu0
    %1298 = vmatprep.subr.bf16.mxu0 0
    %1299 = vmatpush1.bf16.msra.mxu0 %v580
    %1300 = vmatprep.subr.bf16.mxu0 0
    %1301 = vmatpush1.bf16.msra.mxu0 %v577
    %1302 = vmatprep.subr.bf16.mxu0 0
    %1303 = vmatpush1.bf16.msra.mxu0 %v574
    %1304 = vmatprep.subr.bf16.mxu0 0
    %1305 = vmatpush1.bf16.msra.mxu0 %v571
    %1306 = vmatprep.subr.bf16.mxu0 0
    %1307 = vmatpush1.bf16.msra.mxu0 %v568
    %1308 = vmatprep.subr.bf16.mxu0 0
    %1309 = vmatpush1.bf16.msra.mxu0 %v565
    %1310 = vmatprep.subr.bf16.mxu0 0
    %1311 = vmatpush1.bf16.msra.mxu0 %v562
    %1312 = vmatprep.subr.bf16.mxu0 0
    %1313 = vmatpush1.bf16.msra.mxu0 %v559
    %1314 = vmatprep.subr.bf16.mxu0 0
    %1315 = vmatpush2.bf16.msra.mxu0 0
    %1316 = vmatprep.subr.bf16.mxu0 0
    %1317 = vmatpush2.bf16.msra.mxu0 0
    %1318 = vmatprep.subr.bf16.mxu0 0
    %1319 = vmatpush2.bf16.msra.mxu0 0
    %1320 = vmatprep.subr.bf16.mxu0 0
    %1321 = vmatpush2.bf16.msra.mxu0 0
    %1322 = vmatprep.subr.bf16.mxu0 0
    %1323 = vmatpush2.bf16.msra.mxu0 0
    %1324 = vmatprep.subr.bf16.mxu0 0
    %1325 = vmatpush2.bf16.msra.mxu0 0
    %1326 = vmatprep.subr.bf16.mxu0 0
    %1327 = vmatpush2.bf16.msra.mxu0 0
    %1328 = vmatprep.subr.bf16.mxu0 0
    %1329 = vmatpush2.bf16.msra.mxu0 0
    %1330 = vmatprep.mubr.bf16.mxu0 0
    %1331 = vmatmul.mubr.bf16.gmra.mxu0 %v1256
    %v1332 = vpop.f32.mrf.mxu0
    %v1333 = vadd.f32 0.0, %v1332
    %v1334 = vpop.f32.mrf.mxu0
    %v1335 = vpop.f32.mrf.mxu0
    %v1336 = vpop.f32.mrf.mxu0
    %1337 = vdwg.mxu0
    %s1338 = scalar_lea.vmem [#allocation3], 144
    %v1339 = vld [vmem:[%s1338] sm:$0xff]
    %v1340 = vld [vmem:[%s1338 + $0x8] sm:$0xff]
    %v1341 = vld [vmem:[%s1338 + $0x10] sm:$0xff]
    %v1342 = vadd.f32 %v1339, %v1292
    %v1343 = vadd.f32 %v1340, %v1294
    %v1344 = vxor.u32 %v1342, 2147483648
    %v1345 = vxor.u32 %v1343, 2147483648
    %v1346 = vmul.f32 %v1344, 1.442695
    %v1347 = vpow.pop %v1346
    %v1348 = vmul.f32 %v1345, 1.442695
    %v1349 = vpow.pop %v1348
    %v1350 = vadd.f32 %v1347, 1.0
    %v1351 = vadd.f32 %v1349, 1.0
    %v1352 = vrcp.pop %v1350
    %v1353 = vmul.f32 1.0, %v1352
    %v1354 = vrcp.pop %v1351
    %v1355 = vmul.f32 1.0, %v1354
    %v1356 = vadd.f32 %v1333, %v473
    %v1357 = vmul.f32 %v1353, %v1356
    %v1358 = vadd.f32 %v1341, %v1357
    %v1359 = vtanh.pop %v1358
    %v1360 = vsub.f32 %v1253, %v1359
    %v1361 = vmul.f32 %v1355, %v1360
    %v1362 = vadd.f32 %v1359, %v1361
    %s1363 = scalar_lea.vmem [#allocation4], 48
    %1364 = vst [vmem:[%s1363] sm:$0xff] %v1362
    %v1365 = vpack.c.bf16 %v1362, %v1362
    %1366 = vmatprep.subr.bf16.mxu0 %v579
    %1367 = vmatpush1.bf16.msra.mxu0 %v578
    %1368 = vmatprep.subr.bf16.mxu0 %v576
    %1369 = vmatpush1.bf16.msra.mxu0 %v575
    %1370 = vmatprep.subr.bf16.mxu0 %v573
    %1371 = vmatpush1.bf16.msra.mxu0 %v572
    %1372 = vmatprep.subr.bf16.mxu0 %v570
    %1373 = vmatpush1.bf16.msra.mxu0 %v569
    %1374 = vmatprep.subr.bf16.mxu0 %v567
    %1375 = vmatpush1.bf16.msra.mxu0 %v566
    %1376 = vmatprep.subr.bf16.mxu0 %v564
    %1377 = vmatpush1.bf16.msra.mxu0 %v563
    %1378 = vmatprep.subr.bf16.mxu0 %v561
    %1379 = vmatpush1.bf16.msra.mxu0 %v560
    %1380 = vmatprep.subr.bf16.mxu0 %v558
    %1381 = vmatpush1.bf16.msra.mxu0 %v557
    %1382 = vmatprep.subr.bf16.mxu0 0
    %1383 = vmatpush2.bf16.msra.mxu0 0
    %1384 = vmatprep.subr.bf16.mxu0 0
    %1385 = vmatpush2.bf16.msra.mxu0 0
    %1386 = vmatprep.subr.bf16.mxu0 0
    %1387 = vmatpush2.bf16.msra.mxu0 0
    %1388 = vmatprep.subr.bf16.mxu0 0
    %1389 = vmatpush2.bf16.msra.mxu0 0
    %1390 = vmatprep.subr.bf16.mxu0 0
    %1391 = vmatpush2.bf16.msra.mxu0 0
    %1392 = vmatprep.subr.bf16.mxu0 0
    %1393 = vmatpush2.bf16.msra.mxu0 0
    %1394 = vmatprep.subr.bf16.mxu0 0
    %1395 = vmatpush2.bf16.msra.mxu0 0
    %1396 = vmatprep.subr.bf16.mxu0 0
    %1397 = vmatpush2.bf16.msra.mxu0 0
    %1398 = vmatprep.mubr.bf16.mxu0 0
    %1399 = vmatmul.mubr.bf16.gmra.mxu0 %v1365
    %v1400 = vpop.f32.mrf.mxu0
    %v1401 = vadd.f32 0.0, %v1400
    %v1402 = vpop.f32.mrf.mxu0
    %v1403 = vadd.f32 0.0, %v1402
    %v1404 = vpop.f32.mrf.mxu0
    %v1405 = vpop.f32.mrf.mxu0
    %1406 = vdwg.mxu0
    %1407 = vmatprep.subr.bf16.mxu0 0
    %1408 = vmatpush1.bf16.msra.mxu0 %v580
    %1409 = vmatprep.subr.bf16.mxu0 0
    %1410 = vmatpush1.bf16.msra.mxu0 %v577
    %1411 = vmatprep.subr.bf16.mxu0 0
    %1412 = vmatpush1.bf16.msra.mxu0 %v574
    %1413 = vmatprep.subr.bf16.mxu0 0
    %1414 = vmatpush1.bf16.msra.mxu0 %v571
    %1415 = vmatprep.subr.bf16.mxu0 0
    %1416 = vmatpush1.bf16.msra.mxu0 %v568
    %1417 = vmatprep.subr.bf16.mxu0 0
    %1418 = vmatpush1.bf16.msra.mxu0 %v565
    %1419 = vmatprep.subr.bf16.mxu0 0
    %1420 = vmatpush1.bf16.msra.mxu0 %v562
    %1421 = vmatprep.subr.bf16.mxu0 0
    %1422 = vmatpush1.bf16.msra.mxu0 %v559
    %1423 = vmatprep.subr.bf16.mxu0 0
    %1424 = vmatpush2.bf16.msra.mxu0 0
    %1425 = vmatprep.subr.bf16.mxu0 0
    %1426 = vmatpush2.bf16.msra.mxu0 0
    %1427 = vmatprep.subr.bf16.mxu0 0
    %1428 = vmatpush2.bf16.msra.mxu0 0
    %1429 = vmatprep.subr.bf16.mxu0 0
    %1430 = vmatpush2.bf16.msra.mxu0 0
    %1431 = vmatprep.subr.bf16.mxu0 0
    %1432 = vmatpush2.bf16.msra.mxu0 0
    %1433 = vmatprep.subr.bf16.mxu0 0
    %1434 = vmatpush2.bf16.msra.mxu0 0
    %1435 = vmatprep.subr.bf16.mxu0 0
    %1436 = vmatpush2.bf16.msra.mxu0 0
    %1437 = vmatprep.subr.bf16.mxu0 0
    %1438 = vmatpush2.bf16.msra.mxu0 0
    %1439 = vmatprep.mubr.bf16.mxu0 0
    %1440 = vmatmul.mubr.bf16.gmra.mxu0 %v1365
    %v1441 = vpop.f32.mrf.mxu0
    %v1442 = vadd.f32 0.0, %v1441
    %v1443 = vpop.f32.mrf.mxu0
    %v1444 = vpop.f32.mrf.mxu0
    %v1445 = vpop.f32.mrf.mxu0
    %1446 = vdwg.mxu0
    %s1447 = scalar_lea.vmem [#allocation3], 168
    %v1448 = vld [vmem:[%s1447] sm:$0xff]
    %v1449 = vld [vmem:[%s1447 + $0x8] sm:$0xff]
    %v1450 = vld [vmem:[%s1447 + $0x10] sm:$0xff]
    %v1451 = vadd.f32 %v1448, %v1401
    %v1452 = vadd.f32 %v1449, %v1403
    %v1453 = vxor.u32 %v1451, 2147483648
    %v1454 = vxor.u32 %v1452, 2147483648
    %v1455 = vmul.f32 %v1453, 1.442695
    %v1456 = vpow.pop %v1455
    %v1457 = vmul.f32 %v1454, 1.442695
    %v1458 = vpow.pop %v1457
    %v1459 = vadd.f32 %v1456, 1.0
    %v1460 = vadd.f32 %v1458, 1.0
    %v1461 = vrcp.pop %v1459
    %v1462 = vmul.f32 1.0, %v1461
    %v1463 = vrcp.pop %v1460
    %v1464 = vmul.f32 1.0, %v1463
    %v1465 = vadd.f32 %v1442, %v473
    %v1466 = vmul.f32 %v1462, %v1465
    %v1467 = vadd.f32 %v1450, %v1466
    %v1468 = vtanh.pop %v1467
    %v1469 = vsub.f32 %v1362, %v1468
    %v1470 = vmul.f32 %v1464, %v1469
    %v1471 = vadd.f32 %v1468, %v1470
    %s1472 = scalar_lea.vmem [#allocation4], 56
    %1473 = vst [vmem:[%s1472] sm:$0xff] %v1471
    %1474 = vst [vmem:[#allocation2] sm:$0xff] %v1471
    %v1475 = vld [vmem:[#allocation4] sm:$0xff]
    %v1476 = vld [vmem:[#allocation4 + $0x8] sm:$0xff]
    %v1477 = vld [vmem:[#allocation4 + $0x10] sm:$0xff]
    %v1478 = vld [vmem:[#allocation4 + $0x18] sm:$0xff]
    %v1479 = vld [vmem:[#allocation4 + $0x20] sm:$0xff]
    %v1480 = vld [vmem:[#allocation4 + $0x28] sm:$0xff]
    %v1481 = vld [vmem:[#allocation4 + $0x30] sm:$0xff]
    %v1482 = vld [vmem:[#allocation4 + $0x38] sm:$0xff]
    %v1483 = vpack.c.bf16 %v1475, %v1475
    %v1484 = vpack.c.bf16 %v1476, %v1476
    %v1485 = vpack.c.bf16 %v1477, %v1477
    %v1486 = vpack.c.bf16 %v1478, %v1478
    %v1487 = vpack.c.bf16 %v1479, %v1479
    %v1488 = vpack.c.bf16 %v1480, %v1480
    %v1489 = vpack.c.bf16 %v1481, %v1481
    %v1490 = vpack.c.bf16 %v1482, %v1482
    %1491 = vst [vmem:[%s5] sm:$0xf] %v1483
    %1492 = vst [vmem:[%s5 + $0x4] sm:$0xf] %v1484
    %1493 = vst [vmem:[%s5 + $0x8] sm:$0xf] %v1485
    %1494 = vst [vmem:[%s5 + $0xc] sm:$0xf] %v1486
    %1495 = vst [vmem:[%s5 + $0x10] sm:$0xf] %v1487
    %1496 = vst [vmem:[%s5 + $0x14] sm:$0xf] %v1488
    %1497 = vst [vmem:[%s5 + $0x18] sm:$0xf] %v1489
    %1498 = vst [vmem:[%s5 + $0x1c] sm:$0xf] %v1490
    // Predicated region
    $region42: #{rnn_gru_forward.2} parent=1 // pred_check
      _
    $region43: #{rnn_gru_forward.2} parent=1 // pred_check_branch
      %1500 = sbr.rel (0) target = $region45
    $region44: #{rnn_gru_forward.2} parent=1 // pred_region
      _
    $region45: #{rnn_gru_forward.2} parent=1 // pred_fallthru
      _
    // Predicated region
    $region46: #{rnn_gru_forward.2} parent=1 // pred_check
      _
    $region47: #{rnn_gru_forward.2} parent=1 // pred_check_branch
      %1502 = sbr.rel (0) target = $region49
    $region48: #{rnn_gru_forward.2} parent=1 // pred_region
      _
    $region49: #{rnn_gru_forward.2} parent=1 // pred_fallthru
      _
    %1503 = vsyncpa [#allocation6], 1
    %1504 = vsyncpa [#allocation8], 1
    %1505 = vsyncpa [#allocation11], 1

// kernel: rnn_gru_forward.3
$region0: #{rnn_gru_forward.3}
  #allocation0 [shape = 'u32[]', space=smem, size = 0x4, offset = 0x4, fixed_abs, tag = 'smem constant byte address 0x4 - core index']
  #allocation1 [shape = 'u32[144,128]{1,0:T(1,128)}', space=vmem, size = 0x12000, scoped, tag = 'internal scratch']
  #allocation2 [shape = 'f32[8,128]{1,0:T(8,128)}', space=vmem, size = 0x1000, scoped, tag = 'scratch operand']
  #allocation3 [shape = 'f32[8,8,384]{2,1,0:T(8,128)}', space=vmem, size = 0x18000, scoped, tag = 'scratch operand']
  #allocation4 [shape = 'f32[8,128]{1,0:T(8,128)}', space=vmem, size = 0x1000, scoped, tag = 'scratch operand']
  %s0 = inlined_call_operand.vmem [shape: bf16[8,8,128], index: 0, kind: input, shape index: {}]
  %s1 = inlined_call_operand.hbm [shape: bf16[128,384], index: 1, kind: input, shape index: {}]
  %s2 = inlined_call_operand.hbm [shape: bf16[128,384], index: 2, kind: input, shape index: {}]
  %s3 = inlined_call_operand.vmem [shape: f32[1,384], index: 3, kind: input, shape index: {}]
  %s4 = inlined_call_operand.vmem [shape: f32[1,128], index: 4, kind: input, shape index: {}]
  %s5 = inlined_call_operand.vmem [shape: bf16[8,128,128], index: 5, kind: input, shape index: {}]
  %s6 = inlined_call_operand.vmem [shape: f32[1,128], index: 6, kind: input, shape index: {}]
  %s7 = inlined_call_operand.hbm [shape: f32[8,128], index: 7, kind: output, shape index: {}]
  %s8 = sld [smem:[#allocation0]]
  $region54: #{rnn_gru_forward.3} parent=0
    _
  %s10 = ssub.s32 1, %s8
  %s11 = scalar_select 0, %s10, %s8
  $region1: #{rnn_gru_forward.3} parent=0
    #allocation5 [shape = 'u8[98304]{0}', space=vmem, size = 0x18000, scoped, tag = 'input window, operand 1, single buffered']
    #allocation6 [shape = 's32[1]{0}', space=sflag, size = 0x4, scoped, tag = 'scoped memory for rnn_gru_forward.3']
    #allocation7 [shape = 's32[1]{0}', space=sflag, size = 0x4, scoped, tag = 'scoped memory for rnn_gru_forward.3']
    #allocation8 [shape = 'u8[98304]{0}', space=vmem, size = 0x18000, scoped, tag = 'input window, operand 2, single buffered']
    #allocation9 [shape = 's32[1]{0}', space=sflag, size = 0x4, scoped, tag = 'scoped memory for rnn_gru_forward.3']
    #allocation10 [shape = 'u8[4096]{0}', space=vmem, size = 0x1000, scoped, tag = 'output window, operand 0, single buffered']
    %12 = vsyncpa [#allocation6], 0
    %13 = vsyncpa [#allocation9], 0
    %14 = vsyncpa [#allocation7], 0
    // Predicated region
    $region2: #{rnn_gru_forward.3} parent=1 // pred_check
      _
    $region3: #{rnn_gru_forward.3} parent=1 // pred_check_branch
      %16 = sbr.rel (0) target = $region5
    $region4: #{rnn_gru_forward.3} parent=1 // pred_region
      _
    $region5: #{rnn_gru_forward.3} parent=1 // pred_fallthru
      _
    // Predicated region
    $region6: #{rnn_gru_forward.3} parent=1 // pred_check
      _
    $region7: #{rnn_gru_forward.3} parent=1 // pred_check_branch
      %18 = sbr.rel (0) target = $region9
    $region8: #{rnn_gru_forward.3} parent=1 // pred_region
      %s20 = ssub.s32 3072, 3072
      %21 = vsyncadd [#allocation6], %s20
      %s22 = sshll.u32 [#allocation5], 4
      %s23 = int_to_ptr.vmem [resolvable:$true] %s22
      %28 = dma.hbm_to_vmem [thread:$0]  %s1, 3072, %s23, [#allocation6], 192, 192, 12
    $region9: #{rnn_gru_forward.3} parent=1 // pred_fallthru
      _
    // Predicated region
    $region10: #{rnn_gru_forward.3} parent=1 // pred_check
      _
    $region11: #{rnn_gru_forward.3} parent=1 // pred_check_branch
      %30 = sbr.rel (0) target = $region13
    $region12: #{rnn_gru_forward.3} parent=1 // pred_region
      %s32 = ssub.s32 3072, 3072
      %33 = vsyncadd [#allocation9], %s32
      %s34 = sshll.u32 [#allocation8], 4
      %s35 = int_to_ptr.vmem [resolvable:$true] %s34
      %40 = dma.hbm_to_vmem [thread:$0]  %s2, 3072, %s35, [#allocation9], 192, 192, 12
    $region13: #{rnn_gru_forward.3} parent=1 // pred_fallthru
      _
    // Predicated region
    $region14: #{rnn_gru_forward.3} parent=1 // pred_check
      _
    $region15: #{rnn_gru_forward.3} parent=1 // pred_check_branch
      %42 = sbr.rel (0) target = $region17
    $region16: #{rnn_gru_forward.3} parent=1 // pred_region
      _
    $region17: #{rnn_gru_forward.3} parent=1 // pred_fallthru
      _
    // Predicated region
    $region18: #{rnn_gru_forward.3} parent=1 // pred_check
      _
    $region19: #{rnn_gru_forward.3} parent=1 // pred_check_branch
      %44 = sbr.rel (0) target = $region21
    $region20: #{rnn_gru_forward.3} parent=1 // pred_region
      _
    $region21: #{rnn_gru_forward.3} parent=1 // pred_fallthru
      _
    // Predicated region
    $region22: #{rnn_gru_forward.3} parent=1 // pred_check
      _
    $region23: #{rnn_gru_forward.3} parent=1 // pred_check_branch
      %46 = sbr.rel (0) target = $region25
    $region24: #{rnn_gru_forward.3} parent=1 // pred_region
      _
    $region25: #{rnn_gru_forward.3} parent=1 // pred_fallthru
      _
    // Predicated region
    $region26: #{rnn_gru_forward.3} parent=1 // pred_check
      _
    $region27: #{rnn_gru_forward.3} parent=1 // pred_check_branch
      %48 = sbr.rel (0) target = $region29
    $region28: #{rnn_gru_forward.3} parent=1 // pred_region
      _
    $region29: #{rnn_gru_forward.3} parent=1 // pred_fallthru
      _
    // Predicated region
    $region30: #{rnn_gru_forward.3} parent=1 // pred_check
      _
    $region31: #{rnn_gru_forward.3} parent=1 // pred_check_branch
      %50 = sbr.rel (0) target = $region33
    $region32: #{rnn_gru_forward.3} parent=1 // pred_region
      %51 = dma.done [#allocation6], 3072
    $region33: #{rnn_gru_forward.3} parent=1 // pred_fallthru
      _
    // Predicated region
    $region34: #{rnn_gru_forward.3} parent=1 // pred_check
      _
    $region35: #{rnn_gru_forward.3} parent=1 // pred_check_branch
      %53 = sbr.rel (0) target = $region37
    $region36: #{rnn_gru_forward.3} parent=1 // pred_region
      %54 = dma.done [#allocation9], 3072
    $region37: #{rnn_gru_forward.3} parent=1 // pred_fallthru
      _
    %p56 = scmp.eq.s32.totalorder 0, 0
    // Predicated region
    $region38: #{rnn_gru_forward.3} parent=1 // pred_check
      %p57 = pneg %p56
    $region39: #{rnn_gru_forward.3} parent=1 // pred_check_branch
      %59 = sbr.rel (%p57) target = $region41
    $region40: #{rnn_gru_forward.3} parent=1 // pred_region
      %60 = vst [vmem:[#allocation2] sm:$0xff] 0.0
      %61 = vst [vmem:[#allocation4] sm:$0xff] 0.0
    $region41: #{rnn_gru_forward.3} parent=1 // pred_fallthru
      _
    %v62 = vld [vmem:[%s0] sm:$0xf]
    %v63 = vld [vmem:[%s0 + $0x4] sm:$0xf]
    %v64 = vld [vmem:[%s0 + $0x8] sm:$0xf]
    %v65 = vld [vmem:[%s0 + $0xc] sm:$0xf]
    %v66 = vld [vmem:[%s0 + $0x10] sm:$0xf]
    %v67 = vld [vmem:[%s0 + $0x14] sm:$0xf]
    %v68 = vld [vmem:[%s0 + $0x18] sm:$0xf]
    %v69 = vld [vmem:[%s0 + $0x1c] sm:$0xf]
    %v70 = vunpack.c.l.bf16 %v62
    %v71 = vunpack.c.l.bf16 %v63
    %v72 = vunpack.c.l.bf16 %v64
    %v73 = vunpack.c.l.bf16 %v65
    %v74 = vunpack.c.l.bf16 %v66
    %v75 = vunpack.c.l.bf16 %v67
    %v76 = vunpack.c.l.bf16 %v68
    %v77 = vunpack.c.l.bf16 %v69
    %v78 = vpack.c.bf16 %v71, %v70
    %v79 = vpack.c.bf16 %v73, %v72
    %v80 = vpack.c.bf16 %v75, %v74
    %v81 = vpack.c.bf16 %v77, %v76
    %v82 = vld [vmem:[#allocation5] sm:$0xff]
    %v83 = vld [vmem:[#allocation5 + $0x8] sm:$0xf]
    %v84 = vld [vmem:[#allocation5 + $0xc] sm:$0xff]
    %v85 = vld [vmem:[#allocation5 + $0x14] sm:$0xf]
    %v86 = vld [vmem:[#allocation5 + $0x18] sm:$0xff]
    %v87 = vld [vmem:[#allocation5 + $0x20] sm:$0xf]
    %v88 = vld [vmem:[#allocation5 + $0x24] sm:$0xff]
    %v89 = vld [vmem:[#allocation5 + $0x2c] sm:$0xf]
    %v90 = vld [vmem:[#allocation5 + $0x30] sm:$0xff]
    %v91 = vld [vmem:[#allocation5 + $0x38] sm:$0xf]
    %v92 = vld [vmem:[#allocation5 + $0x3c] sm:$0xff]
    %v93 = vld [vmem:[#allocation5 + $0x44] sm:$0xf]
    %v94 = vld [vmem:[#allocation5 + $0x48] sm:$0xff]
    %v95 = vld [vmem:[#allocation5 + $0x50] sm:$0xf]
    %v96 = vld [vmem:[#allocation5 + $0x54] sm:$0xff]
    %v97 = vld [vmem:[#allocation5 + $0x5c] sm:$0xf]
    %v98 = vld [vmem:[#allocation5 + $0x60] sm:$0xff]
    %v99 = vld [vmem:[#allocation5 + $0x68] sm:$0xf]
    %v100 = vld [vmem:[#allocation5 + $0x6c] sm:$0xff]
    %v101 = vld [vmem:[#allocation5 + $0x74] sm:$0xf]
    %v102 = vld [vmem:[#allocation5 + $0x78] sm:$0xff]
    %v103 = vld [vmem:[#allocation5 + $0x80] sm:$0xf]
    %v104 = vld [vmem:[#allocation5 + $0x84] sm:$0xff]
    %v105 = vld [vmem:[#allocation5 + $0x8c] sm:$0xf]
    %v106 = vld [vmem:[#allocation5 + $0x90] sm:$0xff]
    %v107 = vld [vmem:[#allocation5 + $0x98] sm:$0xf]
    %v108 = vld [vmem:[#allocation5 + $0x9c] sm:$0xff]
    %v109 = vld [vmem:[#allocation5 + $0xa4] sm:$0xf]
    %v110 = vld [vmem:[#allocation5 + $0xa8] sm:$0xff]
    %v111 = vld [vmem:[#allocation5 + $0xb0] sm:$0xf]
    %v112 = vld [vmem:[#allocation5 + $0xb4] sm:$0xff]
    %v113 = vld [vmem:[#allocation5 + $0xbc] sm:$0xf]
    %v114 = vld [vmem:[%s3] sm:$0x7]
    %v116 = vlaneseq
    %v117 = vshrl.u32 %v116, 7
    %v118 = vsub.s32 0, %v117
    %v119 = vrot.slane %v114, %v118
    %v120 = vlaneseq
    %v121 = vshrl.u32 %v120, 7
    %v122 = vsub.s32 1, %v121
    %v123 = vrot.slane %v114, %v122
    %v124 = vlaneseq
    %v125 = vshrl.u32 %v124, 7
    %v126 = vsub.s32 2, %v125
    %v127 = vrot.slane %v114, %v126
    %v163 = vunpack.c.l.b16 %v82
    %v164 = vunpack.c.h.b16 %v82
    %v165 = vunpack.c.l.b16 %v83
    %v166 = vunpack.c.l.b16 %v84
    %v167 = vunpack.c.h.b16 %v84
    %v168 = vunpack.c.l.b16 %v85
    %v169 = vunpack.c.l.b16 %v86
    %v170 = vunpack.c.h.b16 %v86
    %v171 = vunpack.c.l.b16 %v87
    %v172 = vunpack.c.l.b16 %v88
    %v173 = vunpack.c.h.b16 %v88
    %v174 = vunpack.c.l.b16 %v89
    %v175 = vunpack.c.l.b16 %v90
    %v176 = vunpack.c.h.b16 %v90
    %v177 = vunpack.c.l.b16 %v91
    %v178 = vunpack.c.l.b16 %v92
    %v179 = vunpack.c.h.b16 %v92
    %v180 = vunpack.c.l.b16 %v93
    %v181 = vunpack.c.l.b16 %v94
    %v182 = vunpack.c.h.b16 %v94
    %v183 = vunpack.c.l.b16 %v95
    %v184 = vunpack.c.l.b16 %v96
    %v185 = vunpack.c.h.b16 %v96
    %v186 = vunpack.c.l.b16 %v97
    %v187 = vunpack.c.l.b16 %v98
    %v188 = vunpack.c.h.b16 %v98
    %v189 = vunpack.c.l.b16 %v99
    %v190 = vunpack.c.l.b16 %v100
    %v191 = vunpack.c.h.b16 %v100
    %v192 = vunpack.c.l.b16 %v101
    %v193 = vunpack.c.l.b16 %v102
    %v194 = vunpack.c.h.b16 %v102
    %v195 = vunpack.c.l.b16 %v103
    %v196 = vunpack.c.l.b16 %v104
    %v197 = vunpack.c.h.b16 %v104
    %v198 = vunpack.c.l.b16 %v105
    %v199 = vunpack.c.l.b16 %v106
    %v200 = vunpack.c.h.b16 %v106
    %v201 = vunpack.c.l.b16 %v107
    %v202 = vunpack.c.l.b16 %v108
    %v203 = vunpack.c.h.b16 %v108
    %v204 = vunpack.c.l.b16 %v109
    %v205 = vunpack.c.l.b16 %v110
    %v206 = vunpack.c.h.b16 %v110
    %v207 = vunpack.c.l.b16 %v111
    %v208 = vunpack.c.l.b16 %v112
    %v209 = vunpack.c.h.b16 %v112
    %v210 = vunpack.c.l.b16 %v113
    %v211 = vpack.c.b16 %v166, %v163
    %v212 = vpack.c.b16 %v167, %v164
    %v213 = vpack.c.b16 %v168, %v165
    %v214 = vpack.c.b16 %v172, %v169
    %v215 = vpack.c.b16 %v173, %v170
    %v216 = vpack.c.b16 %v174, %v171
    %v217 = vpack.c.b16 %v178, %v175
    %v218 = vpack.c.b16 %v179, %v176
    %v219 = vpack.c.b16 %v180, %v177
    %v220 = vpack.c.b16 %v184, %v181
    %v221 = vpack.c.b16 %v185, %v182
    %v222 = vpack.c.b16 %v186, %v183
    %v223 = vpack.c.b16 %v190, %v187
    %v224 = vpack.c.b16 %v191, %v188
    %v225 = vpack.c.b16 %v192, %v189
    %v226 = vpack.c.b16 %v196, %v193
    %v227 = vpack.c.b16 %v197, %v194
    %v228 = vpack.c.b16 %v198, %v195
    %v229 = vpack.c.b16 %v202, %v199
    %v230 = vpack.c.b16 %v203, %v200
    %v231 = vpack.c.b16 %v204, %v201
    %v232 = vpack.c.b16 %v208, %v205
    %v233 = vpack.c.b16 %v209, %v206
    %v234 = vpack.c.b16 %v210, %v207
    %259 = vmatprep.subr.bf16.mxu0 %v233
    %260 = vmatpush1.bf16.msra.mxu0 %v232
    %261 = vmatprep.subr.bf16.mxu0 %v230
    %262 = vmatpush1.bf16.msra.mxu0 %v229
    %263 = vmatprep.subr.bf16.mxu0 %v227
    %264 = vmatpush1.bf16.msra.mxu0 %v226
    %265 = vmatprep.subr.bf16.mxu0 %v224
    %266 = vmatpush1.bf16.msra.mxu0 %v223
    %267 = vmatprep.subr.bf16.mxu0 %v221
    %268 = vmatpush1.bf16.msra.mxu0 %v220
    %269 = vmatprep.subr.bf16.mxu0 %v218
    %270 = vmatpush1.bf16.msra.mxu0 %v217
    %271 = vmatprep.subr.bf16.mxu0 %v215
    %272 = vmatpush1.bf16.msra.mxu0 %v214
    %273 = vmatprep.subr.bf16.mxu0 %v212
    %274 = vmatpush1.bf16.msra.mxu0 %v211
    %275 = vmatprep.subr.bf16.mxu0 0
    %276 = vmatpush2.bf16.msra.mxu0 0
    %277 = vmatprep.subr.bf16.mxu0 0
    %278 = vmatpush2.bf16.msra.mxu0 0
    %279 = vmatprep.subr.bf16.mxu0 0
    %280 = vmatpush2.bf16.msra.mxu0 0
    %281 = vmatprep.subr.bf16.mxu0 0
    %282 = vmatpush2.bf16.msra.mxu0 0
    %283 = vmatprep.subr.bf16.mxu0 0
    %284 = vmatpush2.bf16.msra.mxu0 0
    %285 = vmatprep.subr.bf16.mxu0 0
    %286 = vmatpush2.bf16.msra.mxu0 0
    %287 = vmatprep.subr.bf16.mxu0 0
    %288 = vmatpush2.bf16.msra.mxu0 0
    %289 = vmatprep.subr.bf16.mxu0 0
    %290 = vmatpush2.bf16.msra.mxu0 0
    %291 = vmatprep.mubr.bf16.mxu0 0
    %292 = vmatmul.mubr.bf16.gmra.mxu0 %v78
    %v293 = vpop.f32.mrf.mxu0
    %v294 = vadd.f32 %v119, %v293
    %v295 = vpop.f32.mrf.mxu0
    %v296 = vadd.f32 %v123, %v295
    %v297 = vpop.f32.mrf.mxu0
    %v298 = vadd.f32 %v119, %v297
    %v299 = vpop.f32.mrf.mxu0
    %v300 = vadd.f32 %v123, %v299
    %301 = vmatprep.mubr.bf16.mxu0 0
    %302 = vmatmul.mubr.bf16.gmra.mxu0 %v79
    %v303 = vpop.f32.mrf.mxu0
    %v304 = vadd.f32 %v119, %v303
    %v305 = vpop.f32.mrf.mxu0
    %v306 = vadd.f32 %v123, %v305
    %v307 = vpop.f32.mrf.mxu0
    %v308 = vadd.f32 %v119, %v307
    %v309 = vpop.f32.mrf.mxu0
    %v310 = vadd.f32 %v123, %v309
    %311 = vmatprep.mubr.bf16.mxu0 0
    %312 = vmatmul.mubr.bf16.gmra.mxu0 %v80
    %v313 = vpop.f32.mrf.mxu0
    %v314 = vadd.f32 %v119, %v313
    %v315 = vpop.f32.mrf.mxu0
    %v316 = vadd.f32 %v123, %v315
    %v317 = vpop.f32.mrf.mxu0
    %v318 = vadd.f32 %v119, %v317
    %v319 = vpop.f32.mrf.mxu0
    %v320 = vadd.f32 %v123, %v319
    %321 = vmatprep.mubr.bf16.mxu0 0
    %322 = vmatmul.mubr.bf16.gmra.mxu0 %v81
    %v323 = vpop.f32.mrf.mxu0
    %v324 = vadd.f32 %v119, %v323
    %v325 = vpop.f32.mrf.mxu0
    %v326 = vadd.f32 %v123, %v325
    %v327 = vpop.f32.mrf.mxu0
    %v328 = vadd.f32 %v119, %v327
    %v329 = vpop.f32.mrf.mxu0
    %v330 = vadd.f32 %v123, %v329
    %331 = vdwg.mxu0
    %332 = vmatprep.subr.bf16.mxu0 0
    %333 = vmatpush1.bf16.msra.mxu0 %v234
    %334 = vmatprep.subr.bf16.mxu0 0
    %335 = vmatpush1.bf16.msra.mxu0 %v231
    %336 = vmatprep.subr.bf16.mxu0 0
    %337 = vmatpush1.bf16.msra.mxu0 %v228
    %338 = vmatprep.subr.bf16.mxu0 0
    %339 = vmatpush1.bf16.msra.mxu0 %v225
    %340 = vmatprep.subr.bf16.mxu0 0
    %341 = vmatpush1.bf16.msra.mxu0 %v222
    %342 = vmatprep.subr.bf16.mxu0 0
    %343 = vmatpush1.bf16.msra.mxu0 %v219
    %344 = vmatprep.subr.bf16.mxu0 0
    %345 = vmatpush1.bf16.msra.mxu0 %v216
    %346 = vmatprep.subr.bf16.mxu0 0
    %347 = vmatpush1.bf16.msra.mxu0 %v213
    %348 = vmatprep.subr.bf16.mxu0 0
    %349 = vmatpush2.bf16.msra.mxu0 0
    %350 = vmatprep.subr.bf16.mxu0 0
    %351 = vmatpush2.bf16.msra.mxu0 0
    %352 = vmatprep.subr.bf16.mxu0 0
    %353 = vmatpush2.bf16.msra.mxu0 0
    %354 = vmatprep.subr.bf16.mxu0 0
    %355 = vmatpush2.bf16.msra.mxu0 0
    %356 = vmatprep.subr.bf16.mxu0 0
    %357 = vmatpush2.bf16.msra.mxu0 0
    %358 = vmatprep.subr.bf16.mxu0 0
    %359 = vmatpush2.bf16.msra.mxu0 0
    %360 = vmatprep.subr.bf16.mxu0 0
    %361 = vmatpush2.bf16.msra.mxu0 0
    %362 = vmatprep.subr.bf16.mxu0 0
    %363 = vmatpush2.bf16.msra.mxu0 0
    %364 = vmatprep.mubr.bf16.mxu0 0
    %365 = vmatmul.mubr.bf16.gmra.mxu0 %v78
    %v366 = vpop.f32.mrf.mxu0
    %v367 = vadd.f32 %v127, %v366
    %v368 = vpop.f32.mrf.mxu0
    %v369 = vpop.f32.mrf.mxu0
    %v370 = vadd.f32 %v127, %v369
    %v371 = vpop.f32.mrf.mxu0
    %372 = vmatprep.mubr.bf16.mxu0 0
    %373 = vmatmul.mubr.bf16.gmra.mxu0 %v79
    %v374 = vpop.f32.mrf.mxu0
    %v375 = vadd.f32 %v127, %v374
    %v376 = vpop.f32.mrf.mxu0
    %v377 = vpop.f32.mrf.mxu0
    %v378 = vadd.f32 %v127, %v377
    %v379 = vpop.f32.mrf.mxu0
    %380 = vmatprep.mubr.bf16.mxu0 0
    %381 = vmatmul.mubr.bf16.gmra.mxu0 %v80
    %v382 = vpop.f32.mrf.mxu0
    %v383 = vadd.f32 %v127, %v382
    %v384 = vpop.f32.mrf.mxu0
    %v385 = vpop.f32.mrf.mxu0
    %v386 = vadd.f32 %v127, %v385
    %v387 = vpop.f32.mrf.mxu0
    %388 = vmatprep.mubr.bf16.mxu0 0
    %389 = vmatmul.mubr.bf16.gmra.mxu0 %v81
    %v390 = vpop.f32.mrf.mxu0
    %v391 = vadd.f32 %v127, %v390
    %v392 = vpop.f32.mrf.mxu0
    %v393 = vpop.f32.mrf.mxu0
    %v394 = vadd.f32 %v127, %v393
    %v395 = vpop.f32.mrf.mxu0
    %396 = vdwg.mxu0
    %397 = vst [vmem:[#allocation3] sm:$0xff] %v294
    %398 = vst [vmem:[#allocation3 + $0x8] sm:$0xff] %v296
    %399 = vst [vmem:[#allocation3 + $0x10] sm:$0xff] %v367
    %400 = vst [vmem:[#allocation3 + $0x18] sm:$0xff] %v298
    %401 = vst [vmem:[#allocation3 + $0x20] sm:$0xff] %v300
    %402 = vst [vmem:[#allocation3 + $0x28] sm:$0xff] %v370
    %403 = vst [vmem:[#allocation3 + $0x30] sm:$0xff] %v304
    %404 = vst [vmem:[#allocation3 + $0x38] sm:$0xff] %v306
    %405 = vst [vmem:[#allocation3 + $0x40] sm:$0xff] %v375
    %406 = vst [vmem:[#allocation3 + $0x48] sm:$0xff] %v308
    %407 = vst [vmem:[#allocation3 + $0x50] sm:$0xff] %v310
    %408 = vst [vmem:[#allocation3 + $0x58] sm:$0xff] %v378
    %409 = vst [vmem:[#allocation3 + $0x60] sm:$0xff] %v314
    %410 = vst [vmem:[#allocation3 + $0x68] sm:$0xff] %v316
    %411 = vst [vmem:[#allocation3 + $0x70] sm:$0xff] %v383
    %412 = vst [vmem:[#allocation3 + $0x78] sm:$0xff] %v318
    %413 = vst [vmem:[#allocation3 + $0x80] sm:$0xff] %v320
    %414 = vst [vmem:[#allocation3 + $0x88] sm:$0xff] %v386
    %415 = vst [vmem:[#allocation3 + $0x90] sm:$0xff] %v324
    %416 = vst [vmem:[#allocation3 + $0x98] sm:$0xff] %v326
    %417 = vst [vmem:[#allocation3 + $0xa0] sm:$0xff] %v391
    %418 = vst [vmem:[#allocation3 + $0xa8] sm:$0xff] %v328
    %419 = vst [vmem:[#allocation3 + $0xb0] sm:$0xff] %v330
    %420 = vst [vmem:[#allocation3 + $0xb8] sm:$0xff] %v394
    %v421 = vld [vmem:[#allocation8] sm:$0xff]
    %v422 = vld [vmem:[#allocation8 + $0x8] sm:$0xf]
    %v423 = vld [vmem:[#allocation8 + $0xc] sm:$0xff]
    %v424 = vld [vmem:[#allocation8 + $0x14] sm:$0xf]
    %v425 = vld [vmem:[#allocation8 + $0x18] sm:$0xff]
    %v426 = vld [vmem:[#allocation8 + $0x20] sm:$0xf]
    %v427 = vld [vmem:[#allocation8 + $0x24] sm:$0xff]
    %v428 = vld [vmem:[#allocation8 + $0x2c] sm:$0xf]
    %v429 = vld [vmem:[#allocation8 + $0x30] sm:$0xff]
    %v430 = vld [vmem:[#allocation8 + $0x38] sm:$0xf]
    %v431 = vld [vmem:[#allocation8 + $0x3c] sm:$0xff]
    %v432 = vld [vmem:[#allocation8 + $0x44] sm:$0xf]
    %v433 = vld [vmem:[#allocation8 + $0x48] sm:$0xff]
    %v434 = vld [vmem:[#allocation8 + $0x50] sm:$0xf]
    %v435 = vld [vmem:[#allocation8 + $0x54] sm:$0xff]
    %v436 = vld [vmem:[#allocation8 + $0x5c] sm:$0xf]
    %v437 = vld [vmem:[#allocation8 + $0x60] sm:$0xff]
    %v438 = vld [vmem:[#allocation8 + $0x68] sm:$0xf]
    %v439 = vld [vmem:[#allocation8 + $0x6c] sm:$0xff]
    %v440 = vld [vmem:[#allocation8 + $0x74] sm:$0xf]
    %v441 = vld [vmem:[#allocation8 + $0x78] sm:$0xff]
    %v442 = vld [vmem:[#allocation8 + $0x80] sm:$0xf]
    %v443 = vld [vmem:[#allocation8 + $0x84] sm:$0xff]
    %v444 = vld [vmem:[#allocation8 + $0x8c] sm:$0xf]
    %v445 = vld [vmem:[#allocation8 + $0x90] sm:$0xff]
    %v446 = vld [vmem:[#allocation8 + $0x98] sm:$0xf]
    %v447 = vld [vmem:[#allocation8 + $0x9c] sm:$0xff]
    %v448 = vld [vmem:[#allocation8 + $0xa4] sm:$0xf]
    %v449 = vld [vmem:[#allocation8 + $0xa8] sm:$0xff]
    %v450 = vld [vmem:[#allocation8 + $0xb0] sm:$0xf]
    %v451 = vld [vmem:[#allocation8 + $0xb4] sm:$0xff]
    %v452 = vld [vmem:[#allocation8 + $0xbc] sm:$0xf]
    %v453 = vld [vmem:[%s4] sm:$0x1]
    %v455 = vlaneseq
    %v456 = vshrl.u32 %v455, 7
    %v457 = vsub.s32 0, %v456
    %v458 = vrot.slane %v453, %v457
    %v460 = vld [vmem:[#allocation2] sm:$0xff]
    %v461 = vpack.c.bf16 %v460, %v460
    %v494 = vunpack.c.l.b16 %v421
    %v495 = vunpack.c.h.b16 %v421
    %v496 = vunpack.c.l.b16 %v422
    %v497 = vunpack.c.l.b16 %v423
    %v498 = vunpack.c.h.b16 %v423
    %v499 = vunpack.c.l.b16 %v424
    %v500 = vunpack.c.l.b16 %v425
    %v501 = vunpack.c.h.b16 %v425
    %v502 = vunpack.c.l.b16 %v426
    %v503 = vunpack.c.l.b16 %v427
    %v504 = vunpack.c.h.b16 %v427
    %v505 = vunpack.c.l.b16 %v428
    %v506 = vunpack.c.l.b16 %v429
    %v507 = vunpack.c.h.b16 %v429
    %v508 = vunpack.c.l.b16 %v430
    %v509 = vunpack.c.l.b16 %v431
    %v510 = vunpack.c.h.b16 %v431
    %v511 = vunpack.c.l.b16 %v432
    %v512 = vunpack.c.l.b16 %v433
    %v513 = vunpack.c.h.b16 %v433
    %v514 = vunpack.c.l.b16 %v434
    %v515 = vunpack.c.l.b16 %v435
    %v516 = vunpack.c.h.b16 %v435
    %v517 = vunpack.c.l.b16 %v436
    %v518 = vunpack.c.l.b16 %v437
    %v519 = vunpack.c.h.b16 %v437
    %v520 = vunpack.c.l.b16 %v438
    %v521 = vunpack.c.l.b16 %v439
    %v522 = vunpack.c.h.b16 %v439
    %v523 = vunpack.c.l.b16 %v440
    %v524 = vunpack.c.l.b16 %v441
    %v525 = vunpack.c.h.b16 %v441
    %v526 = vunpack.c.l.b16 %v442
    %v527 = vunpack.c.l.b16 %v443
    %v528 = vunpack.c.h.b16 %v443
    %v529 = vunpack.c.l.b16 %v444
    %v530 = vunpack.c.l.b16 %v445
    %v531 = vunpack.c.h.b16 %v445
    %v532 = vunpack.c.l.b16 %v446
    %v533 = vunpack.c.l.b16 %v447
    %v534 = vunpack.c.h.b16 %v447
    %v535 = vunpack.c.l.b16 %v448
    %v536 = vunpack.c.l.b16 %v449
    %v537 = vunpack.c.h.b16 %v449
    %v538 = vunpack.c.l.b16 %v450
    %v539 = vunpack.c.l.b16 %v451
    %v540 = vunpack.c.h.b16 %v451
    %v541 = vunpack.c.l.b16 %v452
    %v542 = vpack.c.b16 %v497, %v494
    %v543 = vpack.c.b16 %v498, %v495
    %v544 = vpack.c.b16 %v499, %v496
    %v545 = vpack.c.b16 %v503, %v500
    %v546 = vpack.c.b16 %v504, %v501
    %v547 = vpack.c.b16 %v505, %v502
    %v548 = vpack.c.b16 %v509, %v506
    %v549 = vpack.c.b16 %v510, %v507
    %v550 = vpack.c.b16 %v511, %v508
    %v551 = vpack.c.b16 %v515, %v512
    %v552 = vpack.c.b16 %v516, %v513
    %v553 = vpack.c.b16 %v517, %v514
    %v554 = vpack.c.b16 %v521, %v518
    %v555 = vpack.c.b16 %v522, %v519
    %v556 = vpack.c.b16 %v523, %v520
    %v557 = vpack.c.b16 %v527, %v524
    %v558 = vpack.c.b16 %v528, %v525
    %v559 = vpack.c.b16 %v529, %v526
    %v560 = vpack.c.b16 %v533, %v530
    %v561 = vpack.c.b16 %v534, %v531
    %v562 = vpack.c.b16 %v535, %v532
    %v563 = vpack.c.b16 %v539, %v536
    %v564 = vpack.c.b16 %v540, %v537
    %v565 = vpack.c.b16 %v541, %v538
    %590 = vmatprep.subr.bf16.mxu0 %v564
    %591 = vmatpush1.bf16.msra.mxu0 %v563
    %592 = vmatprep.subr.bf16.mxu0 %v561
    %593 = vmatpush1.bf16.msra.mxu0 %v560
    %594 = vmatprep.subr.bf16.mxu0 %v558
    %595 = vmatpush1.bf16.msra.mxu0 %v557
    %596 = vmatprep.subr.bf16.mxu0 %v555
    %597 = vmatpush1.bf16.msra.mxu0 %v554
    %598 = vmatprep.subr.bf16.mxu0 %v552
    %599 = vmatpush1.bf16.msra.mxu0 %v551
    %600 = vmatprep.subr.bf16.mxu0 %v549
    %601 = vmatpush1.bf16.msra.mxu0 %v548
    %602 = vmatprep.subr.bf16.mxu0 %v546
    %603 = vmatpush1.bf16.msra.mxu0 %v545
    %604 = vmatprep.subr.bf16.mxu0 %v543
    %605 = vmatpush1.bf16.msra.mxu0 %v542
    %606 = vmatprep.subr.bf16.mxu0 0
    %607 = vmatpush2.bf16.msra.mxu0 0
    %608 = vmatprep.subr.bf16.mxu0 0
    %609 = vmatpush2.bf16.msra.mxu0 0
    %610 = vmatprep.subr.bf16.mxu0 0
    %611 = vmatpush2.bf16.msra.mxu0 0
    %612 = vmatprep.subr.bf16.mxu0 0
    %613 = vmatpush2.bf16.msra.mxu0 0
    %614 = vmatprep.subr.bf16.mxu0 0
    %615 = vmatpush2.bf16.msra.mxu0 0
    %616 = vmatprep.subr.bf16.mxu0 0
    %617 = vmatpush2.bf16.msra.mxu0 0
    %618 = vmatprep.subr.bf16.mxu0 0
    %619 = vmatpush2.bf16.msra.mxu0 0
    %620 = vmatprep.subr.bf16.mxu0 0
    %621 = vmatpush2.bf16.msra.mxu0 0
    %622 = vmatprep.mubr.bf16.mxu0 0
    %623 = vmatmul.mubr.bf16.gmra.mxu0 %v461
    %v624 = vpop.f32.mrf.mxu0
    %v625 = vadd.f32 0.0, %v624
    %v626 = vpop.f32.mrf.mxu0
    %v627 = vadd.f32 0.0, %v626
    %v628 = vpop.f32.mrf.mxu0
    %v629 = vpop.f32.mrf.mxu0
    %630 = vdwg.mxu0
    %631 = vmatprep.subr.bf16.mxu0 0
    %632 = vmatpush1.bf16.msra.mxu0 %v565
    %633 = vmatprep.subr.bf16.mxu0 0
    %634 = vmatpush1.bf16.msra.mxu0 %v562
    %635 = vmatprep.subr.bf16.mxu0 0
    %636 = vmatpush1.bf16.msra.mxu0 %v559
    %637 = vmatprep.subr.bf16.mxu0 0
    %638 = vmatpush1.bf16.msra.mxu0 %v556
    %639 = vmatprep.subr.bf16.mxu0 0
    %640 = vmatpush1.bf16.msra.mxu0 %v553
    %641 = vmatprep.subr.bf16.mxu0 0
    %642 = vmatpush1.bf16.msra.mxu0 %v550
    %643 = vmatprep.subr.bf16.mxu0 0
    %644 = vmatpush1.bf16.msra.mxu0 %v547
    %645 = vmatprep.subr.bf16.mxu0 0
    %646 = vmatpush1.bf16.msra.mxu0 %v544
    %647 = vmatprep.subr.bf16.mxu0 0
    %648 = vmatpush2.bf16.msra.mxu0 0
    %649 = vmatprep.subr.bf16.mxu0 0
    %650 = vmatpush2.bf16.msra.mxu0 0
    %651 = vmatprep.subr.bf16.mxu0 0
    %652 = vmatpush2.bf16.msra.mxu0 0
    %653 = vmatprep.subr.bf16.mxu0 0
    %654 = vmatpush2.bf16.msra.mxu0 0
    %655 = vmatprep.subr.bf16.mxu0 0
    %656 = vmatpush2.bf16.msra.mxu0 0
    %657 = vmatprep.subr.bf16.mxu0 0
    %658 = vmatpush2.bf16.msra.mxu0 0
    %659 = vmatprep.subr.bf16.mxu0 0
    %660 = vmatpush2.bf16.msra.mxu0 0
    %661 = vmatprep.subr.bf16.mxu0 0
    %662 = vmatpush2.bf16.msra.mxu0 0
    %663 = vmatprep.mubr.bf16.mxu0 0
    %664 = vmatmul.mubr.bf16.gmra.mxu0 %v461
    %v665 = vpop.f32.mrf.mxu0
    %v666 = vadd.f32 0.0, %v665
    %v667 = vpop.f32.mrf.mxu0
    %v668 = vpop.f32.mrf.mxu0
    %v669 = vpop.f32.mrf.mxu0
    %670 = vdwg.mxu0
    %v671 = vld [vmem:[#allocation3] sm:$0xff]
    %v672 = vld [vmem:[#allocation3 + $0x8] sm:$0xff]
    %v673 = vld [vmem:[#allocation3 + $0x10] sm:$0xff]
    %v674 = vadd.f32 %v671, %v625
    %v675 = vadd.f32 %v672, %v627
    %v676 = vxor.u32 %v674, 2147483648
    %v677 = vxor.u32 %v675, 2147483648
    %v678 = vmul.f32 %v676, 1.442695
    %v679 = vpow.pop %v678
    %v680 = vmul.f32 %v677, 1.442695
    %v681 = vpow.pop %v680
    %v682 = vadd.f32 %v679, 1.0
    %v683 = vadd.f32 %v681, 1.0
    %v684 = vrcp.pop %v682
    %v685 = vmul.f32 1.0, %v684
    %v686 = vrcp.pop %v683
    %v687 = vmul.f32 1.0, %v686
    %v688 = vadd.f32 %v666, %v458
    %v689 = vmul.f32 %v685, %v688
    %v690 = vadd.f32 %v673, %v689
    %v691 = vtanh.pop %v690
    %v692 = vsub.f32 %v460, %v691
    %v693 = vmul.f32 %v687, %v692
    %v694 = vadd.f32 %v691, %v693
    %v695 = vld [vmem:[#allocation4] sm:$0xff]
    %v696 = vpack.c.bf16 %v694, %v694
    %v697 = vld [vmem:[%s5] sm:$0xf]
    %v698 = vld [vmem:[%s5 + $0x4] sm:$0xf]
    %v699 = vld [vmem:[%s5 + $0x8] sm:$0xf]
    %v700 = vld [vmem:[%s5 + $0xc] sm:$0xf]
    %v701 = vld [vmem:[%s5 + $0x10] sm:$0xf]
    %v702 = vld [vmem:[%s5 + $0x14] sm:$0xf]
    %v703 = vld [vmem:[%s5 + $0x18] sm:$0xf]
    %v704 = vld [vmem:[%s5 + $0x1c] sm:$0xf]
    %v705 = vld [vmem:[%s5 + $0x20] sm:$0xf]
    %v706 = vld [vmem:[%s5 + $0x24] sm:$0xf]
    %v707 = vld [vmem:[%s5 + $0x28] sm:$0xf]
    %v708 = vld [vmem:[%s5 + $0x2c] sm:$0xf]
    %v709 = vld [vmem:[%s5 + $0x30] sm:$0xf]
    %v710 = vld [vmem:[%s5 + $0x34] sm:$0xf]
    %v711 = vld [vmem:[%s5 + $0x38] sm:$0xf]
    %v712 = vld [vmem:[%s5 + $0x3c] sm:$0xf]
    %v729 = vunpack.c.l.b16 %v697
    %v730 = vunpack.c.l.b16 %v698
    %v731 = vunpack.c.l.b16 %v699
    %v732 = vunpack.c.l.b16 %v700
    %v733 = vunpack.c.l.b16 %v701
    %v734 = vunpack.c.l.b16 %v702
    %v735 = vunpack.c.l.b16 %v703
    %v736 = vunpack.c.l.b16 %v704
    %v737 = vunpack.c.l.b16 %v705
    %v738 = vunpack.c.l.b16 %v706
    %v739 = vunpack.c.l.b16 %v707
    %v740 = vunpack.c.l.b16 %v708
    %v741 = vunpack.c.l.b16 %v709
    %v742 = vunpack.c.l.b16 %v710
    %v743 = vunpack.c.l.b16 %v711
    %v744 = vunpack.c.l.b16 %v712
    %v745 = vpack.c.b16 %v730, %v729
    %v746 = vpack.c.b16 %v732, %v731
    %v747 = vpack.c.b16 %v734, %v733
    %v748 = vpack.c.b16 %v736, %v735
    %v749 = vpack.c.b16 %v738, %v737
    %v750 = vpack.c.b16 %v740, %v739
    %v751 = vpack.c.b16 %v742, %v741
    %v752 = vpack.c.b16 %v744, %v743
    %761 = vmatprep.subr.bf16.mxu0 0
    %762 = vmatpush1.bf16.msra.mxu0 %v752
    %763 = vmatprep.subr.bf16.mxu0 0
    %764 = vmatpush1.bf16.msra.mxu0 %v751
    %765 = vmatprep.subr.bf16.mxu0 0
    %766 = vmatpush1.bf16.msra.mxu0 %v750
    %767 = vmatprep.subr.bf16.mxu0 0
    %768 = vmatpush1.bf16.msra.mxu0 %v749
    %769 = vmatprep.subr.bf16.mxu0 0
    %770 = vmatpush1.bf16.msra.mxu0 %v748
    %771 = vmatprep.subr.bf16.mxu0 0
    %772 = vmatpush1.bf16.msra.mxu0 %v747
    %773 = vmatprep.subr.bf16.mxu0 0
    %774 = vmatpush1.bf16.msra.mxu0 %v746
    %775 = vmatprep.subr.bf16.mxu0 0
    %776 = vmatpush1.bf16.msra.mxu0 %v745
    %777 = vmatprep.subr.bf16.mxu0 0
    %778 = vmatpush2.bf16.msra.mxu0 0
    %779 = vmatprep.subr.bf16.mxu0 0
    %780 = vmatpush2.bf16.msra.mxu0 0
    %781 = vmatprep.subr.bf16.mxu0 0
    %782 = vmatpush2.bf16.msra.mxu0 0
    %783 = vmatprep.subr.bf16.mxu0 0
    %784 = vmatpush2.bf16.msra.mxu0 0
    %785 = vmatprep.subr.bf16.mxu0 0
    %786 = vmatpush2.bf16.msra.mxu0 0
    %787 = vmatprep.subr.bf16.mxu0 0
    %788 = vmatpush2.bf16.msra.mxu0 0
    %789 = vmatprep.subr.bf16.mxu0 0
    %790 = vmatpush2.bf16.msra.mxu0 0
    %791 = vmatprep.subr.bf16.mxu0 0
    %792 = vmatpush2.bf16.msra.mxu0 0
    %793 = vmatprep.mubr.bf16.mxu0 0
    %794 = vmatmul.mubr.bf16.gmra.mxu0 %v696
    %v795 = vpop.f32.mrf.mxu0
    %v796 = vadd.f32 0.0, %v795
    %v797 = vpop.f32.mrf.mxu0
    %v798 = vpop.f32.mrf.mxu0
    %v799 = vpop.f32.mrf.mxu0
    %800 = vdwg.mxu0
    %v801 = vadd.f32 %v695, %v796
    %802 = vst [vmem:[#allocation4] sm:$0xff] %v801
    %803 = vmatprep.subr.bf16.mxu0 %v564
    %804 = vmatpush1.bf16.msra.mxu0 %v563
    %805 = vmatprep.subr.bf16.mxu0 %v561
    %806 = vmatpush1.bf16.msra.mxu0 %v560
    %807 = vmatprep.subr.bf16.mxu0 %v558
    %808 = vmatpush1.bf16.msra.mxu0 %v557
    %809 = vmatprep.subr.bf16.mxu0 %v555
    %810 = vmatpush1.bf16.msra.mxu0 %v554
    %811 = vmatprep.subr.bf16.mxu0 %v552
    %812 = vmatpush1.bf16.msra.mxu0 %v551
    %813 = vmatprep.subr.bf16.mxu0 %v549
    %814 = vmatpush1.bf16.msra.mxu0 %v548
    %815 = vmatprep.subr.bf16.mxu0 %v546
    %816 = vmatpush1.bf16.msra.mxu0 %v545
    %817 = vmatprep.subr.bf16.mxu0 %v543
    %818 = vmatpush1.bf16.msra.mxu0 %v542
    %819 = vmatprep.subr.bf16.mxu0 0
    %820 = vmatpush2.bf16.msra.mxu0 0
    %821 = vmatprep.subr.bf16.mxu0 0
    %822 = vmatpush2.bf16.msra.mxu0 0
    %823 = vmatprep.subr.bf16.mxu0 0
    %824 = vmatpush2.bf16.msra.mxu0 0
    %825 = vmatprep.subr.bf16.mxu0 0
    %826 = vmatpush2.bf16.msra.mxu0 0
    %827 = vmatprep.subr.bf16.mxu0 0
    %828 = vmatpush2.bf16.msra.mxu0 0
    %829 = vmatprep.subr.bf16.mxu0 0
    %830 = vmatpush2.bf16.msra.mxu0 0
    %831 = vmatprep.subr.bf16.mxu0 0
    %832 = vmatpush2.bf16.msra.mxu0 0
    %833 = vmatprep.subr.bf16.mxu0 0
    %834 = vmatpush2.bf16.msra.mxu0 0
    %835 = vmatprep.mubr.bf16.mxu0 0
    %836 = vmatmul.mubr.bf16.gmra.mxu0 %v696
    %v837 = vpop.f32.mrf.mxu0
    %v838 = vadd.f32 0.0, %v837
    %v839 = vpop.f32.mrf.mxu0
    %v840 = vadd.f32 0.0, %v839
    %v841 = vpop.f32.mrf.mxu0
    %v842 = vpop.f32.mrf.mxu0
    %843 = vdwg.mxu0
    %844 = vmatprep.subr.bf16.mxu0 0
    %845 = vmatpush1.bf16.msra.mxu0 %v565
    %846 = vmatprep.subr.bf16.mxu0 0
    %847 = vmatpush1.bf16.msra.mxu0 %v562
    %848 = vmatprep.subr.bf16.mxu0 0
    %849 = vmatpush1.bf16.msra.mxu0 %v559
    %850 = vmatprep.subr.bf16.mxu0 0
    %851 = vmatpush1.bf16.msra.mxu0 %v556
    %852 = vmatprep.subr.bf16.mxu0 0
    %853 = vmatpush1.bf16.msra.mxu0 %v553
    %854 = vmatprep.subr.bf16.mxu0 0
    %855 = vmatpush1.bf16.msra.mxu0 %v550
    %856 = vmatprep.subr.bf16.mxu0 0
    %857 = vmatpush1.bf16.msra.mxu0 %v547
    %858 = vmatprep.subr.bf16.mxu0 0
    %859 = vmatpush1.bf16.msra.mxu0 %v544
    %860 = vmatprep.subr.bf16.mxu0 0
    %861 = vmatpush2.bf16.msra.mxu0 0
    %862 = vmatprep.subr.bf16.mxu0 0
    %863 = vmatpush2.bf16.msra.mxu0 0
    %864 = vmatprep.subr.bf16.mxu0 0
    %865 = vmatpush2.bf16.msra.mxu0 0
    %866 = vmatprep.subr.bf16.mxu0 0
    %867 = vmatpush2.bf16.msra.mxu0 0
    %868 = vmatprep.subr.bf16.mxu0 0
    %869 = vmatpush2.bf16.msra.mxu0 0
    %870 = vmatprep.subr.bf16.mxu0 0
    %871 = vmatpush2.bf16.msra.mxu0 0
    %872 = vmatprep.subr.bf16.mxu0 0
    %873 = vmatpush2.bf16.msra.mxu0 0
    %874 = vmatprep.subr.bf16.mxu0 0
    %875 = vmatpush2.bf16.msra.mxu0 0
    %876 = vmatprep.mubr.bf16.mxu0 0
    %877 = vmatmul.mubr.bf16.gmra.mxu0 %v696
    %v878 = vpop.f32.mrf.mxu0
    %v879 = vadd.f32 0.0, %v878
    %v880 = vpop.f32.mrf.mxu0
    %v881 = vpop.f32.mrf.mxu0
    %v882 = vpop.f32.mrf.mxu0
    %883 = vdwg.mxu0
    %s884 = scalar_lea.vmem [#allocation3], 24
    %v885 = vld [vmem:[%s884] sm:$0xff]
    %v886 = vld [vmem:[%s884 + $0x8] sm:$0xff]
    %v887 = vld [vmem:[%s884 + $0x10] sm:$0xff]
    %v888 = vadd.f32 %v885, %v838
    %v889 = vadd.f32 %v886, %v840
    %v890 = vxor.u32 %v888, 2147483648
    %v891 = vxor.u32 %v889, 2147483648
    %v892 = vmul.f32 %v890, 1.442695
    %v893 = vpow.pop %v892
    %v894 = vmul.f32 %v891, 1.442695
    %v895 = vpow.pop %v894
    %v896 = vadd.f32 %v893, 1.0
    %v897 = vadd.f32 %v895, 1.0
    %v898 = vrcp.pop %v896
    %v899 = vmul.f32 1.0, %v898
    %v900 = vrcp.pop %v897
    %v901 = vmul.f32 1.0, %v900
    %v902 = vadd.f32 %v879, %v458
    %v903 = vmul.f32 %v899, %v902
    %v904 = vadd.f32 %v887, %v903
    %v905 = vtanh.pop %v904
    %v906 = vsub.f32 %v694, %v905
    %v907 = vmul.f32 %v901, %v906
    %v908 = vadd.f32 %v905, %v907
    %v909 = vld [vmem:[#allocation4] sm:$0xff]
    %v910 = vpack.c.bf16 %v908, %v908
    %s911 = scalar_lea.vmem %s5, 64
    %v912 = vld [vmem:[%s911] sm:$0xf]
    %v913 = vld [vmem:[%s911 + $0x4] sm:$0xf]
    %v914 = vld [vmem:[%s911 + $0x8] sm:$0xf]
    %v915 = vld [vmem:[%s911 + $0xc] sm:$0xf]
    %v916 = vld [vmem:[%s911 + $0x10] sm:$0xf]
    %v917 = vld [vmem:[%s911 + $0x14] sm:$0xf]
    %v918 = vld [vmem:[%s911 + $0x18] sm:$0xf]
    %v919 = vld [vmem:[%s911 + $0x1c] sm:$0xf]
    %v920 = vld [vmem:[%s911 + $0x20] sm:$0xf]
    %v921 = vld [vmem:[%s911 + $0x24] sm:$0xf]
    %v922 = vld [vmem:[%s911 + $0x28] sm:$0xf]
    %v923 = vld [vmem:[%s911 + $0x2c] sm:$0xf]
    %v924 = vld [vmem:[%s911 + $0x30] sm:$0xf]
    %v925 = vld [vmem:[%s911 + $0x34] sm:$0xf]
    %v926 = vld [vmem:[%s911 + $0x38] sm:$0xf]
    %v927 = vld [vmem:[%s911 + $0x3c] sm:$0xf]
    %v944 = vunpack.c.l.b16 %v912
    %v945 = vunpack.c.l.b16 %v913
    %v946 = vunpack.c.l.b16 %v914
    %v947 = vunpack.c.l.b16 %v915
    %v948 = vunpack.c.l.b16 %v916
    %v949 = vunpack.c.l.b16 %v917
    %v950 = vunpack.c.l.b16 %v918
    %v951 = vunpack.c.l.b16 %v919
    %v952 = vunpack.c.l.b16 %v920
    %v953 = vunpack.c.l.b16 %v921
    %v954 = vunpack.c.l.b16 %v922
    %v955 = vunpack.c.l.b16 %v923
    %v956 = vunpack.c.l.b16 %v924
    %v957 = vunpack.c.l.b16 %v925
    %v958 = vunpack.c.l.b16 %v926
    %v959 = vunpack.c.l.b16 %v927
    %v960 = vpack.c.b16 %v945, %v944
    %v961 = vpack.c.b16 %v947, %v946
    %v962 = vpack.c.b16 %v949, %v948
    %v963 = vpack.c.b16 %v951, %v950
    %v964 = vpack.c.b16 %v953, %v952
    %v965 = vpack.c.b16 %v955, %v954
    %v966 = vpack.c.b16 %v957, %v956
    %v967 = vpack.c.b16 %v959, %v958
    %976 = vmatprep.subr.bf16.mxu0 0
    %977 = vmatpush1.bf16.msra.mxu0 %v967
    %978 = vmatprep.subr.bf16.mxu0 0
    %979 = vmatpush1.bf16.msra.mxu0 %v966
    %980 = vmatprep.subr.bf16.mxu0 0
    %981 = vmatpush1.bf16.msra.mxu0 %v965
    %982 = vmatprep.subr.bf16.mxu0 0
    %983 = vmatpush1.bf16.msra.mxu0 %v964
    %984 = vmatprep.subr.bf16.mxu0 0
    %985 = vmatpush1.bf16.msra.mxu0 %v963
    %986 = vmatprep.subr.bf16.mxu0 0
    %987 = vmatpush1.bf16.msra.mxu0 %v962
    %988 = vmatprep.subr.bf16.mxu0 0
    %989 = vmatpush1.bf16.msra.mxu0 %v961
    %990 = vmatprep.subr.bf16.mxu0 0
    %991 = vmatpush1.bf16.msra.mxu0 %v960
    %992 = vmatprep.subr.bf16.mxu0 0
    %993 = vmatpush2.bf16.msra.mxu0 0
    %994 = vmatprep.subr.bf16.mxu0 0
    %995 = vmatpush2.bf16.msra.mxu0 0
    %996 = vmatprep.subr.bf16.mxu0 0
    %997 = vmatpush2.bf16.msra.mxu0 0
    %998 = vmatprep.subr.bf16.mxu0 0
    %999 = vmatpush2.bf16.msra.mxu0 0
    %1000 = vmatprep.subr.bf16.mxu0 0
    %1001 = vmatpush2.bf16.msra.mxu0 0
    %1002 = vmatprep.subr.bf16.mxu0 0
    %1003 = vmatpush2.bf16.msra.mxu0 0
    %1004 = vmatprep.subr.bf16.mxu0 0
    %1005 = vmatpush2.bf16.msra.mxu0 0
    %1006 = vmatprep.subr.bf16.mxu0 0
    %1007 = vmatpush2.bf16.msra.mxu0 0
    %1008 = vmatprep.mubr.bf16.mxu0 0
    %1009 = vmatmul.mubr.bf16.gmra.mxu0 %v910
    %v1010 = vpop.f32.mrf.mxu0
    %v1011 = vadd.f32 0.0, %v1010
    %v1012 = vpop.f32.mrf.mxu0
    %v1013 = vpop.f32.mrf.mxu0
    %v1014 = vpop.f32.mrf.mxu0
    %1015 = vdwg.mxu0
    %v1016 = vadd.f32 %v909, %v1011
    %1017 = vst [vmem:[#allocation4] sm:$0xff] %v1016
    %1018 = vmatprep.subr.bf16.mxu0 %v564
    %1019 = vmatpush1.bf16.msra.mxu0 %v563
    %1020 = vmatprep.subr.bf16.mxu0 %v561
    %1021 = vmatpush1.bf16.msra.mxu0 %v560
    %1022 = vmatprep.subr.bf16.mxu0 %v558
    %1023 = vmatpush1.bf16.msra.mxu0 %v557
    %1024 = vmatprep.subr.bf16.mxu0 %v555
    %1025 = vmatpush1.bf16.msra.mxu0 %v554
    %1026 = vmatprep.subr.bf16.mxu0 %v552
    %1027 = vmatpush1.bf16.msra.mxu0 %v551
    %1028 = vmatprep.subr.bf16.mxu0 %v549
    %1029 = vmatpush1.bf16.msra.mxu0 %v548
    %1030 = vmatprep.subr.bf16.mxu0 %v546
    %1031 = vmatpush1.bf16.msra.mxu0 %v545
    %1032 = vmatprep.subr.bf16.mxu0 %v543
    %1033 = vmatpush1.bf16.msra.mxu0 %v542
    %1034 = vmatprep.subr.bf16.mxu0 0
    %1035 = vmatpush2.bf16.msra.mxu0 0
    %1036 = vmatprep.subr.bf16.mxu0 0
    %1037 = vmatpush2.bf16.msra.mxu0 0
    %1038 = vmatprep.subr.bf16.mxu0 0
    %1039 = vmatpush2.bf16.msra.mxu0 0
    %1040 = vmatprep.subr.bf16.mxu0 0
    %1041 = vmatpush2.bf16.msra.mxu0 0
    %1042 = vmatprep.subr.bf16.mxu0 0
    %1043 = vmatpush2.bf16.msra.mxu0 0
    %1044 = vmatprep.subr.bf16.mxu0 0
    %1045 = vmatpush2.bf16.msra.mxu0 0
    %1046 = vmatprep.subr.bf16.mxu0 0
    %1047 = vmatpush2.bf16.msra.mxu0 0
    %1048 = vmatprep.subr.bf16.mxu0 0
    %1049 = vmatpush2.bf16.msra.mxu0 0
    %1050 = vmatprep.mubr.bf16.mxu0 0
    %1051 = vmatmul.mubr.bf16.gmra.mxu0 %v910
    %v1052 = vpop.f32.mrf.mxu0
    %v1053 = vadd.f32 0.0, %v1052
    %v1054 = vpop.f32.mrf.mxu0
    %v1055 = vadd.f32 0.0, %v1054
    %v1056 = vpop.f32.mrf.mxu0
    %v1057 = vpop.f32.mrf.mxu0
    %1058 = vdwg.mxu0
    %1059 = vmatprep.subr.bf16.mxu0 0
    %1060 = vmatpush1.bf16.msra.mxu0 %v565
    %1061 = vmatprep.subr.bf16.mxu0 0
    %1062 = vmatpush1.bf16.msra.mxu0 %v562
    %1063 = vmatprep.subr.bf16.mxu0 0
    %1064 = vmatpush1.bf16.msra.mxu0 %v559
    %1065 = vmatprep.subr.bf16.mxu0 0
    %1066 = vmatpush1.bf16.msra.mxu0 %v556
    %1067 = vmatprep.subr.bf16.mxu0 0
    %1068 = vmatpush1.bf16.msra.mxu0 %v553
    %1069 = vmatprep.subr.bf16.mxu0 0
    %1070 = vmatpush1.bf16.msra.mxu0 %v550
    %1071 = vmatprep.subr.bf16.mxu0 0
    %1072 = vmatpush1.bf16.msra.mxu0 %v547
    %1073 = vmatprep.subr.bf16.mxu0 0
    %1074 = vmatpush1.bf16.msra.mxu0 %v544
    %1075 = vmatprep.subr.bf16.mxu0 0
    %1076 = vmatpush2.bf16.msra.mxu0 0
    %1077 = vmatprep.subr.bf16.mxu0 0
    %1078 = vmatpush2.bf16.msra.mxu0 0
    %1079 = vmatprep.subr.bf16.mxu0 0
    %1080 = vmatpush2.bf16.msra.mxu0 0
    %1081 = vmatprep.subr.bf16.mxu0 0
    %1082 = vmatpush2.bf16.msra.mxu0 0
    %1083 = vmatprep.subr.bf16.mxu0 0
    %1084 = vmatpush2.bf16.msra.mxu0 0
    %1085 = vmatprep.subr.bf16.mxu0 0
    %1086 = vmatpush2.bf16.msra.mxu0 0
    %1087 = vmatprep.subr.bf16.mxu0 0
    %1088 = vmatpush2.bf16.msra.mxu0 0
    %1089 = vmatprep.subr.bf16.mxu0 0
    %1090 = vmatpush2.bf16.msra.mxu0 0
    %1091 = vmatprep.mubr.bf16.mxu0 0
    %1092 = vmatmul.mubr.bf16.gmra.mxu0 %v910
    %v1093 = vpop.f32.mrf.mxu0
    %v1094 = vadd.f32 0.0, %v1093
    %v1095 = vpop.f32.mrf.mxu0
    %v1096 = vpop.f32.mrf.mxu0
    %v1097 = vpop.f32.mrf.mxu0
    %1098 = vdwg.mxu0
    %s1099 = scalar_lea.vmem [#allocation3], 48
    %v1100 = vld [vmem:[%s1099] sm:$0xff]
    %v1101 = vld [vmem:[%s1099 + $0x8] sm:$0xff]
    %v1102 = vld [vmem:[%s1099 + $0x10] sm:$0xff]
    %v1103 = vadd.f32 %v1100, %v1053
    %v1104 = vadd.f32 %v1101, %v1055
    %v1105 = vxor.u32 %v1103, 2147483648
    %v1106 = vxor.u32 %v1104, 2147483648
    %v1107 = vmul.f32 %v1105, 1.442695
    %v1108 = vpow.pop %v1107
    %v1109 = vmul.f32 %v1106, 1.442695
    %v1110 = vpow.pop %v1109
    %v1111 = vadd.f32 %v1108, 1.0
    %v1112 = vadd.f32 %v1110, 1.0
    %v1113 = vrcp.pop %v1111
    %v1114 = vmul.f32 1.0, %v1113
    %v1115 = vrcp.pop %v1112
    %v1116 = vmul.f32 1.0, %v1115
    %v1117 = vadd.f32 %v1094, %v458
    %v1118 = vmul.f32 %v1114, %v1117
    %v1119 = vadd.f32 %v1102, %v1118
    %v1120 = vtanh.pop %v1119
    %v1121 = vsub.f32 %v908, %v1120
    %v1122 = vmul.f32 %v1116, %v1121
    %v1123 = vadd.f32 %v1120, %v1122
    %v1124 = vld [vmem:[#allocation4] sm:$0xff]
    %v1125 = vpack.c.bf16 %v1123, %v1123
    %s1126 = scalar_lea.vmem %s5, 128
    %v1127 = vld [vmem:[%s1126] sm:$0xf]
    %v1128 = vld [vmem:[%s1126 + $0x4] sm:$0xf]
    %v1129 = vld [vmem:[%s1126 + $0x8] sm:$0xf]
    %v1130 = vld [vmem:[%s1126 + $0xc] sm:$0xf]
    %v1131 = vld [vmem:[%s1126 + $0x10] sm:$0xf]
    %v1132 = vld [vmem:[%s1126 + $0x14] sm:$0xf]
    %v1133 = vld [vmem:[%s1126 + $0x18] sm:$0xf]
    %v1134 = vld [vmem:[%s1126 + $0x1c] sm:$0xf]
    %v1135 = vld [vmem:[%s1126 + $0x20] sm:$0xf]
    %v1136 = vld [vmem:[%s1126 + $0x24] sm:$0xf]
    %v1137 = vld [vmem:[%s1126 + $0x28] sm:$0xf]
    %v1138 = vld [vmem:[%s1126 + $0x2c] sm:$0xf]
    %v1139 = vld [vmem:[%s1126 + $0x30] sm:$0xf]
    %v1140 = vld [vmem:[%s1126 + $0x34] sm:$0xf]
    %v1141 = vld [vmem:[%s1126 + $0x38] sm:$0xf]
    %v1142 = vld [vmem:[%s1126 + $0x3c] sm:$0xf]
    %v1159 = vunpack.c.l.b16 %v1127
    %v1160 = vunpack.c.l.b16 %v1128
    %v1161 = vunpack.c.l.b16 %v1129
    %v1162 = vunpack.c.l.b16 %v1130
    %v1163 = vunpack.c.l.b16 %v1131
    %v1164 = vunpack.c.l.b16 %v1132
    %v1165 = vunpack.c.l.b16 %v1133
    %v1166 = vunpack.c.l.b16 %v1134
    %v1167 = vunpack.c.l.b16 %v1135
    %v1168 = vunpack.c.l.b16 %v1136
    %v1169 = vunpack.c.l.b16 %v1137
    %v1170 = vunpack.c.l.b16 %v1138
    %v1171 = vunpack.c.l.b16 %v1139
    %v1172 = vunpack.c.l.b16 %v1140
    %v1173 = vunpack.c.l.b16 %v1141
    %v1174 = vunpack.c.l.b16 %v1142
    %v1175 = vpack.c.b16 %v1160, %v1159
    %v1176 = vpack.c.b16 %v1162, %v1161
    %v1177 = vpack.c.b16 %v1164, %v1163
    %v1178 = vpack.c.b16 %v1166, %v1165
    %v1179 = vpack.c.b16 %v1168, %v1167
    %v1180 = vpack.c.b16 %v1170, %v1169
    %v1181 = vpack.c.b16 %v1172, %v1171
    %v1182 = vpack.c.b16 %v1174, %v1173
    %1191 = vmatprep.subr.bf16.mxu0 0
    %1192 = vmatpush1.bf16.msra.mxu0 %v1182
    %1193 = vmatprep.subr.bf16.mxu0 0
    %1194 = vmatpush1.bf16.msra.mxu0 %v1181
    %1195 = vmatprep.subr.bf16.mxu0 0
    %1196 = vmatpush1.bf16.msra.mxu0 %v1180
    %1197 = vmatprep.subr.bf16.mxu0 0
    %1198 = vmatpush1.bf16.msra.mxu0 %v1179
    %1199 = vmatprep.subr.bf16.mxu0 0
    %1200 = vmatpush1.bf16.msra.mxu0 %v1178
    %1201 = vmatprep.subr.bf16.mxu0 0
    %1202 = vmatpush1.bf16.msra.mxu0 %v1177
    %1203 = vmatprep.subr.bf16.mxu0 0
    %1204 = vmatpush1.bf16.msra.mxu0 %v1176
    %1205 = vmatprep.subr.bf16.mxu0 0
    %1206 = vmatpush1.bf16.msra.mxu0 %v1175
    %1207 = vmatprep.subr.bf16.mxu0 0
    %1208 = vmatpush2.bf16.msra.mxu0 0
    %1209 = vmatprep.subr.bf16.mxu0 0
    %1210 = vmatpush2.bf16.msra.mxu0 0
    %1211 = vmatprep.subr.bf16.mxu0 0
    %1212 = vmatpush2.bf16.msra.mxu0 0
    %1213 = vmatprep.subr.bf16.mxu0 0
    %1214 = vmatpush2.bf16.msra.mxu0 0
    %1215 = vmatprep.subr.bf16.mxu0 0
    %1216 = vmatpush2.bf16.msra.mxu0 0
    %1217 = vmatprep.subr.bf16.mxu0 0
    %1218 = vmatpush2.bf16.msra.mxu0 0
    %1219 = vmatprep.subr.bf16.mxu0 0
    %1220 = vmatpush2.bf16.msra.mxu0 0
    %1221 = vmatprep.subr.bf16.mxu0 0
    %1222 = vmatpush2.bf16.msra.mxu0 0
    %1223 = vmatprep.mubr.bf16.mxu0 0
    %1224 = vmatmul.mubr.bf16.gmra.mxu0 %v1125
    %v1225 = vpop.f32.mrf.mxu0
    %v1226 = vadd.f32 0.0, %v1225
    %v1227 = vpop.f32.mrf.mxu0
    %v1228 = vpop.f32.mrf.mxu0
    %v1229 = vpop.f32.mrf.mxu0
    %1230 = vdwg.mxu0
    %v1231 = vadd.f32 %v1124, %v1226
    %1232 = vst [vmem:[#allocation4] sm:$0xff] %v1231
    %1233 = vmatprep.subr.bf16.mxu0 %v564
    %1234 = vmatpush1.bf16.msra.mxu0 %v563
    %1235 = vmatprep.subr.bf16.mxu0 %v561
    %1236 = vmatpush1.bf16.msra.mxu0 %v560
    %1237 = vmatprep.subr.bf16.mxu0 %v558
    %1238 = vmatpush1.bf16.msra.mxu0 %v557
    %1239 = vmatprep.subr.bf16.mxu0 %v555
    %1240 = vmatpush1.bf16.msra.mxu0 %v554
    %1241 = vmatprep.subr.bf16.mxu0 %v552
    %1242 = vmatpush1.bf16.msra.mxu0 %v551
    %1243 = vmatprep.subr.bf16.mxu0 %v549
    %1244 = vmatpush1.bf16.msra.mxu0 %v548
    %1245 = vmatprep.subr.bf16.mxu0 %v546
    %1246 = vmatpush1.bf16.msra.mxu0 %v545
    %1247 = vmatprep.subr.bf16.mxu0 %v543
    %1248 = vmatpush1.bf16.msra.mxu0 %v542
    %1249 = vmatprep.subr.bf16.mxu0 0
    %1250 = vmatpush2.bf16.msra.mxu0 0
    %1251 = vmatprep.subr.bf16.mxu0 0
    %1252 = vmatpush2.bf16.msra.mxu0 0
    %1253 = vmatprep.subr.bf16.mxu0 0
    %1254 = vmatpush2.bf16.msra.mxu0 0
    %1255 = vmatprep.subr.bf16.mxu0 0
    %1256 = vmatpush2.bf16.msra.mxu0 0
    %1257 = vmatprep.subr.bf16.mxu0 0
    %1258 = vmatpush2.bf16.msra.mxu0 0
    %1259 = vmatprep.subr.bf16.mxu0 0
    %1260 = vmatpush2.bf16.msra.mxu0 0
    %1261 = vmatprep.subr.bf16.mxu0 0
    %1262 = vmatpush2.bf16.msra.mxu0 0
    %1263 = vmatprep.subr.bf16.mxu0 0
    %1264 = vmatpush2.bf16.msra.mxu0 0
    %1265 = vmatprep.mubr.bf16.mxu0 0
    %1266 = vmatmul.mubr.bf16.gmra.mxu0 %v1125
    %v1267 = vpop.f32.mrf.mxu0
    %v1268 = vadd.f32 0.0, %v1267
    %v1269 = vpop.f32.mrf.mxu0
    %v1270 = vadd.f32 0.0, %v1269
    %v1271 = vpop.f32.mrf.mxu0
    %v1272 = vpop.f32.mrf.mxu0
    %1273 = vdwg.mxu0
    %1274 = vmatprep.subr.bf16.mxu0 0
    %1275 = vmatpush1.bf16.msra.mxu0 %v565
    %1276 = vmatprep.subr.bf16.mxu0 0
    %1277 = vmatpush1.bf16.msra.mxu0 %v562
    %1278 = vmatprep.subr.bf16.mxu0 0
    %1279 = vmatpush1.bf16.msra.mxu0 %v559
    %1280 = vmatprep.subr.bf16.mxu0 0
    %1281 = vmatpush1.bf16.msra.mxu0 %v556
    %1282 = vmatprep.subr.bf16.mxu0 0
    %1283 = vmatpush1.bf16.msra.mxu0 %v553
    %1284 = vmatprep.subr.bf16.mxu0 0
    %1285 = vmatpush1.bf16.msra.mxu0 %v550
    %1286 = vmatprep.subr.bf16.mxu0 0
    %1287 = vmatpush1.bf16.msra.mxu0 %v547
    %1288 = vmatprep.subr.bf16.mxu0 0
    %1289 = vmatpush1.bf16.msra.mxu0 %v544
    %1290 = vmatprep.subr.bf16.mxu0 0
    %1291 = vmatpush2.bf16.msra.mxu0 0
    %1292 = vmatprep.subr.bf16.mxu0 0
    %1293 = vmatpush2.bf16.msra.mxu0 0
    %1294 = vmatprep.subr.bf16.mxu0 0
    %1295 = vmatpush2.bf16.msra.mxu0 0
    %1296 = vmatprep.subr.bf16.mxu0 0
    %1297 = vmatpush2.bf16.msra.mxu0 0
    %1298 = vmatprep.subr.bf16.mxu0 0
    %1299 = vmatpush2.bf16.msra.mxu0 0
    %1300 = vmatprep.subr.bf16.mxu0 0
    %1301 = vmatpush2.bf16.msra.mxu0 0
    %1302 = vmatprep.subr.bf16.mxu0 0
    %1303 = vmatpush2.bf16.msra.mxu0 0
    %1304 = vmatprep.subr.bf16.mxu0 0
    %1305 = vmatpush2.bf16.msra.mxu0 0
    %1306 = vmatprep.mubr.bf16.mxu0 0
    %1307 = vmatmul.mubr.bf16.gmra.mxu0 %v1125
    %v1308 = vpop.f32.mrf.mxu0
    %v1309 = vadd.f32 0.0, %v1308
    %v1310 = vpop.f32.mrf.mxu0
    %v1311 = vpop.f32.mrf.mxu0
    %v1312 = vpop.f32.mrf.mxu0
    %1313 = vdwg.mxu0
    %s1314 = scalar_lea.vmem [#allocation3], 72
    %v1315 = vld [vmem:[%s1314] sm:$0xff]
    %v1316 = vld [vmem:[%s1314 + $0x8] sm:$0xff]
    %v1317 = vld [vmem:[%s1314 + $0x10] sm:$0xff]
    %v1318 = vadd.f32 %v1315, %v1268
    %v1319 = vadd.f32 %v1316, %v1270
    %v1320 = vxor.u32 %v1318, 2147483648
    %v1321 = vxor.u32 %v1319, 2147483648
    %v1322 = vmul.f32 %v1320, 1.442695
    %v1323 = vpow.pop %v1322
    %v1324 = vmul.f32 %v1321, 1.442695
    %v1325 = vpow.pop %v1324
    %v1326 = vadd.f32 %v1323, 1.0
    %v1327 = vadd.f32 %v1325, 1.0
    %v1328 = vrcp.pop %v1326
    %v1329 = vmul.f32 1.0, %v1328
    %v1330 = vrcp.pop %v1327
    %v1331 = vmul.f32 1.0, %v1330
    %v1332 = vadd.f32 %v1309, %v458
    %v1333 = vmul.f32 %v1329, %v1332
    %v1334 = vadd.f32 %v1317, %v1333
    %v1335 = vtanh.pop %v1334
    %v1336 = vsub.f32 %v1123, %v1335
    %v1337 = vmul.f32 %v1331, %v1336
    %v1338 = vadd.f32 %v1335, %v1337
    %v1339 = vld [vmem:[#allocation4] sm:$0xff]
    %v1340 = vpack.c.bf16 %v1338, %v1338
    %s1341 = scalar_lea.vmem %s5, 192
    %v1342 = vld [vmem:[%s1341] sm:$0xf]
    %v1343 = vld [vmem:[%s1341 + $0x4] sm:$0xf]
    %v1344 = vld [vmem:[%s1341 + $0x8] sm:$0xf]
    %v1345 = vld [vmem:[%s1341 + $0xc] sm:$0xf]
    %v1346 = vld [vmem:[%s1341 + $0x10] sm:$0xf]
    %v1347 = vld [vmem:[%s1341 + $0x14] sm:$0xf]
    %v1348 = vld [vmem:[%s1341 + $0x18] sm:$0xf]
    %v1349 = vld [vmem:[%s1341 + $0x1c] sm:$0xf]
    %v1350 = vld [vmem:[%s1341 + $0x20] sm:$0xf]
    %v1351 = vld [vmem:[%s1341 + $0x24] sm:$0xf]
    %v1352 = vld [vmem:[%s1341 + $0x28] sm:$0xf]
    %v1353 = vld [vmem:[%s1341 + $0x2c] sm:$0xf]
    %v1354 = vld [vmem:[%s1341 + $0x30] sm:$0xf]
    %v1355 = vld [vmem:[%s1341 + $0x34] sm:$0xf]
    %v1356 = vld [vmem:[%s1341 + $0x38] sm:$0xf]
    %v1357 = vld [vmem:[%s1341 + $0x3c] sm:$0xf]
    %v1374 = vunpack.c.l.b16 %v1342
    %v1375 = vunpack.c.l.b16 %v1343
    %v1376 = vunpack.c.l.b16 %v1344
    %v1377 = vunpack.c.l.b16 %v1345
    %v1378 = vunpack.c.l.b16 %v1346
    %v1379 = vunpack.c.l.b16 %v1347
    %v1380 = vunpack.c.l.b16 %v1348
    %v1381 = vunpack.c.l.b16 %v1349
    %v1382 = vunpack.c.l.b16 %v1350
    %v1383 = vunpack.c.l.b16 %v1351
    %v1384 = vunpack.c.l.b16 %v1352
    %v1385 = vunpack.c.l.b16 %v1353
    %v1386 = vunpack.c.l.b16 %v1354
    %v1387 = vunpack.c.l.b16 %v1355
    %v1388 = vunpack.c.l.b16 %v1356
    %v1389 = vunpack.c.l.b16 %v1357
    %v1390 = vpack.c.b16 %v1375, %v1374
    %v1391 = vpack.c.b16 %v1377, %v1376
    %v1392 = vpack.c.b16 %v1379, %v1378
    %v1393 = vpack.c.b16 %v1381, %v1380
    %v1394 = vpack.c.b16 %v1383, %v1382
    %v1395 = vpack.c.b16 %v1385, %v1384
    %v1396 = vpack.c.b16 %v1387, %v1386
    %v1397 = vpack.c.b16 %v1389, %v1388
    %1406 = vmatprep.subr.bf16.mxu0 0
    %1407 = vmatpush1.bf16.msra.mxu0 %v1397
    %1408 = vmatprep.subr.bf16.mxu0 0
    %1409 = vmatpush1.bf16.msra.mxu0 %v1396
    %1410 = vmatprep.subr.bf16.mxu0 0
    %1411 = vmatpush1.bf16.msra.mxu0 %v1395
    %1412 = vmatprep.subr.bf16.mxu0 0
    %1413 = vmatpush1.bf16.msra.mxu0 %v1394
    %1414 = vmatprep.subr.bf16.mxu0 0
    %1415 = vmatpush1.bf16.msra.mxu0 %v1393
    %1416 = vmatprep.subr.bf16.mxu0 0
    %1417 = vmatpush1.bf16.msra.mxu0 %v1392
    %1418 = vmatprep.subr.bf16.mxu0 0
    %1419 = vmatpush1.bf16.msra.mxu0 %v1391
    %1420 = vmatprep.subr.bf16.mxu0 0
    %1421 = vmatpush1.bf16.msra.mxu0 %v1390
    %1422 = vmatprep.subr.bf16.mxu0 0
    %1423 = vmatpush2.bf16.msra.mxu0 0
    %1424 = vmatprep.subr.bf16.mxu0 0
    %1425 = vmatpush2.bf16.msra.mxu0 0
    %1426 = vmatprep.subr.bf16.mxu0 0
    %1427 = vmatpush2.bf16.msra.mxu0 0
    %1428 = vmatprep.subr.bf16.mxu0 0
    %1429 = vmatpush2.bf16.msra.mxu0 0
    %1430 = vmatprep.subr.bf16.mxu0 0
    %1431 = vmatpush2.bf16.msra.mxu0 0
    %1432 = vmatprep.subr.bf16.mxu0 0
    %1433 = vmatpush2.bf16.msra.mxu0 0
    %1434 = vmatprep.subr.bf16.mxu0 0
    %1435 = vmatpush2.bf16.msra.mxu0 0
    %1436 = vmatprep.subr.bf16.mxu0 0
    %1437 = vmatpush2.bf16.msra.mxu0 0
    %1438 = vmatprep.mubr.bf16.mxu0 0
    %1439 = vmatmul.mubr.bf16.gmra.mxu0 %v1340
    %v1440 = vpop.f32.mrf.mxu0
    %v1441 = vadd.f32 0.0, %v1440
    %v1442 = vpop.f32.mrf.mxu0
    %v1443 = vpop.f32.mrf.mxu0
    %v1444 = vpop.f32.mrf.mxu0
    %1445 = vdwg.mxu0
    %v1446 = vadd.f32 %v1339, %v1441
    %1447 = vst [vmem:[#allocation4] sm:$0xff] %v1446
    %1448 = vmatprep.subr.bf16.mxu0 %v564
    %1449 = vmatpush1.bf16.msra.mxu0 %v563
    %1450 = vmatprep.subr.bf16.mxu0 %v561
    %1451 = vmatpush1.bf16.msra.mxu0 %v560
    %1452 = vmatprep.subr.bf16.mxu0 %v558
    %1453 = vmatpush1.bf16.msra.mxu0 %v557
    %1454 = vmatprep.subr.bf16.mxu0 %v555
    %1455 = vmatpush1.bf16.msra.mxu0 %v554
    %1456 = vmatprep.subr.bf16.mxu0 %v552
    %1457 = vmatpush1.bf16.msra.mxu0 %v551
    %1458 = vmatprep.subr.bf16.mxu0 %v549
    %1459 = vmatpush1.bf16.msra.mxu0 %v548
    %1460 = vmatprep.subr.bf16.mxu0 %v546
    %1461 = vmatpush1.bf16.msra.mxu0 %v545
    %1462 = vmatprep.subr.bf16.mxu0 %v543
    %1463 = vmatpush1.bf16.msra.mxu0 %v542
    %1464 = vmatprep.subr.bf16.mxu0 0
    %1465 = vmatpush2.bf16.msra.mxu0 0
    %1466 = vmatprep.subr.bf16.mxu0 0
    %1467 = vmatpush2.bf16.msra.mxu0 0
    %1468 = vmatprep.subr.bf16.mxu0 0
    %1469 = vmatpush2.bf16.msra.mxu0 0
    %1470 = vmatprep.subr.bf16.mxu0 0
    %1471 = vmatpush2.bf16.msra.mxu0 0
    %1472 = vmatprep.subr.bf16.mxu0 0
    %1473 = vmatpush2.bf16.msra.mxu0 0
    %1474 = vmatprep.subr.bf16.mxu0 0
    %1475 = vmatpush2.bf16.msra.mxu0 0
    %1476 = vmatprep.subr.bf16.mxu0 0
    %1477 = vmatpush2.bf16.msra.mxu0 0
    %1478 = vmatprep.subr.bf16.mxu0 0
    %1479 = vmatpush2.bf16.msra.mxu0 0
    %1480 = vmatprep.mubr.bf16.mxu0 0
    %1481 = vmatmul.mubr.bf16.gmra.mxu0 %v1340
    %v1482 = vpop.f32.mrf.mxu0
    %v1483 = vadd.f32 0.0, %v1482
    %v1484 = vpop.f32.mrf.mxu0
    %v1485 = vadd.f32 0.0, %v1484
    %v1486 = vpop.f32.mrf.mxu0
    %v1487 = vpop.f32.mrf.mxu0
    %1488 = vdwg.mxu0
    %1489 = vmatprep.subr.bf16.mxu0 0
    %1490 = vmatpush1.bf16.msra.mxu0 %v565
    %1491 = vmatprep.subr.bf16.mxu0 0
    %1492 = vmatpush1.bf16.msra.mxu0 %v562
    %1493 = vmatprep.subr.bf16.mxu0 0
    %1494 = vmatpush1.bf16.msra.mxu0 %v559
    %1495 = vmatprep.subr.bf16.mxu0 0
    %1496 = vmatpush1.bf16.msra.mxu0 %v556
    %1497 = vmatprep.subr.bf16.mxu0 0
    %1498 = vmatpush1.bf16.msra.mxu0 %v553
    %1499 = vmatprep.subr.bf16.mxu0 0
    %1500 = vmatpush1.bf16.msra.mxu0 %v550
    %1501 = vmatprep.subr.bf16.mxu0 0
    %1502 = vmatpush1.bf16.msra.mxu0 %v547
    %1503 = vmatprep.subr.bf16.mxu0 0
    %1504 = vmatpush1.bf16.msra.mxu0 %v544
    %1505 = vmatprep.subr.bf16.mxu0 0
    %1506 = vmatpush2.bf16.msra.mxu0 0
    %1507 = vmatprep.subr.bf16.mxu0 0
    %1508 = vmatpush2.bf16.msra.mxu0 0
    %1509 = vmatprep.subr.bf16.mxu0 0
    %1510 = vmatpush2.bf16.msra.mxu0 0
    %1511 = vmatprep.subr.bf16.mxu0 0
    %1512 = vmatpush2.bf16.msra.mxu0 0
    %1513 = vmatprep.subr.bf16.mxu0 0
    %1514 = vmatpush2.bf16.msra.mxu0 0
    %1515 = vmatprep.subr.bf16.mxu0 0
    %1516 = vmatpush2.bf16.msra.mxu0 0
    %1517 = vmatprep.subr.bf16.mxu0 0
    %1518 = vmatpush2.bf16.msra.mxu0 0
    %1519 = vmatprep.subr.bf16.mxu0 0
    %1520 = vmatpush2.bf16.msra.mxu0 0
    %1521 = vmatprep.mubr.bf16.mxu0 0
    %1522 = vmatmul.mubr.bf16.gmra.mxu0 %v1340
    %v1523 = vpop.f32.mrf.mxu0
    %v1524 = vadd.f32 0.0, %v1523
    %v1525 = vpop.f32.mrf.mxu0
    %v1526 = vpop.f32.mrf.mxu0
    %v1527 = vpop.f32.mrf.mxu0
    %1528 = vdwg.mxu0
    %s1529 = scalar_lea.vmem [#allocation3], 96
    %v1530 = vld [vmem:[%s1529] sm:$0xff]
    %v1531 = vld [vmem:[%s1529 + $0x8] sm:$0xff]
    %v1532 = vld [vmem:[%s1529 + $0x10] sm:$0xff]
    %v1533 = vadd.f32 %v1530, %v1483
    %v1534 = vadd.f32 %v1531, %v1485
    %v1535 = vxor.u32 %v1533, 2147483648
    %v1536 = vxor.u32 %v1534, 2147483648
    %v1537 = vmul.f32 %v1535, 1.442695
    %v1538 = vpow.pop %v1537
    %v1539 = vmul.f32 %v1536, 1.442695
    %v1540 = vpow.pop %v1539
    %v1541 = vadd.f32 %v1538, 1.0
    %v1542 = vadd.f32 %v1540, 1.0
    %v1543 = vrcp.pop %v1541
    %v1544 = vmul.f32 1.0, %v1543
    %v1545 = vrcp.pop %v1542
    %v1546 = vmul.f32 1.0, %v1545
    %v1547 = vadd.f32 %v1524, %v458
    %v1548 = vmul.f32 %v1544, %v1547
    %v1549 = vadd.f32 %v1532, %v1548
    %v1550 = vtanh.pop %v1549
    %v1551 = vsub.f32 %v1338, %v1550
    %v1552 = vmul.f32 %v1546, %v1551
    %v1553 = vadd.f32 %v1550, %v1552
    %v1554 = vld [vmem:[#allocation4] sm:$0xff]
    %v1555 = vpack.c.bf16 %v1553, %v1553
    %s1556 = scalar_lea.vmem %s5, 256
    %v1557 = vld [vmem:[%s1556] sm:$0xf]
    %v1558 = vld [vmem:[%s1556 + $0x4] sm:$0xf]
    %v1559 = vld [vmem:[%s1556 + $0x8] sm:$0xf]
    %v1560 = vld [vmem:[%s1556 + $0xc] sm:$0xf]
    %v1561 = vld [vmem:[%s1556 + $0x10] sm:$0xf]
    %v1562 = vld [vmem:[%s1556 + $0x14] sm:$0xf]
    %v1563 = vld [vmem:[%s1556 + $0x18] sm:$0xf]
    %v1564 = vld [vmem:[%s1556 + $0x1c] sm:$0xf]
    %v1565 = vld [vmem:[%s1556 + $0x20] sm:$0xf]
    %v1566 = vld [vmem:[%s1556 + $0x24] sm:$0xf]
    %v1567 = vld [vmem:[%s1556 + $0x28] sm:$0xf]
    %v1568 = vld [vmem:[%s1556 + $0x2c] sm:$0xf]
    %v1569 = vld [vmem:[%s1556 + $0x30] sm:$0xf]
    %v1570 = vld [vmem:[%s1556 + $0x34] sm:$0xf]
    %v1571 = vld [vmem:[%s1556 + $0x38] sm:$0xf]
    %v1572 = vld [vmem:[%s1556 + $0x3c] sm:$0xf]
    %v1589 = vunpack.c.l.b16 %v1557
    %v1590 = vunpack.c.l.b16 %v1558
    %v1591 = vunpack.c.l.b16 %v1559
    %v1592 = vunpack.c.l.b16 %v1560
    %v1593 = vunpack.c.l.b16 %v1561
    %v1594 = vunpack.c.l.b16 %v1562
    %v1595 = vunpack.c.l.b16 %v1563
    %v1596 = vunpack.c.l.b16 %v1564
    %v1597 = vunpack.c.l.b16 %v1565
    %v1598 = vunpack.c.l.b16 %v1566
    %v1599 = vunpack.c.l.b16 %v1567
    %v1600 = vunpack.c.l.b16 %v1568
    %v1601 = vunpack.c.l.b16 %v1569
    %v1602 = vunpack.c.l.b16 %v1570
    %v1603 = vunpack.c.l.b16 %v1571
    %v1604 = vunpack.c.l.b16 %v1572
    %v1605 = vpack.c.b16 %v1590, %v1589
    %v1606 = vpack.c.b16 %v1592, %v1591
    %v1607 = vpack.c.b16 %v1594, %v1593
    %v1608 = vpack.c.b16 %v1596, %v1595
    %v1609 = vpack.c.b16 %v1598, %v1597
    %v1610 = vpack.c.b16 %v1600, %v1599
    %v1611 = vpack.c.b16 %v1602, %v1601
    %v1612 = vpack.c.b16 %v1604, %v1603
    %1621 = vmatprep.subr.bf16.mxu0 0
    %1622 = vmatpush1.bf16.msra.mxu0 %v1612
    %1623 = vmatprep.subr.bf16.mxu0 0
    %1624 = vmatpush1.bf16.msra.mxu0 %v1611
    %1625 = vmatprep.subr.bf16.mxu0 0
    %1626 = vmatpush1.bf16.msra.mxu0 %v1610
    %1627 = vmatprep.subr.bf16.mxu0 0
    %1628 = vmatpush1.bf16.msra.mxu0 %v1609
    %1629 = vmatprep.subr.bf16.mxu0 0
    %1630 = vmatpush1.bf16.msra.mxu0 %v1608
    %1631 = vmatprep.subr.bf16.mxu0 0
    %1632 = vmatpush1.bf16.msra.mxu0 %v1607
    %1633 = vmatprep.subr.bf16.mxu0 0
    %1634 = vmatpush1.bf16.msra.mxu0 %v1606
    %1635 = vmatprep.subr.bf16.mxu0 0
    %1636 = vmatpush1.bf16.msra.mxu0 %v1605
    %1637 = vmatprep.subr.bf16.mxu0 0
    %1638 = vmatpush2.bf16.msra.mxu0 0
    %1639 = vmatprep.subr.bf16.mxu0 0
    %1640 = vmatpush2.bf16.msra.mxu0 0
    %1641 = vmatprep.subr.bf16.mxu0 0
    %1642 = vmatpush2.bf16.msra.mxu0 0
    %1643 = vmatprep.subr.bf16.mxu0 0
    %1644 = vmatpush2.bf16.msra.mxu0 0
    %1645 = vmatprep.subr.bf16.mxu0 0
    %1646 = vmatpush2.bf16.msra.mxu0 0
    %1647 = vmatprep.subr.bf16.mxu0 0
    %1648 = vmatpush2.bf16.msra.mxu0 0
    %1649 = vmatprep.subr.bf16.mxu0 0
    %1650 = vmatpush2.bf16.msra.mxu0 0
    %1651 = vmatprep.subr.bf16.mxu0 0
    %1652 = vmatpush2.bf16.msra.mxu0 0
    %1653 = vmatprep.mubr.bf16.mxu0 0
    %1654 = vmatmul.mubr.bf16.gmra.mxu0 %v1555
    %v1655 = vpop.f32.mrf.mxu0
    %v1656 = vadd.f32 0.0, %v1655
    %v1657 = vpop.f32.mrf.mxu0
    %v1658 = vpop.f32.mrf.mxu0
    %v1659 = vpop.f32.mrf.mxu0
    %1660 = vdwg.mxu0
    %v1661 = vadd.f32 %v1554, %v1656
    %1662 = vst [vmem:[#allocation4] sm:$0xff] %v1661
    %1663 = vmatprep.subr.bf16.mxu0 %v564
    %1664 = vmatpush1.bf16.msra.mxu0 %v563
    %1665 = vmatprep.subr.bf16.mxu0 %v561
    %1666 = vmatpush1.bf16.msra.mxu0 %v560
    %1667 = vmatprep.subr.bf16.mxu0 %v558
    %1668 = vmatpush1.bf16.msra.mxu0 %v557
    %1669 = vmatprep.subr.bf16.mxu0 %v555
    %1670 = vmatpush1.bf16.msra.mxu0 %v554
    %1671 = vmatprep.subr.bf16.mxu0 %v552
    %1672 = vmatpush1.bf16.msra.mxu0 %v551
    %1673 = vmatprep.subr.bf16.mxu0 %v549
    %1674 = vmatpush1.bf16.msra.mxu0 %v548
    %1675 = vmatprep.subr.bf16.mxu0 %v546
    %1676 = vmatpush1.bf16.msra.mxu0 %v545
    %1677 = vmatprep.subr.bf16.mxu0 %v543
    %1678 = vmatpush1.bf16.msra.mxu0 %v542
    %1679 = vmatprep.subr.bf16.mxu0 0
    %1680 = vmatpush2.bf16.msra.mxu0 0
    %1681 = vmatprep.subr.bf16.mxu0 0
    %1682 = vmatpush2.bf16.msra.mxu0 0
    %1683 = vmatprep.subr.bf16.mxu0 0
    %1684 = vmatpush2.bf16.msra.mxu0 0
    %1685 = vmatprep.subr.bf16.mxu0 0
    %1686 = vmatpush2.bf16.msra.mxu0 0
    %1687 = vmatprep.subr.bf16.mxu0 0
    %1688 = vmatpush2.bf16.msra.mxu0 0
    %1689 = vmatprep.subr.bf16.mxu0 0
    %1690 = vmatpush2.bf16.msra.mxu0 0
    %1691 = vmatprep.subr.bf16.mxu0 0
    %1692 = vmatpush2.bf16.msra.mxu0 0
    %1693 = vmatprep.subr.bf16.mxu0 0
    %1694 = vmatpush2.bf16.msra.mxu0 0
    %1695 = vmatprep.mubr.bf16.mxu0 0
    %1696 = vmatmul.mubr.bf16.gmra.mxu0 %v1555
    %v1697 = vpop.f32.mrf.mxu0
    %v1698 = vadd.f32 0.0, %v1697
    %v1699 = vpop.f32.mrf.mxu0
    %v1700 = vadd.f32 0.0, %v1699
    %v1701 = vpop.f32.mrf.mxu0
    %v1702 = vpop.f32.mrf.mxu0
    %1703 = vdwg.mxu0
    %1704 = vmatprep.subr.bf16.mxu0 0
    %1705 = vmatpush1.bf16.msra.mxu0 %v565
    %1706 = vmatprep.subr.bf16.mxu0 0
    %1707 = vmatpush1.bf16.msra.mxu0 %v562
    %1708 = vmatprep.subr.bf16.mxu0 0
    %1709 = vmatpush1.bf16.msra.mxu0 %v559
    %1710 = vmatprep.subr.bf16.mxu0 0
    %1711 = vmatpush1.bf16.msra.mxu0 %v556
    %1712 = vmatprep.subr.bf16.mxu0 0
    %1713 = vmatpush1.bf16.msra.mxu0 %v553
    %1714 = vmatprep.subr.bf16.mxu0 0
    %1715 = vmatpush1.bf16.msra.mxu0 %v550
    %1716 = vmatprep.subr.bf16.mxu0 0
    %1717 = vmatpush1.bf16.msra.mxu0 %v547
    %1718 = vmatprep.subr.bf16.mxu0 0
    %1719 = vmatpush1.bf16.msra.mxu0 %v544
    %1720 = vmatprep.subr.bf16.mxu0 0
    %1721 = vmatpush2.bf16.msra.mxu0 0
    %1722 = vmatprep.subr.bf16.mxu0 0
    %1723 = vmatpush2.bf16.msra.mxu0 0
    %1724 = vmatprep.subr.bf16.mxu0 0
    %1725 = vmatpush2.bf16.msra.mxu0 0
    %1726 = vmatprep.subr.bf16.mxu0 0
    %1727 = vmatpush2.bf16.msra.mxu0 0
    %1728 = vmatprep.subr.bf16.mxu0 0
    %1729 = vmatpush2.bf16.msra.mxu0 0
    %1730 = vmatprep.subr.bf16.mxu0 0
    %1731 = vmatpush2.bf16.msra.mxu0 0
    %1732 = vmatprep.subr.bf16.mxu0 0
    %1733 = vmatpush2.bf16.msra.mxu0 0
    %1734 = vmatprep.subr.bf16.mxu0 0
    %1735 = vmatpush2.bf16.msra.mxu0 0
    %1736 = vmatprep.mubr.bf16.mxu0 0
    %1737 = vmatmul.mubr.bf16.gmra.mxu0 %v1555
    %v1738 = vpop.f32.mrf.mxu0
    %v1739 = vadd.f32 0.0, %v1738
    %v1740 = vpop.f32.mrf.mxu0
    %v1741 = vpop.f32.mrf.mxu0
    %v1742 = vpop.f32.mrf.mxu0
    %1743 = vdwg.mxu0
    %s1744 = scalar_lea.vmem [#allocation3], 120
    %v1745 = vld [vmem:[%s1744] sm:$0xff]
    %v1746 = vld [vmem:[%s1744 + $0x8] sm:$0xff]
    %v1747 = vld [vmem:[%s1744 + $0x10] sm:$0xff]
    %v1748 = vadd.f32 %v1745, %v1698
    %v1749 = vadd.f32 %v1746, %v1700
    %v1750 = vxor.u32 %v1748, 2147483648
    %v1751 = vxor.u32 %v1749, 2147483648
    %v1752 = vmul.f32 %v1750, 1.442695
    %v1753 = vpow.pop %v1752
    %v1754 = vmul.f32 %v1751, 1.442695
    %v1755 = vpow.pop %v1754
    %v1756 = vadd.f32 %v1753, 1.0
    %v1757 = vadd.f32 %v1755, 1.0
    %v1758 = vrcp.pop %v1756
    %v1759 = vmul.f32 1.0, %v1758
    %v1760 = vrcp.pop %v1757
    %v1761 = vmul.f32 1.0, %v1760
    %v1762 = vadd.f32 %v1739, %v458
    %v1763 = vmul.f32 %v1759, %v1762
    %v1764 = vadd.f32 %v1747, %v1763
    %v1765 = vtanh.pop %v1764
    %v1766 = vsub.f32 %v1553, %v1765
    %v1767 = vmul.f32 %v1761, %v1766
    %v1768 = vadd.f32 %v1765, %v1767
    %v1769 = vld [vmem:[#allocation4] sm:$0xff]
    %v1770 = vpack.c.bf16 %v1768, %v1768
    %s1771 = scalar_lea.vmem %s5, 320
    %v1772 = vld [vmem:[%s1771] sm:$0xf]
    %v1773 = vld [vmem:[%s1771 + $0x4] sm:$0xf]
    %v1774 = vld [vmem:[%s1771 + $0x8] sm:$0xf]
    %v1775 = vld [vmem:[%s1771 + $0xc] sm:$0xf]
    %v1776 = vld [vmem:[%s1771 + $0x10] sm:$0xf]
    %v1777 = vld [vmem:[%s1771 + $0x14] sm:$0xf]
    %v1778 = vld [vmem:[%s1771 + $0x18] sm:$0xf]
    %v1779 = vld [vmem:[%s1771 + $0x1c] sm:$0xf]
    %v1780 = vld [vmem:[%s1771 + $0x20] sm:$0xf]
    %v1781 = vld [vmem:[%s1771 + $0x24] sm:$0xf]
    %v1782 = vld [vmem:[%s1771 + $0x28] sm:$0xf]
    %v1783 = vld [vmem:[%s1771 + $0x2c] sm:$0xf]
    %v1784 = vld [vmem:[%s1771 + $0x30] sm:$0xf]
    %v1785 = vld [vmem:[%s1771 + $0x34] sm:$0xf]
    %v1786 = vld [vmem:[%s1771 + $0x38] sm:$0xf]
    %v1787 = vld [vmem:[%s1771 + $0x3c] sm:$0xf]
    %v1804 = vunpack.c.l.b16 %v1772
    %v1805 = vunpack.c.l.b16 %v1773
    %v1806 = vunpack.c.l.b16 %v1774
    %v1807 = vunpack.c.l.b16 %v1775
    %v1808 = vunpack.c.l.b16 %v1776
    %v1809 = vunpack.c.l.b16 %v1777
    %v1810 = vunpack.c.l.b16 %v1778
    %v1811 = vunpack.c.l.b16 %v1779
    %v1812 = vunpack.c.l.b16 %v1780
    %v1813 = vunpack.c.l.b16 %v1781
    %v1814 = vunpack.c.l.b16 %v1782
    %v1815 = vunpack.c.l.b16 %v1783
    %v1816 = vunpack.c.l.b16 %v1784
    %v1817 = vunpack.c.l.b16 %v1785
    %v1818 = vunpack.c.l.b16 %v1786
    %v1819 = vunpack.c.l.b16 %v1787
    %v1820 = vpack.c.b16 %v1805, %v1804
    %v1821 = vpack.c.b16 %v1807, %v1806
    %v1822 = vpack.c.b16 %v1809, %v1808
    %v1823 = vpack.c.b16 %v1811, %v1810
    %v1824 = vpack.c.b16 %v1813, %v1812
    %v1825 = vpack.c.b16 %v1815, %v1814
    %v1826 = vpack.c.b16 %v1817, %v1816
    %v1827 = vpack.c.b16 %v1819, %v1818
    %1836 = vmatprep.subr.bf16.mxu0 0
    %1837 = vmatpush1.bf16.msra.mxu0 %v1827
    %1838 = vmatprep.subr.bf16.mxu0 0
    %1839 = vmatpush1.bf16.msra.mxu0 %v1826
    %1840 = vmatprep.subr.bf16.mxu0 0
    %1841 = vmatpush1.bf16.msra.mxu0 %v1825
    %1842 = vmatprep.subr.bf16.mxu0 0
    %1843 = vmatpush1.bf16.msra.mxu0 %v1824
    %1844 = vmatprep.subr.bf16.mxu0 0
    %1845 = vmatpush1.bf16.msra.mxu0 %v1823
    %1846 = vmatprep.subr.bf16.mxu0 0
    %1847 = vmatpush1.bf16.msra.mxu0 %v1822
    %1848 = vmatprep.subr.bf16.mxu0 0
    %1849 = vmatpush1.bf16.msra.mxu0 %v1821
    %1850 = vmatprep.subr.bf16.mxu0 0
    %1851 = vmatpush1.bf16.msra.mxu0 %v1820
    %1852 = vmatprep.subr.bf16.mxu0 0
    %1853 = vmatpush2.bf16.msra.mxu0 0
    %1854 = vmatprep.subr.bf16.mxu0 0
    %1855 = vmatpush2.bf16.msra.mxu0 0
    %1856 = vmatprep.subr.bf16.mxu0 0
    %1857 = vmatpush2.bf16.msra.mxu0 0
    %1858 = vmatprep.subr.bf16.mxu0 0
    %1859 = vmatpush2.bf16.msra.mxu0 0
    %1860 = vmatprep.subr.bf16.mxu0 0
    %1861 = vmatpush2.bf16.msra.mxu0 0
    %1862 = vmatprep.subr.bf16.mxu0 0
    %1863 = vmatpush2.bf16.msra.mxu0 0
    %1864 = vmatprep.subr.bf16.mxu0 0
    %1865 = vmatpush2.bf16.msra.mxu0 0
    %1866 = vmatprep.subr.bf16.mxu0 0
    %1867 = vmatpush2.bf16.msra.mxu0 0
    %1868 = vmatprep.mubr.bf16.mxu0 0
    %1869 = vmatmul.mubr.bf16.gmra.mxu0 %v1770
    %v1870 = vpop.f32.mrf.mxu0
    %v1871 = vadd.f32 0.0, %v1870
    %v1872 = vpop.f32.mrf.mxu0
    %v1873 = vpop.f32.mrf.mxu0
    %v1874 = vpop.f32.mrf.mxu0
    %1875 = vdwg.mxu0
    %v1876 = vadd.f32 %v1769, %v1871
    %1877 = vst [vmem:[#allocation4] sm:$0xff] %v1876
    %1878 = vmatprep.subr.bf16.mxu0 %v564
    %1879 = vmatpush1.bf16.msra.mxu0 %v563
    %1880 = vmatprep.subr.bf16.mxu0 %v561
    %1881 = vmatpush1.bf16.msra.mxu0 %v560
    %1882 = vmatprep.subr.bf16.mxu0 %v558
    %1883 = vmatpush1.bf16.msra.mxu0 %v557
    %1884 = vmatprep.subr.bf16.mxu0 %v555
    %1885 = vmatpush1.bf16.msra.mxu0 %v554
    %1886 = vmatprep.subr.bf16.mxu0 %v552
    %1887 = vmatpush1.bf16.msra.mxu0 %v551
    %1888 = vmatprep.subr.bf16.mxu0 %v549
    %1889 = vmatpush1.bf16.msra.mxu0 %v548
    %1890 = vmatprep.subr.bf16.mxu0 %v546
    %1891 = vmatpush1.bf16.msra.mxu0 %v545
    %1892 = vmatprep.subr.bf16.mxu0 %v543
    %1893 = vmatpush1.bf16.msra.mxu0 %v542
    %1894 = vmatprep.subr.bf16.mxu0 0
    %1895 = vmatpush2.bf16.msra.mxu0 0
    %1896 = vmatprep.subr.bf16.mxu0 0
    %1897 = vmatpush2.bf16.msra.mxu0 0
    %1898 = vmatprep.subr.bf16.mxu0 0
    %1899 = vmatpush2.bf16.msra.mxu0 0
    %1900 = vmatprep.subr.bf16.mxu0 0
    %1901 = vmatpush2.bf16.msra.mxu0 0
    %1902 = vmatprep.subr.bf16.mxu0 0
    %1903 = vmatpush2.bf16.msra.mxu0 0
    %1904 = vmatprep.subr.bf16.mxu0 0
    %1905 = vmatpush2.bf16.msra.mxu0 0
    %1906 = vmatprep.subr.bf16.mxu0 0
    %1907 = vmatpush2.bf16.msra.mxu0 0
    %1908 = vmatprep.subr.bf16.mxu0 0
    %1909 = vmatpush2.bf16.msra.mxu0 0
    %1910 = vmatprep.mubr.bf16.mxu0 0
    %1911 = vmatmul.mubr.bf16.gmra.mxu0 %v1770
    %v1912 = vpop.f32.mrf.mxu0
    %v1913 = vadd.f32 0.0, %v1912
    %v1914 = vpop.f32.mrf.mxu0
    %v1915 = vadd.f32 0.0, %v1914
    %v1916 = vpop.f32.mrf.mxu0
    %v1917 = vpop.f32.mrf.mxu0
    %1918 = vdwg.mxu0
    %1919 = vmatprep.subr.bf16.mxu0 0
    %1920 = vmatpush1.bf16.msra.mxu0 %v565
    %1921 = vmatprep.subr.bf16.mxu0 0
    %1922 = vmatpush1.bf16.msra.mxu0 %v562
    %1923 = vmatprep.subr.bf16.mxu0 0
    %1924 = vmatpush1.bf16.msra.mxu0 %v559
    %1925 = vmatprep.subr.bf16.mxu0 0
    %1926 = vmatpush1.bf16.msra.mxu0 %v556
    %1927 = vmatprep.subr.bf16.mxu0 0
    %1928 = vmatpush1.bf16.msra.mxu0 %v553
    %1929 = vmatprep.subr.bf16.mxu0 0
    %1930 = vmatpush1.bf16.msra.mxu0 %v550
    %1931 = vmatprep.subr.bf16.mxu0 0
    %1932 = vmatpush1.bf16.msra.mxu0 %v547
    %1933 = vmatprep.subr.bf16.mxu0 0
    %1934 = vmatpush1.bf16.msra.mxu0 %v544
    %1935 = vmatprep.subr.bf16.mxu0 0
    %1936 = vmatpush2.bf16.msra.mxu0 0
    %1937 = vmatprep.subr.bf16.mxu0 0
    %1938 = vmatpush2.bf16.msra.mxu0 0
    %1939 = vmatprep.subr.bf16.mxu0 0
    %1940 = vmatpush2.bf16.msra.mxu0 0
    %1941 = vmatprep.subr.bf16.mxu0 0
    %1942 = vmatpush2.bf16.msra.mxu0 0
    %1943 = vmatprep.subr.bf16.mxu0 0
    %1944 = vmatpush2.bf16.msra.mxu0 0
    %1945 = vmatprep.subr.bf16.mxu0 0
    %1946 = vmatpush2.bf16.msra.mxu0 0
    %1947 = vmatprep.subr.bf16.mxu0 0
    %1948 = vmatpush2.bf16.msra.mxu0 0
    %1949 = vmatprep.subr.bf16.mxu0 0
    %1950 = vmatpush2.bf16.msra.mxu0 0
    %1951 = vmatprep.mubr.bf16.mxu0 0
    %1952 = vmatmul.mubr.bf16.gmra.mxu0 %v1770
    %v1953 = vpop.f32.mrf.mxu0
    %v1954 = vadd.f32 0.0, %v1953
    %v1955 = vpop.f32.mrf.mxu0
    %v1956 = vpop.f32.mrf.mxu0
    %v1957 = vpop.f32.mrf.mxu0
    %1958 = vdwg.mxu0
    %s1959 = scalar_lea.vmem [#allocation3], 144
    %v1960 = vld [vmem:[%s1959] sm:$0xff]
    %v1961 = vld [vmem:[%s1959 + $0x8] sm:$0xff]
    %v1962 = vld [vmem:[%s1959 + $0x10] sm:$0xff]
    %v1963 = vadd.f32 %v1960, %v1913
    %v1964 = vadd.f32 %v1961, %v1915
    %v1965 = vxor.u32 %v1963, 2147483648
    %v1966 = vxor.u32 %v1964, 2147483648
    %v1967 = vmul.f32 %v1965, 1.442695
    %v1968 = vpow.pop %v1967
    %v1969 = vmul.f32 %v1966, 1.442695
    %v1970 = vpow.pop %v1969
    %v1971 = vadd.f32 %v1968, 1.0
    %v1972 = vadd.f32 %v1970, 1.0
    %v1973 = vrcp.pop %v1971
    %v1974 = vmul.f32 1.0, %v1973
    %v1975 = vrcp.pop %v1972
    %v1976 = vmul.f32 1.0, %v1975
    %v1977 = vadd.f32 %v1954, %v458
    %v1978 = vmul.f32 %v1974, %v1977
    %v1979 = vadd.f32 %v1962, %v1978
    %v1980 = vtanh.pop %v1979
    %v1981 = vsub.f32 %v1768, %v1980
    %v1982 = vmul.f32 %v1976, %v1981
    %v1983 = vadd.f32 %v1980, %v1982
    %v1984 = vld [vmem:[#allocation4] sm:$0xff]
    %v1985 = vpack.c.bf16 %v1983, %v1983
    %s1986 = scalar_lea.vmem %s5, 384
    %v1987 = vld [vmem:[%s1986] sm:$0xf]
    %v1988 = vld [vmem:[%s1986 + $0x4] sm:$0xf]
    %v1989 = vld [vmem:[%s1986 + $0x8] sm:$0xf]
    %v1990 = vld [vmem:[%s1986 + $0xc] sm:$0xf]
    %v1991 = vld [vmem:[%s1986 + $0x10] sm:$0xf]
    %v1992 = vld [vmem:[%s1986 + $0x14] sm:$0xf]
    %v1993 = vld [vmem:[%s1986 + $0x18] sm:$0xf]
    %v1994 = vld [vmem:[%s1986 + $0x1c] sm:$0xf]
    %v1995 = vld [vmem:[%s1986 + $0x20] sm:$0xf]
    %v1996 = vld [vmem:[%s1986 + $0x24] sm:$0xf]
    %v1997 = vld [vmem:[%s1986 + $0x28] sm:$0xf]
    %v1998 = vld [vmem:[%s1986 + $0x2c] sm:$0xf]
    %v1999 = vld [vmem:[%s1986 + $0x30] sm:$0xf]
    %v2000 = vld [vmem:[%s1986 + $0x34] sm:$0xf]
    %v2001 = vld [vmem:[%s1986 + $0x38] sm:$0xf]
    %v2002 = vld [vmem:[%s1986 + $0x3c] sm:$0xf]
    %v2019 = vunpack.c.l.b16 %v1987
    %v2020 = vunpack.c.l.b16 %v1988
    %v2021 = vunpack.c.l.b16 %v1989
    %v2022 = vunpack.c.l.b16 %v1990
    %v2023 = vunpack.c.l.b16 %v1991
    %v2024 = vunpack.c.l.b16 %v1992
    %v2025 = vunpack.c.l.b16 %v1993
    %v2026 = vunpack.c.l.b16 %v1994
    %v2027 = vunpack.c.l.b16 %v1995
    %v2028 = vunpack.c.l.b16 %v1996
    %v2029 = vunpack.c.l.b16 %v1997
    %v2030 = vunpack.c.l.b16 %v1998
    %v2031 = vunpack.c.l.b16 %v1999
    %v2032 = vunpack.c.l.b16 %v2000
    %v2033 = vunpack.c.l.b16 %v2001
    %v2034 = vunpack.c.l.b16 %v2002
    %v2035 = vpack.c.b16 %v2020, %v2019
    %v2036 = vpack.c.b16 %v2022, %v2021
    %v2037 = vpack.c.b16 %v2024, %v2023
    %v2038 = vpack.c.b16 %v2026, %v2025
    %v2039 = vpack.c.b16 %v2028, %v2027
    %v2040 = vpack.c.b16 %v2030, %v2029
    %v2041 = vpack.c.b16 %v2032, %v2031
    %v2042 = vpack.c.b16 %v2034, %v2033
    %2051 = vmatprep.subr.bf16.mxu0 0
    %2052 = vmatpush1.bf16.msra.mxu0 %v2042
    %2053 = vmatprep.subr.bf16.mxu0 0
    %2054 = vmatpush1.bf16.msra.mxu0 %v2041
    %2055 = vmatprep.subr.bf16.mxu0 0
    %2056 = vmatpush1.bf16.msra.mxu0 %v2040
    %2057 = vmatprep.subr.bf16.mxu0 0
    %2058 = vmatpush1.bf16.msra.mxu0 %v2039
    %2059 = vmatprep.subr.bf16.mxu0 0
    %2060 = vmatpush1.bf16.msra.mxu0 %v2038
    %2061 = vmatprep.subr.bf16.mxu0 0
    %2062 = vmatpush1.bf16.msra.mxu0 %v2037
    %2063 = vmatprep.subr.bf16.mxu0 0
    %2064 = vmatpush1.bf16.msra.mxu0 %v2036
    %2065 = vmatprep.subr.bf16.mxu0 0
    %2066 = vmatpush1.bf16.msra.mxu0 %v2035
    %2067 = vmatprep.subr.bf16.mxu0 0
    %2068 = vmatpush2.bf16.msra.mxu0 0
    %2069 = vmatprep.subr.bf16.mxu0 0
    %2070 = vmatpush2.bf16.msra.mxu0 0
    %2071 = vmatprep.subr.bf16.mxu0 0
    %2072 = vmatpush2.bf16.msra.mxu0 0
    %2073 = vmatprep.subr.bf16.mxu0 0
    %2074 = vmatpush2.bf16.msra.mxu0 0
    %2075 = vmatprep.subr.bf16.mxu0 0
    %2076 = vmatpush2.bf16.msra.mxu0 0
    %2077 = vmatprep.subr.bf16.mxu0 0
    %2078 = vmatpush2.bf16.msra.mxu0 0
    %2079 = vmatprep.subr.bf16.mxu0 0
    %2080 = vmatpush2.bf16.msra.mxu0 0
    %2081 = vmatprep.subr.bf16.mxu0 0
    %2082 = vmatpush2.bf16.msra.mxu0 0
    %2083 = vmatprep.mubr.bf16.mxu0 0
    %2084 = vmatmul.mubr.bf16.gmra.mxu0 %v1985
    %v2085 = vpop.f32.mrf.mxu0
    %v2086 = vadd.f32 0.0, %v2085
    %v2087 = vpop.f32.mrf.mxu0
    %v2088 = vpop.f32.mrf.mxu0
    %v2089 = vpop.f32.mrf.mxu0
    %2090 = vdwg.mxu0
    %v2091 = vadd.f32 %v1984, %v2086
    %2092 = vst [vmem:[#allocation4] sm:$0xff] %v2091
    %2093 = vmatprep.subr.bf16.mxu0 %v564
    %2094 = vmatpush1.bf16.msra.mxu0 %v563
    %2095 = vmatprep.subr.bf16.mxu0 %v561
    %2096 = vmatpush1.bf16.msra.mxu0 %v560
    %2097 = vmatprep.subr.bf16.mxu0 %v558
    %2098 = vmatpush1.bf16.msra.mxu0 %v557
    %2099 = vmatprep.subr.bf16.mxu0 %v555
    %2100 = vmatpush1.bf16.msra.mxu0 %v554
    %2101 = vmatprep.subr.bf16.mxu0 %v552
    %2102 = vmatpush1.bf16.msra.mxu0 %v551
    %2103 = vmatprep.subr.bf16.mxu0 %v549
    %2104 = vmatpush1.bf16.msra.mxu0 %v548
    %2105 = vmatprep.subr.bf16.mxu0 %v546
    %2106 = vmatpush1.bf16.msra.mxu0 %v545
    %2107 = vmatprep.subr.bf16.mxu0 %v543
    %2108 = vmatpush1.bf16.msra.mxu0 %v542
    %2109 = vmatprep.subr.bf16.mxu0 0
    %2110 = vmatpush2.bf16.msra.mxu0 0
    %2111 = vmatprep.subr.bf16.mxu0 0
    %2112 = vmatpush2.bf16.msra.mxu0 0
    %2113 = vmatprep.subr.bf16.mxu0 0
    %2114 = vmatpush2.bf16.msra.mxu0 0
    %2115 = vmatprep.subr.bf16.mxu0 0
    %2116 = vmatpush2.bf16.msra.mxu0 0
    %2117 = vmatprep.subr.bf16.mxu0 0
    %2118 = vmatpush2.bf16.msra.mxu0 0
    %2119 = vmatprep.subr.bf16.mxu0 0
    %2120 = vmatpush2.bf16.msra.mxu0 0
    %2121 = vmatprep.subr.bf16.mxu0 0
    %2122 = vmatpush2.bf16.msra.mxu0 0
    %2123 = vmatprep.subr.bf16.mxu0 0
    %2124 = vmatpush2.bf16.msra.mxu0 0
    %2125 = vmatprep.mubr.bf16.mxu0 0
    %2126 = vmatmul.mubr.bf16.gmra.mxu0 %v1985
    %v2127 = vpop.f32.mrf.mxu0
    %v2128 = vadd.f32 0.0, %v2127
    %v2129 = vpop.f32.mrf.mxu0
    %v2130 = vadd.f32 0.0, %v2129
    %v2131 = vpop.f32.mrf.mxu0
    %v2132 = vpop.f32.mrf.mxu0
    %2133 = vdwg.mxu0
    %2134 = vmatprep.subr.bf16.mxu0 0
    %2135 = vmatpush1.bf16.msra.mxu0 %v565
    %2136 = vmatprep.subr.bf16.mxu0 0
    %2137 = vmatpush1.bf16.msra.mxu0 %v562
    %2138 = vmatprep.subr.bf16.mxu0 0
    %2139 = vmatpush1.bf16.msra.mxu0 %v559
    %2140 = vmatprep.subr.bf16.mxu0 0
    %2141 = vmatpush1.bf16.msra.mxu0 %v556
    %2142 = vmatprep.subr.bf16.mxu0 0
    %2143 = vmatpush1.bf16.msra.mxu0 %v553
    %2144 = vmatprep.subr.bf16.mxu0 0
    %2145 = vmatpush1.bf16.msra.mxu0 %v550
    %2146 = vmatprep.subr.bf16.mxu0 0
    %2147 = vmatpush1.bf16.msra.mxu0 %v547
    %2148 = vmatprep.subr.bf16.mxu0 0
    %2149 = vmatpush1.bf16.msra.mxu0 %v544
    %2150 = vmatprep.subr.bf16.mxu0 0
    %2151 = vmatpush2.bf16.msra.mxu0 0
    %2152 = vmatprep.subr.bf16.mxu0 0
    %2153 = vmatpush2.bf16.msra.mxu0 0
    %2154 = vmatprep.subr.bf16.mxu0 0
    %2155 = vmatpush2.bf16.msra.mxu0 0
    %2156 = vmatprep.subr.bf16.mxu0 0
    %2157 = vmatpush2.bf16.msra.mxu0 0
    %2158 = vmatprep.subr.bf16.mxu0 0
    %2159 = vmatpush2.bf16.msra.mxu0 0
    %2160 = vmatprep.subr.bf16.mxu0 0
    %2161 = vmatpush2.bf16.msra.mxu0 0
    %2162 = vmatprep.subr.bf16.mxu0 0
    %2163 = vmatpush2.bf16.msra.mxu0 0
    %2164 = vmatprep.subr.bf16.mxu0 0
    %2165 = vmatpush2.bf16.msra.mxu0 0
    %2166 = vmatprep.mubr.bf16.mxu0 0
    %2167 = vmatmul.mubr.bf16.gmra.mxu0 %v1985
    %v2168 = vpop.f32.mrf.mxu0
    %v2169 = vadd.f32 0.0, %v2168
    %v2170 = vpop.f32.mrf.mxu0
    %v2171 = vpop.f32.mrf.mxu0
    %v2172 = vpop.f32.mrf.mxu0
    %2173 = vdwg.mxu0
    %s2174 = scalar_lea.vmem [#allocation3], 168
    %v2175 = vld [vmem:[%s2174] sm:$0xff]
    %v2176 = vld [vmem:[%s2174 + $0x8] sm:$0xff]
    %v2177 = vld [vmem:[%s2174 + $0x10] sm:$0xff]
    %v2178 = vadd.f32 %v2175, %v2128
    %v2179 = vadd.f32 %v2176, %v2130
    %v2180 = vxor.u32 %v2178, 2147483648
    %v2181 = vxor.u32 %v2179, 2147483648
    %v2182 = vmul.f32 %v2180, 1.442695
    %v2183 = vpow.pop %v2182
    %v2184 = vmul.f32 %v2181, 1.442695
    %v2185 = vpow.pop %v2184
    %v2186 = vadd.f32 %v2183, 1.0
    %v2187 = vadd.f32 %v2185, 1.0
    %v2188 = vrcp.pop %v2186
    %v2189 = vmul.f32 1.0, %v2188
    %v2190 = vrcp.pop %v2187
    %v2191 = vmul.f32 1.0, %v2190
    %v2192 = vadd.f32 %v2169, %v458
    %v2193 = vmul.f32 %v2189, %v2192
    %v2194 = vadd.f32 %v2177, %v2193
    %v2195 = vtanh.pop %v2194
    %v2196 = vsub.f32 %v1983, %v2195
    %v2197 = vmul.f32 %v2191, %v2196
    %v2198 = vadd.f32 %v2195, %v2197
    %v2199 = vld [vmem:[#allocation4] sm:$0xff]
    %v2200 = vpack.c.bf16 %v2198, %v2198
    %s2201 = scalar_lea.vmem %s5, 448
    %v2202 = vld [vmem:[%s2201] sm:$0xf]
    %v2203 = vld [vmem:[%s2201 + $0x4] sm:$0xf]
    %v2204 = vld [vmem:[%s2201 + $0x8] sm:$0xf]
    %v2205 = vld [vmem:[%s2201 + $0xc] sm:$0xf]
    %v2206 = vld [vmem:[%s2201 + $0x10] sm:$0xf]
    %v2207 = vld [vmem:[%s2201 + $0x14] sm:$0xf]
    %v2208 = vld [vmem:[%s2201 + $0x18] sm:$0xf]
    %v2209 = vld [vmem:[%s2201 + $0x1c] sm:$0xf]
    %v2210 = vld [vmem:[%s2201 + $0x20] sm:$0xf]
    %v2211 = vld [vmem:[%s2201 + $0x24] sm:$0xf]
    %v2212 = vld [vmem:[%s2201 + $0x28] sm:$0xf]
    %v2213 = vld [vmem:[%s2201 + $0x2c] sm:$0xf]
    %v2214 = vld [vmem:[%s2201 + $0x30] sm:$0xf]
    %v2215 = vld [vmem:[%s2201 + $0x34] sm:$0xf]
    %v2216 = vld [vmem:[%s2201 + $0x38] sm:$0xf]
    %v2217 = vld [vmem:[%s2201 + $0x3c] sm:$0xf]
    %v2234 = vunpack.c.l.b16 %v2202
    %v2235 = vunpack.c.l.b16 %v2203
    %v2236 = vunpack.c.l.b16 %v2204
    %v2237 = vunpack.c.l.b16 %v2205
    %v2238 = vunpack.c.l.b16 %v2206
    %v2239 = vunpack.c.l.b16 %v2207
    %v2240 = vunpack.c.l.b16 %v2208
    %v2241 = vunpack.c.l.b16 %v2209
    %v2242 = vunpack.c.l.b16 %v2210
    %v2243 = vunpack.c.l.b16 %v2211
    %v2244 = vunpack.c.l.b16 %v2212
    %v2245 = vunpack.c.l.b16 %v2213
    %v2246 = vunpack.c.l.b16 %v2214
    %v2247 = vunpack.c.l.b16 %v2215
    %v2248 = vunpack.c.l.b16 %v2216
    %v2249 = vunpack.c.l.b16 %v2217
    %v2250 = vpack.c.b16 %v2235, %v2234
    %v2251 = vpack.c.b16 %v2237, %v2236
    %v2252 = vpack.c.b16 %v2239, %v2238
    %v2253 = vpack.c.b16 %v2241, %v2240
    %v2254 = vpack.c.b16 %v2243, %v2242
    %v2255 = vpack.c.b16 %v2245, %v2244
    %v2256 = vpack.c.b16 %v2247, %v2246
    %v2257 = vpack.c.b16 %v2249, %v2248
    %2266 = vmatprep.subr.bf16.mxu0 0
    %2267 = vmatpush1.bf16.msra.mxu0 %v2257
    %2268 = vmatprep.subr.bf16.mxu0 0
    %2269 = vmatpush1.bf16.msra.mxu0 %v2256
    %2270 = vmatprep.subr.bf16.mxu0 0
    %2271 = vmatpush1.bf16.msra.mxu0 %v2255
    %2272 = vmatprep.subr.bf16.mxu0 0
    %2273 = vmatpush1.bf16.msra.mxu0 %v2254
    %2274 = vmatprep.subr.bf16.mxu0 0
    %2275 = vmatpush1.bf16.msra.mxu0 %v2253
    %2276 = vmatprep.subr.bf16.mxu0 0
    %2277 = vmatpush1.bf16.msra.mxu0 %v2252
    %2278 = vmatprep.subr.bf16.mxu0 0
    %2279 = vmatpush1.bf16.msra.mxu0 %v2251
    %2280 = vmatprep.subr.bf16.mxu0 0
    %2281 = vmatpush1.bf16.msra.mxu0 %v2250
    %2282 = vmatprep.subr.bf16.mxu0 0
    %2283 = vmatpush2.bf16.msra.mxu0 0
    %2284 = vmatprep.subr.bf16.mxu0 0
    %2285 = vmatpush2.bf16.msra.mxu0 0
    %2286 = vmatprep.subr.bf16.mxu0 0
    %2287 = vmatpush2.bf16.msra.mxu0 0
    %2288 = vmatprep.subr.bf16.mxu0 0
    %2289 = vmatpush2.bf16.msra.mxu0 0
    %2290 = vmatprep.subr.bf16.mxu0 0
    %2291 = vmatpush2.bf16.msra.mxu0 0
    %2292 = vmatprep.subr.bf16.mxu0 0
    %2293 = vmatpush2.bf16.msra.mxu0 0
    %2294 = vmatprep.subr.bf16.mxu0 0
    %2295 = vmatpush2.bf16.msra.mxu0 0
    %2296 = vmatprep.subr.bf16.mxu0 0
    %2297 = vmatpush2.bf16.msra.mxu0 0
    %2298 = vmatprep.mubr.bf16.mxu0 0
    %2299 = vmatmul.mubr.bf16.gmra.mxu0 %v2200
    %v2300 = vpop.f32.mrf.mxu0
    %v2301 = vadd.f32 0.0, %v2300
    %v2302 = vpop.f32.mrf.mxu0
    %v2303 = vpop.f32.mrf.mxu0
    %v2304 = vpop.f32.mrf.mxu0
    %2305 = vdwg.mxu0
    %v2306 = vadd.f32 %v2199, %v2301
    %2307 = vst [vmem:[#allocation4] sm:$0xff] %v2306
    %2308 = vst [vmem:[#allocation2] sm:$0xff] %v2198
    // Predicated region
    $region42: #{rnn_gru_forward.3} parent=1 // pred_check
      %p2309 = pneg %p56
    $region43: #{rnn_gru_forward.3} parent=1 // pred_check_branch
      %2311 = sbr.rel (%p2309) target = $region45
    $region44: #{rnn_gru_forward.3} parent=1 // pred_region
      %v2312 = vld [vmem:[#allocation4] sm:$0xff]
      %v2313 = vld [vmem:[%s6] sm:$0x1]
      %v2315 = vlaneseq
      %v2316 = vshrl.u32 %v2315, 7
      %v2317 = vsub.s32 0, %v2316
      %v2318 = vrot.slane %v2313, %v2317
      %v2320 = vadd.f32 %v2312, %v2318
      %2321 = vst [vmem:[#allocation10] sm:$0xff] %v2320
    $region45: #{rnn_gru_forward.3} parent=1 // pred_fallthru
      _
    // Predicated region
    $region46: #{rnn_gru_forward.3} parent=1 // pred_check
      _
    $region47: #{rnn_gru_forward.3} parent=1 // pred_check_branch
      %2323 = sbr.rel (0) target = $region49
    $region48: #{rnn_gru_forward.3} parent=1 // pred_region
      %s2325 = ssub.s32 128, 128
      %2326 = vsyncadd [#allocation7], %s2325
      %s2328 = sshll.u32 [#allocation10], 4
      %s2329 = int_to_ptr.vmem [resolvable:$true] %s2328
      %2331 = dma.vmem_to_hbm [thread:$0]  %s2329, 128, %s7, [#allocation7]
    $region49: #{rnn_gru_forward.3} parent=1 // pred_fallthru
      _
    // Predicated region
    $region50: #{rnn_gru_forward.3} parent=1 // pred_check
      _
    $region51: #{rnn_gru_forward.3} parent=1 // pred_check_branch
      %2333 = sbr.rel (0) target = $region53
    $region52: #{rnn_gru_forward.3} parent=1 // pred_region
      %2334 = dma.done [#allocation7], 128
    $region53: #{rnn_gru_forward.3} parent=1 // pred_fallthru
      _
    %2335 = vsyncpa [#allocation6], 1
    %2336 = vsyncpa [#allocation9], 1
    %2337 = vsyncpa [#allocation7], 1

</llo_original>
